<compile_context>
chip_gen: v7x
topology: tpu7x:2x2x1
jax: 0.10.0
libtpu: 0.0.40
codegen_flags: <defaults>
</compile_context>

<pallas_src>
import functools

import jax
import jax.numpy as jnp
import numpy as np
from jax import lax
from jax.experimental import pallas as pl
from jax.experimental.pallas import tpu as pltpu

K = 3          # conv kernel size
GROUPS = 8     # GroupNorm groups
EPS = 1e-5     # GroupNorm eps


def _group_norm_relu(h, gamma, beta, m2t):
    """GroupNorm + affine + ReLU in the dense (D*H, W*C) layout.

    h: (R, W*C) f32.  gamma/beta: (1, W*C) per-channel params tiled over W.
    m2t: (GROUPS, W*C) f32 one-hot lane -> group map.
    """
    r, wc = h.shape
    cnt = float(r * (wc // GROUPS))            # elements per group = D*H*W*(C/G)
    s = jnp.sum(h, axis=0, keepdims=True)
    ss = jnp.sum(h * h, axis=0, keepdims=True)
    sst = jnp.concatenate([s, ss], axis=0)                         # (2, W*C)
    stats = lax.dot_general(sst, m2t, (((1,), (1,)), ((), ())),
                            preferred_element_type=jnp.float32)    # (2, G)
    mean_g = stats[0:1] / cnt
    # single-pass variance in f32; clamp guards E[x^2]-E[x]^2 cancellation
    var_g = jnp.maximum(stats[1:2] / cnt - mean_g * mean_g, 0.0)
    inv_g = lax.rsqrt(var_g + EPS)
    back = jnp.dot(jnp.concatenate([mean_g, inv_g], axis=0), m2t,
                   preferred_element_type=jnp.float32)             # (2, W*C)
    hn = (h - back[0:1]) * back[1:2]
    return jnp.maximum(hn * gamma + beta, 0.0)


def _conv3x3_banded(src_ref, w_ref, D, H, src_lanes):
    """3x3x3 conv as 9 accumulated (kd, kh) tap matmuls.

    src_ref: (D+2, H+2, (W+2)*C) bf16 padded activations (zero halo).
    w_ref:   (9, (W+2)*C, W*C_out) bf16 banded tap weights (kw folded in).
    Returns (D*H, W*C_out) f32.
    """
    acc = None
    for t in range(K * K):
        kd, kh = divmod(t, K)
        slab = src_ref[kd:kd + D, kh:kh + H, :].reshape(D * H, src_lanes)
        p = jnp.dot(slab, w_ref[t], preferred_element_type=jnp.float32)
        acc = p if acc is None else acc + p
    return acc


def resconv_kernel(x_ref, w1_ref, w2_ref, wr_ref, aux_ref, out_ref,
                   xp_ref, hp_ref, *, D, H, W, C_in, C_out):
    WCi, WCo = W * C_in, W * C_out
    aux = aux_ref[...]                       # (8 + GROUPS, W*C_out) f32
    m2t = aux[8:8 + GROUPS]                  # GroupNorm lane->group one-hot

    # Unconditional halo zeroing (a few KiB of stores per step; hides under the
    # matmuls).  This keeps the batch grid axis safely "parallel" on multi-core
    # chips -- no cross-step scratch invariant.
    xp_ref[...] = jnp.zeros_like(xp_ref)
    hp_ref[...] = jnp.zeros_like(hp_ref)

    xb = x_ref[0]                                            # (D, H, W*C_in) bf16
    xp_ref[1:1 + D, 1:1 + H, C_in:C_in + WCi] = xb

    # ---- conv1: 9 accumulated (kd,kh) tap matmuls, bf16 x bf16 -> f32 acc ----
    acc1 = _conv3x3_banded(xp_ref, w1_ref, D, H, (W + 2) * C_in) + aux[0:1]
    h1 = _group_norm_relu(acc1, aux[1:2], aux[2:3], m2t)     # (D*H, W*C_out)

    # ---- conv2 ----
    hp_ref[1:1 + D, 1:1 + H, C_out:C_out + WCo] = \
        h1.reshape(D, H, WCo).astype(jnp.bfloat16)
    acc2 = _conv3x3_banded(hp_ref, w2_ref, D, H, (W + 2) * C_out) + aux[3:4]
    h2 = _group_norm_relu(acc2, aux[4:5], aux[5:6], m2t)

    # ---- residual 1x1x1 conv (block-diag weight keeps the dense lane layout) ----
    res = jnp.dot(xb.reshape(D * H, WCi), wr_ref[...],
                  preferred_element_type=jnp.float32) + aux[6:7]

    out_ref[...] = (res + h2).reshape(1, D * H, WCo)


def resconv_block_3d(x_ncdhw, params):
    """Forward pass. x_ncdhw: (N, C_in, D, H, W) f32 -> (N, C_out, D, H, W) f32."""
    N, C_in, D, H, W = x_ncdhw.shape
    C_out = params["w1"].shape[0]
    WCi, WCo = W * C_in, W * C_out

    # NCDHW -> lane-dense bf16 (N, D, H, W*C_in); no host-side spatial padding.
    x = jnp.transpose(x_ncdhw, (0, 2, 3, 4, 1)).astype(jnp.bfloat16)
    x = x.reshape(N, D, H, WCi)

    # kw selection: sel[kw, wp, w] = 1 iff wp == w + kw (padding=1 folded in).
    sel_np = np.zeros((K, W + 2, W), np.float32)
    for kw in range(K):
        for wi in range(W):
            sel_np[kw, wi + kw, wi] = 1.0
    sel = jnp.asarray(sel_np)

    def banded_tap_w(w):
        """(C_out, C_in, 3,3,3) -> (9, (W+2)*C_in, W*C_out) bf16 banded taps.

        Row order (w_pad, ci) matches the padded-slab lanes; column order
        (w, co) matches the dense output lanes.
        """
        co, ci = int(w.shape[0]), int(w.shape[1])
        wt = jnp.transpose(w, (2, 3, 4, 1, 0))               # (kd, kh, kw, ci, co)
        b = jnp.einsum("dhkio,kpw->dhpiwo", wt, sel)          # (kd,kh,wp,ci,w,co)
        return b.reshape(K * K, (W + 2) * ci, W * co).astype(jnp.bfloat16)

    w1 = banded_tap_w(params["w1"])
    w2 = banded_tap_w(params["w2"])

    eye_w = jnp.eye(W, dtype=jnp.float32)
    wr2 = jnp.transpose(params["wr"].reshape(C_out, C_in), (1, 0))   # (C_in, C_out)
    wr = jnp.einsum("io,wv->wivo", wr2, eye_w).reshape(WCi, WCo).astype(jnp.bfloat16)

    # Pack the nine per-channel vectors (tiled over W -> dense lanes) plus the
    # GroupNorm one-hot lane->group map into one (8+G, W*C_out) aux array.
    def dense_vec(v):
        return jnp.tile(v.astype(jnp.float32), (W,)).reshape(1, WCo)

    cpg = C_out // GROUPS
    lane_grp = np.tile(np.arange(C_out) // cpg, W)                    # (W*C_out,)
    m2t = (lane_grp[None, :] == np.arange(GROUPS)[:, None]).astype(np.float32)
    aux = jnp.concatenate(
        [dense_vec(params["b1"]), dense_vec(params["g1w"]), dense_vec(params["g1b"]),
         dense_vec(params["b2"]), dense_vec(params["g2w"]), dense_vec(params["g2b"]),
         dense_vec(params["br"]), jnp.zeros((1, WCo), jnp.float32),
         jnp.asarray(m2t)], axis=0)                                   # (8+G, W*C_out)

    kernel = functools.partial(resconv_kernel, D=D, H=H, W=W,
                               C_in=C_in, C_out=C_out)

    # VMEM budget derived from the actual footprint (double-buffered operand
    # blocks + persistent scratch); x3 headroom covers the in-kernel slab
    # relayouts / accumulators / compiler temporaries.
    def nbytes(shape, dt):
        return int(np.prod(shape)) * jnp.dtype(dt).itemsize

    block_bytes = 2 * (nbytes((1, D, H, WCi), jnp.bfloat16)
                       + nbytes(w1.shape, jnp.bfloat16)
                       + nbytes(w2.shape, jnp.bfloat16)
                       + nbytes(wr.shape, jnp.bfloat16)
                       + nbytes(aux.shape, jnp.float32)
                       + nbytes((1, D * H, WCo), jnp.float32))
    scratch_bytes = (nbytes((D + 2, H + 2, (W + 2) * C_in), jnp.bfloat16)
                     + nbytes((D + 2, H + 2, (W + 2) * C_out), jnp.bfloat16))
    vmem_limit = int(min(96 * 2**20,
                         max(16 * 2**20, 3 * (block_bytes + scratch_bytes))))

    out = pl.pallas_call(
        kernel,
        out_shape=jax.ShapeDtypeStruct((N, D * H, WCo), jnp.float32),
        grid_spec=pltpu.PrefetchScalarGridSpec(
            num_scalar_prefetch=0,
            grid=(N,),
            in_specs=[
                pl.BlockSpec((1, D, H, WCi), lambda n: (n, 0, 0, 0)),
                pl.BlockSpec((K * K, (W + 2) * C_in, WCo), lambda n: (0, 0, 0)),
                pl.BlockSpec((K * K, (W + 2) * C_out, WCo), lambda n: (0, 0, 0)),
                pl.BlockSpec((WCi, WCo), lambda n: (0, 0)),
                pl.BlockSpec((8 + GROUPS, WCo), lambda n: (0, 0)),
            ],
            out_specs=pl.BlockSpec((1, D * H, WCo), lambda n: (n, 0, 0)),
            scratch_shapes=[
                pltpu.VMEM((D + 2, H + 2, (W + 2) * C_in), jnp.bfloat16),   # padded x
                pltpu.VMEM((D + 2, H + 2, (W + 2) * C_out), jnp.bfloat16),  # padded h1
            ],
        ),
        compiler_params=pltpu.CompilerParams(
            # Halo init is per-step, so the batch axis is safe to shard across
            # TensorCores (v7x megacore); on 1-TC chips it is a no-op.
            dimension_semantics=("parallel",),
            vmem_limit_bytes=vmem_limit,
        ),
    )(x, w1, w2, wr, aux)

    out = out.reshape(N, D, H, W, C_out)
    return jnp.transpose(out, (0, 4, 1, 2, 3))          # back to NCDHW


# ------------------------- pure-JAX reference -------------------------

def ref_forward(x, p):
    def conv3d(x, w, b, pad):
        y = lax.conv_general_dilated(
            x, w, window_strides=(1, 1, 1), padding=[(pad, pad)] * 3,
            dimension_numbers=("NCDHW", "OIDHW", "NCDHW"))
        return y + b[None, :, None, None, None]

    def gn_relu(x, gamma, beta):
        N, C, D, H, W = x.shape
        xg = x.reshape(N, GROUPS, C // GROUPS, D, H, W)
        m = xg.mean(axis=(2, 3, 4, 5), keepdims=True)
        v = ((xg - m) ** 2).mean(axis=(2, 3, 4, 5), keepdims=True)
        xn = ((xg - m) / jnp.sqrt(v + EPS)).reshape(N, C, D, H, W)
        y = xn * gamma[None, :, None, None, None] + beta[None, :, None, None, None]
        return jnp.maximum(y, 0.0)

    res = conv3d(x, p["wr"], p["br"], 0)
    h = gn_relu(conv3d(x, p["w1"], p["b1"], 1), p["g1w"], p["g1b"])
    h = gn_relu(conv3d(h, p["w2"], p["b2"], 1), p["g2w"], p["g2b"])
    return res + h


if __name__ == "__main__":
    N, C_in, C_out = 2, 4, 16
    D = H = W = 8

    key = jax.random.PRNGKey(0)
    ks = jax.random.split(key, 12)
    params = {
        "w1": jax.random.normal(ks[0], (C_out, C_in, 3, 3, 3), jnp.float32) * 0.1,
        "b1": jax.random.normal(ks[1], (C_out,), jnp.float32) * 0.1,
        "g1w": 1.0 + 0.1 * jax.random.normal(ks[2], (C_out,), jnp.float32),
        "g1b": 0.1 * jax.random.normal(ks[3], (C_out,), jnp.float32),
        "w2": jax.random.normal(ks[4], (C_out, C_out, 3, 3, 3), jnp.float32) * 0.1,
        "b2": jax.random.normal(ks[5], (C_out,), jnp.float32) * 0.1,
        "g2w": 1.0 + 0.1 * jax.random.normal(ks[6], (C_out,), jnp.float32),
        "g2b": 0.1 * jax.random.normal(ks[7], (C_out,), jnp.float32),
        "wr": jax.random.normal(ks[8], (C_out, C_in, 1, 1, 1), jnp.float32) * 0.1,
        "br": jax.random.normal(ks[9], (C_out,), jnp.float32) * 0.1,
    }
    x = jax.random.normal(ks[10], (N, C_in, D, H, W), jnp.float32)

    out = jax.block_until_ready(resconv_block_3d(x, params))
    ref = jax.block_until_ready(ref_forward(x, params))

    assert out.shape == (N, C_out, D, H, W), out.shape
    # bf16 matmul operands (f32 accumulation) vs. the all-f32 reference across
    # two stacked convs + GroupNorms: typical max abs error ~1e-2; tolerance
    # has margin (inference-grade).
    np.testing.assert_allclose(np.asarray(out), np.asarray(ref),
                               rtol=1e-1, atol=1e-1)
    print("KERNEL_OK")
</pallas_src>

<mosaic_0001>
module attributes {stable_mosaic.version = 11 : i64} {
  func.func @resconv_kernel(%arg0: i32, %arg1: memref<1x8x8x32xbf16, #tpu.memory_space<vmem>>, %arg2: memref<9x40x128xbf16, #tpu.memory_space<vmem>>, %arg3: memref<9x160x128xbf16, #tpu.memory_space<vmem>>, %arg4: memref<32x128xbf16, #tpu.memory_space<vmem>>, %arg5: memref<16x128xf32, #tpu.memory_space<vmem>>, %arg6: memref<1x64x128xf32, #tpu.memory_space<vmem>>, %arg7: memref<10x10x40xbf16, #tpu.memory_space<vmem>>, %arg8: memref<10x10x160xbf16, #tpu.memory_space<vmem>>) attributes {dimension_semantics = [#tpu.dimension_semantics<parallel>], iteration_bounds = array<i64: 2>, scalar_prefetch = 0 : i64, scratch_operands = 2 : i64, tpu.core_type = #tpu.core_type<tc>, window_params = [{transform_indices = @transform_0, window_bounds = array<i64: 1, 8, 8, 32>}, {pipeline_mode = #tpu.pipeline_mode<synchronous>, transform_indices = @transform_1, window_bounds = array<i64: 9, 40, 128>}, {pipeline_mode = #tpu.pipeline_mode<synchronous>, transform_indices = @transform_2, window_bounds = array<i64: 9, 160, 128>}, {pipeline_mode = #tpu.pipeline_mode<synchronous>, transform_indices = @transform_3, window_bounds = array<i64: 32, 128>}, {pipeline_mode = #tpu.pipeline_mode<synchronous>, transform_indices = @transform_4, window_bounds = array<i64: 16, 128>}, {transform_indices = @transform_5, window_bounds = array<i64: 1, 64, 128>}]} {
    %c0 = arith.constant 0 : index
    %c0_0 = arith.constant 0 : index
    %0 = vector.load %arg5[%c0, %c0_0] : memref<16x128xf32, #tpu.memory_space<vmem>>, vector<16x128xf32>
    %1 = vector.extract_strided_slice %0 {offsets = [8, 0], sizes = [8, 128], strides = [1, 1]} : vector<16x128xf32> to vector<8x128xf32>
    %cst = arith.constant 0.000000e+00 : bf16
    %2 = vector.broadcast %cst : bf16 to vector<10x10x40xbf16>
    %c0_1 = arith.constant 0 : index
    %c0_2 = arith.constant 0 : index
    %c0_3 = arith.constant 0 : index
    %3 = vector.load %arg7[%c0_1, %c0_2, %c0_3] : memref<10x10x40xbf16, #tpu.memory_space<vmem>>, vector<10x10x40xbf16>
    tpu.vector_store %arg7[%c0_1, %c0_2, %c0_3], %2 {strides = array<i32>} : memref<10x10x40xbf16, #tpu.memory_space<vmem>>, vector<10x10x40xbf16>,
    %cst_4 = arith.constant 0.000000e+00 : bf16
    %4 = vector.broadcast %cst_4 : bf16 to vector<10x10x160xbf16>
    %c0_5 = arith.constant 0 : index
    %c0_6 = arith.constant 0 : index
    %c0_7 = arith.constant 0 : index
    %5 = vector.load %arg8[%c0_5, %c0_6, %c0_7] : memref<10x10x160xbf16, #tpu.memory_space<vmem>>, vector<10x10x160xbf16>
    tpu.vector_store %arg8[%c0_5, %c0_6, %c0_7], %4 {strides = array<i32>} : memref<10x10x160xbf16, #tpu.memory_space<vmem>>, vector<10x10x160xbf16>,
    %c0_8 = arith.constant 0 : index
    %c0_9 = arith.constant 0 : index
    %c0_10 = arith.constant 0 : index
    %c0_11 = arith.constant 0 : index
    %6 = vector.load %arg1[%c0_8, %c0_9, %c0_10, %c0_11] : memref<1x8x8x32xbf16, #tpu.memory_space<vmem>>, vector<1x8x8x32xbf16>
    %7 = vector.shape_cast %6 : vector<1x8x8x32xbf16> to vector<8x8x32xbf16>
    %c1 = arith.constant 1 : index
    %c1_12 = arith.constant 1 : index
    %c4 = arith.constant 4 : index
    %8 = vector.load %arg7[%c1, %c1_12, %c4] : memref<10x10x40xbf16, #tpu.memory_space<vmem>>, vector<8x8x32xbf16>
    tpu.vector_store %arg7[%c1, %c1_12, %c4], %7 {strides = array<i32>} : memref<10x10x40xbf16, #tpu.memory_space<vmem>>, vector<8x8x32xbf16>,
    %c0_13 = arith.constant 0 : index
    %c0_14 = arith.constant 0 : index
    %c0_15 = arith.constant 0 : index
    %9 = vector.load %arg7[%c0_13, %c0_14, %c0_15] : memref<10x10x40xbf16, #tpu.memory_space<vmem>>, vector<8x8x40xbf16>
    %10 = vector.shape_cast %9 : vector<8x8x40xbf16> to vector<64x40xbf16>
    %c0_16 = arith.constant 0 : index
    %c0_17 = arith.constant 0 : index
    %c0_18 = arith.constant 0 : index
    %11 = vector.load %arg2[%c0_16, %c0_17, %c0_18] : memref<9x40x128xbf16, #tpu.memory_space<vmem>>, vector<1x40x128xbf16>
    %12 = vector.shape_cast %11 : vector<1x40x128xbf16> to vector<40x128xbf16>
    %cst_19 = arith.constant dense<0.000000e+00> : vector<64x128xf32>
    %13 = tpu.matmul %10, %12, %cst_19 {dimension_numbers = #tpu.dot_dimension_numbers<[1], [0], [0], [1], [0, 0, 1, 1], [], []>} : vector<64x40xbf16>, vector<40x128xbf16>, vector<64x128xf32> -> vector<64x128xf32>
    %c0_20 = arith.constant 0 : index
    %c1_21 = arith.constant 1 : index
    %c0_22 = arith.constant 0 : index
    %14 = vector.load %arg7[%c0_20, %c1_21, %c0_22] : memref<10x10x40xbf16, #tpu.memory_space<vmem>>, vector<8x8x40xbf16>
    %15 = vector.shape_cast %14 : vector<8x8x40xbf16> to vector<64x40xbf16>
    %c1_23 = arith.constant 1 : index
    %c0_24 = arith.constant 0 : index
    %c0_25 = arith.constant 0 : index
    %16 = vector.load %arg2[%c1_23, %c0_24, %c0_25] : memref<9x40x128xbf16, #tpu.memory_space<vmem>>, vector<1x40x128xbf16>
    %17 = vector.shape_cast %16 : vector<1x40x128xbf16> to vector<40x128xbf16>
    %cst_26 = arith.constant dense<0.000000e+00> : vector<64x128xf32>
    %18 = tpu.matmul %15, %17, %cst_26 {dimension_numbers = #tpu.dot_dimension_numbers<[1], [0], [0], [1], [0, 0, 1, 1], [], []>} : vector<64x40xbf16>, vector<40x128xbf16>, vector<64x128xf32> -> vector<64x128xf32>
    %19 = arith.addf %13, %18 : vector<64x128xf32>
    %c0_27 = arith.constant 0 : index
    %c2 = arith.constant 2 : index
    %c0_28 = arith.constant 0 : index
    %20 = vector.load %arg7[%c0_27, %c2, %c0_28] : memref<10x10x40xbf16, #tpu.memory_space<vmem>>, vector<8x8x40xbf16>
    %21 = vector.shape_cast %20 : vector<8x8x40xbf16> to vector<64x40xbf16>
    %c2_29 = arith.constant 2 : index
    %c0_30 = arith.constant 0 : index
    %c0_31 = arith.constant 0 : index
    %22 = vector.load %arg2[%c2_29, %c0_30, %c0_31] : memref<9x40x128xbf16, #tpu.memory_space<vmem>>, vector<1x40x128xbf16>
    %23 = vector.shape_cast %22 : vector<1x40x128xbf16> to vector<40x128xbf16>
    %cst_32 = arith.constant dense<0.000000e+00> : vector<64x128xf32>
    %24 = tpu.matmul %21, %23, %cst_32 {dimension_numbers = #tpu.dot_dimension_numbers<[1], [0], [0], [1], [0, 0, 1, 1], [], []>} : vector<64x40xbf16>, vector<40x128xbf16>, vector<64x128xf32> -> vector<64x128xf32>
    %25 = arith.addf %19, %24 : vector<64x128xf32>
    %c1_33 = arith.constant 1 : index
    %c0_34 = arith.constant 0 : index
    %c0_35 = arith.constant 0 : index
    %26 = vector.load %arg7[%c1_33, %c0_34, %c0_35] : memref<10x10x40xbf16, #tpu.memory_space<vmem>>, vector<8x8x40xbf16>
    %27 = vector.shape_cast %26 : vector<8x8x40xbf16> to vector<64x40xbf16>
    %c3 = arith.constant 3 : index
    %c0_36 = arith.constant 0 : index
    %c0_37 = arith.constant 0 : index
    %28 = vector.load %arg2[%c3, %c0_36, %c0_37] : memref<9x40x128xbf16, #tpu.memory_space<vmem>>, vector<1x40x128xbf16>
    %29 = vector.shape_cast %28 : vector<1x40x128xbf16> to vector<40x128xbf16>
    %cst_38 = arith.constant dense<0.000000e+00> : vector<64x128xf32>
    %30 = tpu.matmul %27, %29, %cst_38 {dimension_numbers = #tpu.dot_dimension_numbers<[1], [0], [0], [1], [0, 0, 1, 1], [], []>} : vector<64x40xbf16>, vector<40x128xbf16>, vector<64x128xf32> -> vector<64x128xf32>
    %31 = arith.addf %25, %30 : vector<64x128xf32>
    %c1_39 = arith.constant 1 : index
    %c1_40 = arith.constant 1 : index
    %c0_41 = arith.constant 0 : index
    %32 = vector.load %arg7[%c1_39, %c1_40, %c0_41] : memref<10x10x40xbf16, #tpu.memory_space<vmem>>, vector<8x8x40xbf16>
    %33 = vector.shape_cast %32 : vector<8x8x40xbf16> to vector<64x40xbf16>
    %c4_42 = arith.constant 4 : index
    %c0_43 = arith.constant 0 : index
    %c0_44 = arith.constant 0 : index
    %34 = vector.load %arg2[%c4_42, %c0_43, %c0_44] : memref<9x40x128xbf16, #tpu.memory_space<vmem>>, vector<1x40x128xbf16>
    %35 = vector.shape_cast %34 : vector<1x40x128xbf16> to vector<40x128xbf16>
    %cst_45 = arith.constant dense<0.000000e+00> : vector<64x128xf32>
    %36 = tpu.matmul %33, %35, %cst_45 {dimension_numbers = #tpu.dot_dimension_numbers<[1], [0], [0], [1], [0, 0, 1, 1], [], []>} : vector<64x40xbf16>, vector<40x128xbf16>, vector<64x128xf32> -> vector<64x128xf32>
    %37 = arith.addf %31, %36 : vector<64x128xf32>
    %c1_46 = arith.constant 1 : index
    %c2_47 = arith.constant 2 : index
    %c0_48 = arith.constant 0 : index
    %38 = vector.load %arg7[%c1_46, %c2_47, %c0_48] : memref<10x10x40xbf16, #tpu.memory_space<vmem>>, vector<8x8x40xbf16>
    %39 = vector.shape_cast %38 : vector<8x8x40xbf16> to vector<64x40xbf16>
    %c5 = arith.constant 5 : index
    %c0_49 = arith.constant 0 : index
    %c0_50 = arith.constant 0 : index
    %40 = vector.load %arg2[%c5, %c0_49, %c0_50] : memref<9x40x128xbf16, #tpu.memory_space<vmem>>, vector<1x40x128xbf16>
    %41 = vector.shape_cast %40 : vector<1x40x128xbf16> to vector<40x128xbf16>
    %cst_51 = arith.constant dense<0.000000e+00> : vector<64x128xf32>
    %42 = tpu.matmul %39, %41, %cst_51 {dimension_numbers = #tpu.dot_dimension_numbers<[1], [0], [0], [1], [0, 0, 1, 1], [], []>} : vector<64x40xbf16>, vector<40x128xbf16>, vector<64x128xf32> -> vector<64x128xf32>
    %43 = arith.addf %37, %42 : vector<64x128xf32>
    %c2_52 = arith.constant 2 : index
    %c0_53 = arith.constant 0 : index
    %c0_54 = arith.constant 0 : index
    %44 = vector.load %arg7[%c2_52, %c0_53, %c0_54] : memref<10x10x40xbf16, #tpu.memory_space<vmem>>, vector<8x8x40xbf16>
    %45 = vector.shape_cast %44 : vector<8x8x40xbf16> to vector<64x40xbf16>
    %c6 = arith.constant 6 : index
    %c0_55 = arith.constant 0 : index
    %c0_56 = arith.constant 0 : index
    %46 = vector.load %arg2[%c6, %c0_55, %c0_56] : memref<9x40x128xbf16, #tpu.memory_space<vmem>>, vector<1x40x128xbf16>
    %47 = vector.shape_cast %46 : vector<1x40x128xbf16> to vector<40x128xbf16>
    %cst_57 = arith.constant dense<0.000000e+00> : vector<64x128xf32>
    %48 = tpu.matmul %45, %47, %cst_57 {dimension_numbers = #tpu.dot_dimension_numbers<[1], [0], [0], [1], [0, 0, 1, 1], [], []>} : vector<64x40xbf16>, vector<40x128xbf16>, vector<64x128xf32> -> vector<64x128xf32>
    %49 = arith.addf %43, %48 : vector<64x128xf32>
    %c2_58 = arith.constant 2 : index
    %c1_59 = arith.constant 1 : index
    %c0_60 = arith.constant 0 : index
    %50 = vector.load %arg7[%c2_58, %c1_59, %c0_60] : memref<10x10x40xbf16, #tpu.memory_space<vmem>>, vector<8x8x40xbf16>
    %51 = vector.shape_cast %50 : vector<8x8x40xbf16> to vector<64x40xbf16>
    %c7 = arith.constant 7 : index
    %c0_61 = arith.constant 0 : index
    %c0_62 = arith.constant 0 : index
    %52 = vector.load %arg2[%c7, %c0_61, %c0_62] : memref<9x40x128xbf16, #tpu.memory_space<vmem>>, vector<1x40x128xbf16>
    %53 = vector.shape_cast %52 : vector<1x40x128xbf16> to vector<40x128xbf16>
    %cst_63 = arith.constant dense<0.000000e+00> : vector<64x128xf32>
    %54 = tpu.matmul %51, %53, %cst_63 {dimension_numbers = #tpu.dot_dimension_numbers<[1], [0], [0], [1], [0, 0, 1, 1], [], []>} : vector<64x40xbf16>, vector<40x128xbf16>, vector<64x128xf32> -> vector<64x128xf32>
    %55 = arith.addf %49, %54 : vector<64x128xf32>
    %c2_64 = arith.constant 2 : index
    %c2_65 = arith.constant 2 : index
    %c0_66 = arith.constant 0 : index
    %56 = vector.load %arg7[%c2_64, %c2_65, %c0_66] : memref<10x10x40xbf16, #tpu.memory_space<vmem>>, vector<8x8x40xbf16>
    %57 = vector.shape_cast %56 : vector<8x8x40xbf16> to vector<64x40xbf16>
    %c8 = arith.constant 8 : index
    %c0_67 = arith.constant 0 : index
    %c0_68 = arith.constant 0 : index
    %58 = vector.load %arg2[%c8, %c0_67, %c0_68] : memref<9x40x128xbf16, #tpu.memory_space<vmem>>, vector<1x40x128xbf16>
    %59 = vector.shape_cast %58 : vector<1x40x128xbf16> to vector<40x128xbf16>
    %cst_69 = arith.constant dense<0.000000e+00> : vector<64x128xf32>
    %60 = tpu.matmul %57, %59, %cst_69 {dimension_numbers = #tpu.dot_dimension_numbers<[1], [0], [0], [1], [0, 0, 1, 1], [], []>} : vector<64x40xbf16>, vector<40x128xbf16>, vector<64x128xf32> -> vector<64x128xf32>
    %61 = arith.addf %55, %60 : vector<64x128xf32>
    %62 = vector.extract_strided_slice %0 {offsets = [0, 0], sizes = [1, 128], strides = [1, 1]} : vector<16x128xf32> to vector<1x128xf32>
    %63 = vector.broadcast %62 : vector<1x128xf32> to vector<64x128xf32>
    %64 = arith.addf %61, %63 : vector<64x128xf32>
    %65 = vector.extract_strided_slice %0 {offsets = [1, 0], sizes = [1, 128], strides = [1, 1]} : vector<16x128xf32> to vector<1x128xf32>
    %66 = vector.extract_strided_slice %0 {offsets = [2, 0], sizes = [1, 128], strides = [1, 1]} : vector<16x128xf32> to vector<1x128xf32>
    %cst_70 = arith.constant dense<0.000000e+00> : vector<128xf32>
    %67 = vector.multi_reduction <add>, %64, %cst_70 [0] : vector<64x128xf32> to vector<128xf32>
    %68 = vector.shape_cast %67 : vector<128xf32> to vector<1x128xf32>
    %69 = arith.mulf %64, %64 : vector<64x128xf32>
    %cst_71 = arith.constant dense<0.000000e+00> : vector<128xf32>
    %70 = vector.multi_reduction <add>, %69, %cst_71 [0] : vector<64x128xf32> to vector<128xf32>
    %71 = vector.shape_cast %70 : vector<128xf32> to vector<1x128xf32>
    %72 = tpu.concatenate %68, %71 in 0 : vector<1x128xf32>, vector<1x128xf32> -> vector<2x128xf32>
    %cst_72 = arith.constant dense<0.000000e+00> : vector<2x8xf32>
    %73 = tpu.matmul %72, %1, %cst_72 {dimension_numbers = #tpu.dot_dimension_numbers<[1], [1], [0], [0], [0, 0, 1, 0], [], []>} : vector<2x128xf32>, vector<8x128xf32>, vector<2x8xf32> -> vector<2x8xf32>
    %74 = vector.extract_strided_slice %73 {offsets = [0, 0], sizes = [1, 8], strides = [1, 1]} : vector<2x8xf32> to vector<1x8xf32>
    %cst_73 = arith.constant 1.024000e+03 : f32
    %75 = vector.broadcast %cst_73 : f32 to vector<1x8xf32>
    %76 = arith.divf %74, %75 : vector<1x8xf32>
    %77 = vector.extract_strided_slice %73 {offsets = [1, 0], sizes = [1, 8], strides = [1, 1]} : vector<2x8xf32> to vector<1x8xf32>
    %cst_74 = arith.constant 1.024000e+03 : f32
    %78 = vector.broadcast %cst_74 : f32 to vector<1x8xf32>
    %79 = arith.divf %77, %78 : vector<1x8xf32>
    %80 = arith.mulf %76, %76 : vector<1x8xf32>
    %81 = arith.subf %79, %80 : vector<1x8xf32>
    %cst_75 = arith.constant 0.000000e+00 : f32
    %82 = vector.broadcast %cst_75 : f32 to vector<1x8xf32>
    %83 = arith.maximumf %81, %82 : vector<1x8xf32>
    %cst_76 = arith.constant 9.99999974E-6 : f32
    %84 = vector.broadcast %cst_76 : f32 to vector<1x8xf32>
    %85 = arith.addf %83, %84 : vector<1x8xf32>
    %86 = math.rsqrt %85 : vector<1x8xf32>
    %87 = tpu.concatenate %76, %86 in 0 : vector<1x8xf32>, vector<1x8xf32> -> vector<2x8xf32>
    %cst_77 = arith.constant dense<0.000000e+00> : vector<2x128xf32>
    %88 = tpu.matmul %87, %1, %cst_77 {dimension_numbers = #tpu.dot_dimension_numbers<[1], [0], [0], [1], [0, 0, 1, 1], [], []>} : vector<2x8xf32>, vector<8x128xf32>, vector<2x128xf32> -> vector<2x128xf32>
    %89 = vector.extract_strided_slice %88 {offsets = [0, 0], sizes = [1, 128], strides = [1, 1]} : vector<2x128xf32> to vector<1x128xf32>
    %90 = vector.broadcast %89 : vector<1x128xf32> to vector<64x128xf32>
    %91 = arith.subf %64, %90 : vector<64x128xf32>
    %92 = vector.extract_strided_slice %88 {offsets = [1, 0], sizes = [1, 128], strides = [1, 1]} : vector<2x128xf32> to vector<1x128xf32>
    %93 = vector.broadcast %92 : vector<1x128xf32> to vector<64x128xf32>
    %94 = arith.mulf %91, %93 : vector<64x128xf32>
    %95 = vector.broadcast %65 : vector<1x128xf32> to vector<64x128xf32>
    %96 = arith.mulf %94, %95 : vector<64x128xf32>
    %97 = vector.broadcast %66 : vector<1x128xf32> to vector<64x128xf32>
    %98 = arith.addf %96, %97 : vector<64x128xf32>
    %cst_78 = arith.constant 0.000000e+00 : f32
    %99 = vector.broadcast %cst_78 : f32 to vector<64x128xf32>
    %100 = arith.maximumf %98, %99 : vector<64x128xf32>
    %101 = vector.shape_cast %100 : vector<64x128xf32> to vector<8x8x128xf32>
    %102 = arith.truncf %101 : vector<8x8x128xf32> to vector<8x8x128xbf16>
    %c1_79 = arith.constant 1 : index
    %c1_80 = arith.constant 1 : index
    %c16 = arith.constant 16 : index
    %103 = vector.load %arg8[%c1_79, %c1_80, %c16] : memref<10x10x160xbf16, #tpu.memory_space<vmem>>, vector<8x8x128xbf16>
    tpu.vector_store %arg8[%c1_79, %c1_80, %c16], %102 {strides = array<i32>} : memref<10x10x160xbf16, #tpu.memory_space<vmem>>, vector<8x8x128xbf16>,
    %c0_81 = arith.constant 0 : index
    %c0_82 = arith.constant 0 : index
    %c0_83 = arith.constant 0 : index
    %104 = vector.load %arg8[%c0_81, %c0_82, %c0_83] : memref<10x10x160xbf16, #tpu.memory_space<vmem>>, vector<8x8x160xbf16>
    %105 = vector.shape_cast %104 : vector<8x8x160xbf16> to vector<64x160xbf16>
    %c0_84 = arith.constant 0 : index
    %c0_85 = arith.constant 0 : index
    %c0_86 = arith.constant 0 : index
    %106 = vector.load %arg3[%c0_84, %c0_85, %c0_86] : memref<9x160x128xbf16, #tpu.memory_space<vmem>>, vector<1x160x128xbf16>
    %107 = vector.shape_cast %106 : vector<1x160x128xbf16> to vector<160x128xbf16>
    %cst_87 = arith.constant dense<0.000000e+00> : vector<64x128xf32>
    %108 = tpu.matmul %105, %107, %cst_87 {dimension_numbers = #tpu.dot_dimension_numbers<[1], [0], [0], [1], [0, 0, 1, 1], [], []>} : vector<64x160xbf16>, vector<160x128xbf16>, vector<64x128xf32> -> vector<64x128xf32>
    %c0_88 = arith.constant 0 : index
    %c1_89 = arith.constant 1 : index
    %c0_90 = arith.constant 0 : index
    %109 = vector.load %arg8[%c0_88, %c1_89, %c0_90] : memref<10x10x160xbf16, #tpu.memory_space<vmem>>, vector<8x8x160xbf16>
    %110 = vector.shape_cast %109 : vector<8x8x160xbf16> to vector<64x160xbf16>
    %c1_91 = arith.constant 1 : index
    %c0_92 = arith.constant 0 : index
    %c0_93 = arith.constant 0 : index
    %111 = vector.load %arg3[%c1_91, %c0_92, %c0_93] : memref<9x160x128xbf16, #tpu.memory_space<vmem>>, vector<1x160x128xbf16>
    %112 = vector.shape_cast %111 : vector<1x160x128xbf16> to vector<160x128xbf16>
    %cst_94 = arith.constant dense<0.000000e+00> : vector<64x128xf32>
    %113 = tpu.matmul %110, %112, %cst_94 {dimension_numbers = #tpu.dot_dimension_numbers<[1], [0], [0], [1], [0, 0, 1, 1], [], []>} : vector<64x160xbf16>, vector<160x128xbf16>, vector<64x128xf32> -> vector<64x128xf32>
    %114 = arith.addf %108, %113 : vector<64x128xf32>
    %c0_95 = arith.constant 0 : index
    %c2_96 = arith.constant 2 : index
    %c0_97 = arith.constant 0 : index
    %115 = vector.load %arg8[%c0_95, %c2_96, %c0_97] : memref<10x10x160xbf16, #tpu.memory_space<vmem>>, vector<8x8x160xbf16>
    %116 = vector.shape_cast %115 : vector<8x8x160xbf16> to vector<64x160xbf16>
    %c2_98 = arith.constant 2 : index
    %c0_99 = arith.constant 0 : index
    %c0_100 = arith.constant 0 : index
    %117 = vector.load %arg3[%c2_98, %c0_99, %c0_100] : memref<9x160x128xbf16, #tpu.memory_space<vmem>>, vector<1x160x128xbf16>
    %118 = vector.shape_cast %117 : vector<1x160x128xbf16> to vector<160x128xbf16>
    %cst_101 = arith.constant dense<0.000000e+00> : vector<64x128xf32>
    %119 = tpu.matmul %116, %118, %cst_101 {dimension_numbers = #tpu.dot_dimension_numbers<[1], [0], [0], [1], [0, 0, 1, 1], [], []>} : vector<64x160xbf16>, vector<160x128xbf16>, vector<64x128xf32> -> vector<64x128xf32>
    %120 = arith.addf %114, %119 : vector<64x128xf32>
    %c1_102 = arith.constant 1 : index
    %c0_103 = arith.constant 0 : index
    %c0_104 = arith.constant 0 : index
    %121 = vector.load %arg8[%c1_102, %c0_103, %c0_104] : memref<10x10x160xbf16, #tpu.memory_space<vmem>>, vector<8x8x160xbf16>
    %122 = vector.shape_cast %121 : vector<8x8x160xbf16> to vector<64x160xbf16>
    %c3_105 = arith.constant 3 : index
    %c0_106 = arith.constant 0 : index
    %c0_107 = arith.constant 0 : index
    %123 = vector.load %arg3[%c3_105, %c0_106, %c0_107] : memref<9x160x128xbf16, #tpu.memory_space<vmem>>, vector<1x160x128xbf16>
    %124 = vector.shape_cast %123 : vector<1x160x128xbf16> to vector<160x128xbf16>
    %cst_108 = arith.constant dense<0.000000e+00> : vector<64x128xf32>
    %125 = tpu.matmul %122, %124, %cst_108 {dimension_numbers = #tpu.dot_dimension_numbers<[1], [0], [0], [1], [0, 0, 1, 1], [], []>} : vector<64x160xbf16>, vector<160x128xbf16>, vector<64x128xf32> -> vector<64x128xf32>
    %126 = arith.addf %120, %125 : vector<64x128xf32>
    %c1_109 = arith.constant 1 : index
    %c1_110 = arith.constant 1 : index
    %c0_111 = arith.constant 0 : index
    %127 = vector.load %arg8[%c1_109, %c1_110, %c0_111] : memref<10x10x160xbf16, #tpu.memory_space<vmem>>, vector<8x8x160xbf16>
    %128 = vector.shape_cast %127 : vector<8x8x160xbf16> to vector<64x160xbf16>
    %c4_112 = arith.constant 4 : index
    %c0_113 = arith.constant 0 : index
    %c0_114 = arith.constant 0 : index
    %129 = vector.load %arg3[%c4_112, %c0_113, %c0_114] : memref<9x160x128xbf16, #tpu.memory_space<vmem>>, vector<1x160x128xbf16>
    %130 = vector.shape_cast %129 : vector<1x160x128xbf16> to vector<160x128xbf16>
    %cst_115 = arith.constant dense<0.000000e+00> : vector<64x128xf32>
    %131 = tpu.matmul %128, %130, %cst_115 {dimension_numbers = #tpu.dot_dimension_numbers<[1], [0], [0], [1], [0, 0, 1, 1], [], []>} : vector<64x160xbf16>, vector<160x128xbf16>, vector<64x128xf32> -> vector<64x128xf32>
    %132 = arith.addf %126, %131 : vector<64x128xf32>
    %c1_116 = arith.constant 1 : index
    %c2_117 = arith.constant 2 : index
    %c0_118 = arith.constant 0 : index
    %133 = vector.load %arg8[%c1_116, %c2_117, %c0_118] : memref<10x10x160xbf16, #tpu.memory_space<vmem>>, vector<8x8x160xbf16>
    %134 = vector.shape_cast %133 : vector<8x8x160xbf16> to vector<64x160xbf16>
    %c5_119 = arith.constant 5 : index
    %c0_120 = arith.constant 0 : index
    %c0_121 = arith.constant 0 : index
    %135 = vector.load %arg3[%c5_119, %c0_120, %c0_121] : memref<9x160x128xbf16, #tpu.memory_space<vmem>>, vector<1x160x128xbf16>
    %136 = vector.shape_cast %135 : vector<1x160x128xbf16> to vector<160x128xbf16>
    %cst_122 = arith.constant dense<0.000000e+00> : vector<64x128xf32>
    %137 = tpu.matmul %134, %136, %cst_122 {dimension_numbers = #tpu.dot_dimension_numbers<[1], [0], [0], [1], [0, 0, 1, 1], [], []>} : vector<64x160xbf16>, vector<160x128xbf16>, vector<64x128xf32> -> vector<64x128xf32>
    %138 = arith.addf %132, %137 : vector<64x128xf32>
    %c2_123 = arith.constant 2 : index
    %c0_124 = arith.constant 0 : index
    %c0_125 = arith.constant 0 : index
    %139 = vector.load %arg8[%c2_123, %c0_124, %c0_125] : memref<10x10x160xbf16, #tpu.memory_space<vmem>>, vector<8x8x160xbf16>
    %140 = vector.shape_cast %139 : vector<8x8x160xbf16> to vector<64x160xbf16>
    %c6_126 = arith.constant 6 : index
    %c0_127 = arith.constant 0 : index
    %c0_128 = arith.constant 0 : index
    %141 = vector.load %arg3[%c6_126, %c0_127, %c0_128] : memref<9x160x128xbf16, #tpu.memory_space<vmem>>, vector<1x160x128xbf16>
    %142 = vector.shape_cast %141 : vector<1x160x128xbf16> to vector<160x128xbf16>
    %cst_129 = arith.constant dense<0.000000e+00> : vector<64x128xf32>
    %143 = tpu.matmul %140, %142, %cst_129 {dimension_numbers = #tpu.dot_dimension_numbers<[1], [0], [0], [1], [0, 0, 1, 1], [], []>} : vector<64x160xbf16>, vector<160x128xbf16>, vector<64x128xf32> -> vector<64x128xf32>
    %144 = arith.addf %138, %143 : vector<64x128xf32>
    %c2_130 = arith.constant 2 : index
    %c1_131 = arith.constant 1 : index
    %c0_132 = arith.constant 0 : index
    %145 = vector.load %arg8[%c2_130, %c1_131, %c0_132] : memref<10x10x160xbf16, #tpu.memory_space<vmem>>, vector<8x8x160xbf16>
    %146 = vector.shape_cast %145 : vector<8x8x160xbf16> to vector<64x160xbf16>
    %c7_133 = arith.constant 7 : index
    %c0_134 = arith.constant 0 : index
    %c0_135 = arith.constant 0 : index
    %147 = vector.load %arg3[%c7_133, %c0_134, %c0_135] : memref<9x160x128xbf16, #tpu.memory_space<vmem>>, vector<1x160x128xbf16>
    %148 = vector.shape_cast %147 : vector<1x160x128xbf16> to vector<160x128xbf16>
    %cst_136 = arith.constant dense<0.000000e+00> : vector<64x128xf32>
    %149 = tpu.matmul %146, %148, %cst_136 {dimension_numbers = #tpu.dot_dimension_numbers<[1], [0], [0], [1], [0, 0, 1, 1], [], []>} : vector<64x160xbf16>, vector<160x128xbf16>, vector<64x128xf32> -> vector<64x128xf32>
    %150 = arith.addf %144, %149 : vector<64x128xf32>
    %c2_137 = arith.constant 2 : index
    %c2_138 = arith.constant 2 : index
    %c0_139 = arith.constant 0 : index
    %151 = vector.load %arg8[%c2_137, %c2_138, %c0_139] : memref<10x10x160xbf16, #tpu.memory_space<vmem>>, vector<8x8x160xbf16>
    %152 = vector.shape_cast %151 : vector<8x8x160xbf16> to vector<64x160xbf16>
    %c8_140 = arith.constant 8 : index
    %c0_141 = arith.constant 0 : index
    %c0_142 = arith.constant 0 : index
    %153 = vector.load %arg3[%c8_140, %c0_141, %c0_142] : memref<9x160x128xbf16, #tpu.memory_space<vmem>>, vector<1x160x128xbf16>
    %154 = vector.shape_cast %153 : vector<1x160x128xbf16> to vector<160x128xbf16>
    %cst_143 = arith.constant dense<0.000000e+00> : vector<64x128xf32>
    %155 = tpu.matmul %152, %154, %cst_143 {dimension_numbers = #tpu.dot_dimension_numbers<[1], [0], [0], [1], [0, 0, 1, 1], [], []>} : vector<64x160xbf16>, vector<160x128xbf16>, vector<64x128xf32> -> vector<64x128xf32>
    %156 = arith.addf %150, %155 : vector<64x128xf32>
    %157 = vector.extract_strided_slice %0 {offsets = [3, 0], sizes = [1, 128], strides = [1, 1]} : vector<16x128xf32> to vector<1x128xf32>
    %158 = vector.broadcast %157 : vector<1x128xf32> to vector<64x128xf32>
    %159 = arith.addf %156, %158 : vector<64x128xf32>
    %160 = vector.extract_strided_slice %0 {offsets = [4, 0], sizes = [1, 128], strides = [1, 1]} : vector<16x128xf32> to vector<1x128xf32>
    %161 = vector.extract_strided_slice %0 {offsets = [5, 0], sizes = [1, 128], strides = [1, 1]} : vector<16x128xf32> to vector<1x128xf32>
    %cst_144 = arith.constant dense<0.000000e+00> : vector<128xf32>
    %162 = vector.multi_reduction <add>, %159, %cst_144 [0] : vector<64x128xf32> to vector<128xf32>
    %163 = vector.shape_cast %162 : vector<128xf32> to vector<1x128xf32>
    %164 = arith.mulf %159, %159 : vector<64x128xf32>
    %cst_145 = arith.constant dense<0.000000e+00> : vector<128xf32>
    %165 = vector.multi_reduction <add>, %164, %cst_145 [0] : vector<64x128xf32> to vector<128xf32>
    %166 = vector.shape_cast %165 : vector<128xf32> to vector<1x128xf32>
    %167 = tpu.concatenate %163, %166 in 0 : vector<1x128xf32>, vector<1x128xf32> -> vector<2x128xf32>
    %cst_146 = arith.constant dense<0.000000e+00> : vector<2x8xf32>
    %168 = tpu.matmul %167, %1, %cst_146 {dimension_numbers = #tpu.dot_dimension_numbers<[1], [1], [0], [0], [0, 0, 1, 0], [], []>} : vector<2x128xf32>, vector<8x128xf32>, vector<2x8xf32> -> vector<2x8xf32>
    %169 = vector.extract_strided_slice %168 {offsets = [0, 0], sizes = [1, 8], strides = [1, 1]} : vector<2x8xf32> to vector<1x8xf32>
    %cst_147 = arith.constant 1.024000e+03 : f32
    %170 = vector.broadcast %cst_147 : f32 to vector<1x8xf32>
    %171 = arith.divf %169, %170 : vector<1x8xf32>
    %172 = vector.extract_strided_slice %168 {offsets = [1, 0], sizes = [1, 8], strides = [1, 1]} : vector<2x8xf32> to vector<1x8xf32>
    %cst_148 = arith.constant 1.024000e+03 : f32
    %173 = vector.broadcast %cst_148 : f32 to vector<1x8xf32>
    %174 = arith.divf %172, %173 : vector<1x8xf32>
    %175 = arith.mulf %171, %171 : vector<1x8xf32>
    %176 = arith.subf %174, %175 : vector<1x8xf32>
    %cst_149 = arith.constant 0.000000e+00 : f32
    %177 = vector.broadcast %cst_149 : f32 to vector<1x8xf32>
    %178 = arith.maximumf %176, %177 : vector<1x8xf32>
    %cst_150 = arith.constant 9.99999974E-6 : f32
    %179 = vector.broadcast %cst_150 : f32 to vector<1x8xf32>
    %180 = arith.addf %178, %179 : vector<1x8xf32>
    %181 = math.rsqrt %180 : vector<1x8xf32>
    %182 = tpu.concatenate %171, %181 in 0 : vector<1x8xf32>, vector<1x8xf32> -> vector<2x8xf32>
    %cst_151 = arith.constant dense<0.000000e+00> : vector<2x128xf32>
    %183 = tpu.matmul %182, %1, %cst_151 {dimension_numbers = #tpu.dot_dimension_numbers<[1], [0], [0], [1], [0, 0, 1, 1], [], []>} : vector<2x8xf32>, vector<8x128xf32>, vector<2x128xf32> -> vector<2x128xf32>
    %184 = vector.extract_strided_slice %183 {offsets = [0, 0], sizes = [1, 128], strides = [1, 1]} : vector<2x128xf32> to vector<1x128xf32>
    %185 = vector.broadcast %184 : vector<1x128xf32> to vector<64x128xf32>
    %186 = arith.subf %159, %185 : vector<64x128xf32>
    %187 = vector.extract_strided_slice %183 {offsets = [1, 0], sizes = [1, 128], strides = [1, 1]} : vector<2x128xf32> to vector<1x128xf32>
    %188 = vector.broadcast %187 : vector<1x128xf32> to vector<64x128xf32>
    %189 = arith.mulf %186, %188 : vector<64x128xf32>
    %190 = vector.broadcast %160 : vector<1x128xf32> to vector<64x128xf32>
    %191 = arith.mulf %189, %190 : vector<64x128xf32>
    %192 = vector.broadcast %161 : vector<1x128xf32> to vector<64x128xf32>
    %193 = arith.addf %191, %192 : vector<64x128xf32>
    %cst_152 = arith.constant 0.000000e+00 : f32
    %194 = vector.broadcast %cst_152 : f32 to vector<64x128xf32>
    %195 = arith.maximumf %193, %194 : vector<64x128xf32>
    %196 = vector.shape_cast %7 : vector<8x8x32xbf16> to vector<64x32xbf16>
    %c0_153 = arith.constant 0 : index
    %c0_154 = arith.constant 0 : index
    %197 = vector.load %arg4[%c0_153, %c0_154] : memref<32x128xbf16, #tpu.memory_space<vmem>>, vector<32x128xbf16>
    %cst_155 = arith.constant dense<0.000000e+00> : vector<64x128xf32>
    %198 = tpu.matmul %196, %197, %cst_155 {dimension_numbers = #tpu.dot_dimension_numbers<[1], [0], [0], [1], [0, 0, 1, 1], [], []>} : vector<64x32xbf16>, vector<32x128xbf16>, vector<64x128xf32> -> vector<64x128xf32>
    %199 = vector.extract_strided_slice %0 {offsets = [6, 0], sizes = [1, 128], strides = [1, 1]} : vector<16x128xf32> to vector<1x128xf32>
    %200 = vector.broadcast %199 : vector<1x128xf32> to vector<64x128xf32>
    %201 = arith.addf %198, %200 : vector<64x128xf32>
    %202 = arith.addf %201, %195 : vector<64x128xf32>
    %203 = vector.shape_cast %202 : vector<64x128xf32> to vector<1x64x128xf32>
    %c0_156 = arith.constant 0 : index
    %c0_157 = arith.constant 0 : index
    %c0_158 = arith.constant 0 : index
    %204 = vector.load %arg6[%c0_156, %c0_157, %c0_158] : memref<1x64x128xf32, #tpu.memory_space<vmem>>, vector<1x64x128xf32>
    tpu.vector_store %arg6[%c0_156, %c0_157, %c0_158], %203 {strides = array<i32>} : memref<1x64x128xf32, #tpu.memory_space<vmem>>, vector<1x64x128xf32>,
    return
  }
  func.func @transform_0(%arg0: i32) -> (i32, i32, i32, i32) {
    %c0_i32 = arith.constant 0 : i32
    %c0_i32_0 = arith.constant 0 : i32
    %c0_i32_1 = arith.constant 0 : i32
    %c0_i32_2 = arith.constant 0 : i32
    return %arg0, %c0_i32, %c0_i32_0, %c0_i32_1 : i32, i32, i32, i32
  }
  func.func @transform_1(%arg0: i32) -> (i32, i32, i32) {
    %c0_i32 = arith.constant 0 : i32
    %c0_i32_0 = arith.constant 0 : i32
    %c0_i32_1 = arith.constant 0 : i32
    %c0_i32_2 = arith.constant 0 : i32
    return %c0_i32, %c0_i32_0, %c0_i32_1 : i32, i32, i32
  }
  func.func @transform_2(%arg0: i32) -> (i32, i32, i32) {
    %c0_i32 = arith.constant 0 : i32
    %c0_i32_0 = arith.constant 0 : i32
    %c0_i32_1 = arith.constant 0 : i32
    %c0_i32_2 = arith.constant 0 : i32
    return %c0_i32, %c0_i32_0, %c0_i32_1 : i32, i32, i32
  }
  func.func @transform_3(%arg0: i32) -> (i32, i32) {
    %c0_i32 = arith.constant 0 : i32
    %c0_i32_0 = arith.constant 0 : i32
    %c0_i32_1 = arith.constant 0 : i32
    return %c0_i32, %c0_i32_0 : i32, i32
  }
  func.func @transform_4(%arg0: i32) -> (i32, i32) {
    %c0_i32 = arith.constant 0 : i32
    %c0_i32_0 = arith.constant 0 : i32
    %c0_i32_1 = arith.constant 0 : i32
    return %c0_i32, %c0_i32_0 : i32, i32
  }
  func.func @transform_5(%arg0: i32) -> (i32, i32, i32) {
    %c0_i32 = arith.constant 0 : i32
    %c0_i32_0 = arith.constant 0 : i32
    %c0_i32_1 = arith.constant 0 : i32
    return %arg0, %c0_i32, %c0_i32_0 : i32, i32, i32
  }
}

</mosaic_0001>

<llo_original>
// kernel: tpu_custom_call.1
$region0: #{tpu_custom_call.1}
  #allocation0 [shape = 'u32[]', space=smem, size = 0x4, offset = 0x4, fixed_abs, tag = 'smem constant byte address 0x4 - core index']
  #allocation1 [shape = 'u32[144,128]{1,0:T(1,128)}', space=vmem, size = 0x12000, scoped, tag = 'internal scratch']
  #allocation2 [shape = 'bf16[10,10,40]{2,1,0:T(8,128)(2,1)}', space=vmem, size = 0xa000, scoped, tag = 'scratch operand']
  #allocation3 [shape = 'bf16[10,10,160]{2,1,0:T(8,128)(2,1)}', space=vmem, size = 0x14000, scoped, tag = 'scratch operand']
  %s0 = inlined_call_operand.hbm [shape: bf16[2,8,8,32], index: 0, kind: input, shape index: {}]
  %s1 = inlined_call_operand.hbm [shape: bf16[9,40,128], index: 1, kind: input, shape index: {}]
  %s2 = inlined_call_operand.hbm [shape: bf16[9,160,128], index: 2, kind: input, shape index: {}]
  %s3 = inlined_call_operand.hbm [shape: bf16[32,128], index: 3, kind: input, shape index: {}]
  %s4 = inlined_call_operand.hbm [shape: f32[16,128], index: 4, kind: input, shape index: {}]
  %s5 = inlined_call_operand.hbm [shape: f32[2,64,128], index: 5, kind: output, shape index: {}]
  %s6 = sld [smem:[#allocation0]]
  $region73: #{tpu_custom_call.1} parent=0
    _
  %s8 = ssub.s32 1, %s6
  %s9 = scalar_select 0, %s8, %s6
  $region1: #{tpu_custom_call.1} parent=0
    #allocation4 [shape = 'u8[32768]{0}', space=vmem, size = 0x8000, scoped, tag = 'input window, operand 0']
    #allocation5 [shape = 's32[2]{0}', space=sflag, size = 0x8, scoped, tag = 'scoped memory for tpu_custom_call.1']
    #allocation6 [shape = 's32[2]{0}', space=sflag, size = 0x8, scoped, tag = 'scoped memory for tpu_custom_call.1']
    #allocation7 [shape = 'u8[92160]{0}', space=vmem, size = 0x16800, scoped, tag = 'input window, operand 1, single buffered']
    #allocation8 [shape = 's32[1]{0}', space=sflag, size = 0x4, scoped, tag = 'scoped memory for tpu_custom_call.1']
    #allocation9 [shape = 'u8[368640]{0}', space=vmem, size = 0x5a000, scoped, tag = 'input window, operand 2, single buffered']
    #allocation10 [shape = 'u8[8192]{0}', space=vmem, size = 0x2000, scoped, tag = 'input window, operand 3, single buffered']
    #allocation11 [shape = 's32[1]{0}', space=sflag, size = 0x4, scoped, tag = 'scoped memory for tpu_custom_call.1']
    #allocation12 [shape = 'u8[8192]{0}', space=vmem, size = 0x2000, scoped, tag = 'input window, operand 4, single buffered']
    #allocation13 [shape = 'u8[65536]{0}', space=vmem, size = 0x10000, scoped, tag = 'output window, operand 0']
    %10 = vsyncpa [#allocation5], 0
    %s11 = scalar_lea.sflag [#allocation5], 1
    %12 = vsyncpa %s11, 0
    %13 = vsyncpa [#allocation8], 0
    %14 = vsyncpa [#allocation11], 0
    %15 = vsyncpa [#allocation6], 0
    %s16 = scalar_lea.sflag [#allocation6], 1
    %17 = vsyncpa %s16, 0
    loop: start=0, step=1, limit=4
    $region2: #{tpu_custom_call.1} parent=1 // loop_pre_header
      _
    $region3: #{tpu_custom_call.1} parent=1 // loop_header
      %s19 = sphi 0, %s23
      %p20 = scmp.ge.s32.totalorder %s19, 4
      %s29 = sphi 0, %s31
      %s32 = sphi 0, %s29
      %s33 = sphi 0, %s32
      %s49 = sphi 0, %s33
      %s53 = sphi 0, %s53
      %s55 = sphi 0, %s53
      %s56 = sphi 0, %s55
      %s70 = sphi 0, %s56
      %s74 = sphi 0, %s74
      %s76 = sphi 0, %s74
      %s77 = sphi 0, %s76
      %s91 = sphi 0, %s77
      %s95 = sphi 0, %s95
      %s97 = sphi 0, %s95
      %s98 = sphi 0, %s97
      %s112 = sphi 0, %s98
      %s116 = sphi 0, %s116
      %s118 = sphi 0, %s116
      %s119 = sphi 0, %s118
      %s133 = sphi 0, %s119
      %s139 = sphi 0, %s141
      %s142 = sphi 0, %s139
      %s143 = sphi 0, %s142
      %s159 = sphi 0, %s143
    $region4: #{tpu_custom_call.1} parent=1 // loop_header_branch
      %22 = sbr.rel (%p20) target = $region8
    $region5: #{tpu_custom_call.1} parent=1 // loop_body
      %s24 = ssub.s32 %s19, 1
      %s25 = ssub.s32 %s19, 2
      %s26 = sadd.s32 %s19, 1
      %s27 = ssub.s32 %s19, %s26
      %p28 = scmp.eq.s32.totalorder %s27, 0
      %s30 = sadd.s32 %s29, 1
      %s31 = scalar_select %p28, %s29, %s30
      %p34 = pneg %p28
      %p35 = scmp.eq.s32.totalorder %s19, 1
      %p36 = por %p34, %p35
      %p37 = scmp.ne.s32.totalorder %s29, %s32
      %p38 = scmp.eq.s32.totalorder %s19, 0
      %p39 = por %p37, %p38
      %p40 = scmp.ne.s32.totalorder %s29, %s32
      %p41 = scmp.eq.s32.totalorder %s24, 1
      %p42 = por %p40, %p41
      %p43 = scmp.ne.s32.totalorder %s32, %s33
      %p44 = scmp.eq.s32.totalorder %s24, 0
      %p45 = por %p43, %p44
      %p46 = scmp.ne.s32.totalorder %s32, %s33
      %p47 = scmp.eq.s32.totalorder %s25, 1
      %p48 = por %p46, %p47
      %p50 = scmp.ne.s32.totalorder %s33, %s49
      %p51 = scmp.eq.s32.totalorder %s25, 0
      %p52 = por %p50, %p51
      %s54 = sadd.s32 %s53, 1
      %p57 = scmp.eq.s32.totalorder %s19, 1
      %p58 = scmp.ne.s32.totalorder %s53, %s55
      %p59 = scmp.eq.s32.totalorder %s19, 0
      %p60 = por %p58, %p59
      %p61 = scmp.ne.s32.totalorder %s53, %s55
      %p62 = scmp.eq.s32.totalorder %s24, 1
      %p63 = por %p61, %p62
      %p64 = scmp.ne.s32.totalorder %s55, %s56
      %p65 = scmp.eq.s32.totalorder %s24, 0
      %p66 = por %p64, %p65
      %p67 = scmp.ne.s32.totalorder %s55, %s56
      %p68 = scmp.eq.s32.totalorder %s25, 1
      %p69 = por %p67, %p68
      %p71 = scmp.ne.s32.totalorder %s56, %s70
      %p72 = scmp.eq.s32.totalorder %s25, 0
      %p73 = por %p71, %p72
      %s75 = sadd.s32 %s74, 1
      %p78 = scmp.eq.s32.totalorder %s19, 1
      %p79 = scmp.ne.s32.totalorder %s74, %s76
      %p80 = scmp.eq.s32.totalorder %s19, 0
      %p81 = por %p79, %p80
      %p82 = scmp.ne.s32.totalorder %s74, %s76
      %p83 = scmp.eq.s32.totalorder %s24, 1
      %p84 = por %p82, %p83
      %p85 = scmp.ne.s32.totalorder %s76, %s77
      %p86 = scmp.eq.s32.totalorder %s24, 0
      %p87 = por %p85, %p86
      %p88 = scmp.ne.s32.totalorder %s76, %s77
      %p89 = scmp.eq.s32.totalorder %s25, 1
      %p90 = por %p88, %p89
      %p92 = scmp.ne.s32.totalorder %s77, %s91
      %p93 = scmp.eq.s32.totalorder %s25, 0
      %p94 = por %p92, %p93
      %s96 = sadd.s32 %s95, 1
      %p99 = scmp.eq.s32.totalorder %s19, 1
      %p100 = scmp.ne.s32.totalorder %s95, %s97
      %p101 = scmp.eq.s32.totalorder %s19, 0
      %p102 = por %p100, %p101
      %p103 = scmp.ne.s32.totalorder %s95, %s97
      %p104 = scmp.eq.s32.totalorder %s24, 1
      %p105 = por %p103, %p104
      %p106 = scmp.ne.s32.totalorder %s97, %s98
      %p107 = scmp.eq.s32.totalorder %s24, 0
      %p108 = por %p106, %p107
      %p109 = scmp.ne.s32.totalorder %s97, %s98
      %p110 = scmp.eq.s32.totalorder %s25, 1
      %p111 = por %p109, %p110
      %p113 = scmp.ne.s32.totalorder %s98, %s112
      %p114 = scmp.eq.s32.totalorder %s25, 0
      %p115 = por %p113, %p114
      %s117 = sadd.s32 %s116, 1
      %p120 = scmp.eq.s32.totalorder %s19, 1
      %p121 = scmp.ne.s32.totalorder %s116, %s118
      %p122 = scmp.eq.s32.totalorder %s19, 0
      %p123 = por %p121, %p122
      %p124 = scmp.ne.s32.totalorder %s116, %s118
      %p125 = scmp.eq.s32.totalorder %s24, 1
      %p126 = por %p124, %p125
      %p127 = scmp.ne.s32.totalorder %s118, %s119
      %p128 = scmp.eq.s32.totalorder %s24, 0
      %p129 = por %p127, %p128
      %p130 = scmp.ne.s32.totalorder %s118, %s119
      %p131 = scmp.eq.s32.totalorder %s25, 1
      %p132 = por %p130, %p131
      %p134 = scmp.ne.s32.totalorder %s119, %s133
      %p135 = scmp.eq.s32.totalorder %s25, 0
      %p136 = por %p134, %p135
      %s137 = ssub.s32 %s19, %s26
      %p138 = scmp.eq.s32.totalorder %s137, 0
      %s140 = sadd.s32 %s139, 1
      %s141 = scalar_select %p138, %s139, %s140
      %p144 = pneg %p138
      %p145 = scmp.eq.s32.totalorder %s19, 1
      %p146 = por %p144, %p145
      %p147 = scmp.ne.s32.totalorder %s139, %s142
      %p148 = scmp.eq.s32.totalorder %s19, 0
      %p149 = por %p147, %p148
      %p150 = scmp.ne.s32.totalorder %s139, %s142
      %p151 = scmp.eq.s32.totalorder %s24, 1
      %p152 = por %p150, %p151
      %p153 = scmp.ne.s32.totalorder %s142, %s143
      %p154 = scmp.eq.s32.totalorder %s24, 0
      %p155 = por %p153, %p154
      %p156 = scmp.ne.s32.totalorder %s142, %s143
      %p157 = scmp.eq.s32.totalorder %s25, 1
      %p158 = por %p156, %p157
      %p160 = scmp.ne.s32.totalorder %s143, %s159
      %p161 = scmp.eq.s32.totalorder %s25, 0
      %p162 = por %p160, %p161
      %p163 = scmp.le.s32.totalorder 1, %s19
      %p164 = scmp.lt.s32.totalorder %s19, 3
      %p165 = pnand %p163, %p164
      %p166 = pneg %p165
      // Predicated region
      $region9: #{tpu_custom_call.1} parent=5 // pred_check
        _
      $region10: #{tpu_custom_call.1} parent=5 // pred_check_branch
        %168 = sbr.rel (%p165) target = $region12
      $region11: #{tpu_custom_call.1} parent=5 // pred_region
        %s169 = ssub.s32 %s19, 1
        // Predicated region
        $region13: #{tpu_custom_call.1} parent=11 // pred_check
          %p170 = pneg %p66
        $region14: #{tpu_custom_call.1} parent=11 // pred_check_branch
          %172 = sbr.rel (%p170) target = $region16
        $region15: #{tpu_custom_call.1} parent=11 // pred_region
          %s174 = ssub.s32 2880, 2880
          %175 = vsyncadd [#allocation8], %s174
          %s176 = sshll.u32 [#allocation7], 4
          %s177 = int_to_ptr.vmem [resolvable:$true] %s176
          %182 = dma.hbm_to_vmem [thread:$0]  %s1, 2880, %s177, [#allocation8], 64, 64, 4
        $region16: #{tpu_custom_call.1} parent=11 // pred_fallthru
          _
        // Predicated region
        $region17: #{tpu_custom_call.1} parent=11 // pred_check
          %p183 = pneg %p87
        $region18: #{tpu_custom_call.1} parent=11 // pred_check_branch
          %185 = sbr.rel (%p183) target = $region20
        $region19: #{tpu_custom_call.1} parent=11 // pred_region
          %s187 = ssub.s32 11520, 11520
          %188 = vsyncadd [#allocation8], %s187
          %s189 = sshll.u32 [#allocation9], 4
          %s190 = int_to_ptr.vmem [resolvable:$true] %s189
          %195 = dma.hbm_to_vmem [thread:$0]  %s2, 11520, %s190, [#allocation8], 64, 64, 4
        $region20: #{tpu_custom_call.1} parent=11 // pred_fallthru
          _
        // Predicated region
        $region21: #{tpu_custom_call.1} parent=11 // pred_check
          %p196 = pneg %p108
        $region22: #{tpu_custom_call.1} parent=11 // pred_check_branch
          %198 = sbr.rel (%p196) target = $region24
        $region23: #{tpu_custom_call.1} parent=11 // pred_region
          %s200 = ssub.s32 256, 256
          %201 = vsyncadd [#allocation11], %s200
          %s202 = sshll.u32 [#allocation10], 4
          %s203 = int_to_ptr.vmem [resolvable:$true] %s202
          %208 = dma.hbm_to_vmem [thread:$0]  %s3, 256, %s203, [#allocation11], 64, 64, 4
        $region24: #{tpu_custom_call.1} parent=11 // pred_fallthru
          _
        // Predicated region
        $region25: #{tpu_custom_call.1} parent=11 // pred_check
          %p209 = pneg %p129
        $region26: #{tpu_custom_call.1} parent=11 // pred_check_branch
          %211 = sbr.rel (%p209) target = $region28
        $region27: #{tpu_custom_call.1} parent=11 // pred_region
          %s213 = ssub.s32 256, 256
          %214 = vsyncadd [#allocation11], %s213
          %s215 = sshll.u32 [#allocation12], 4
          %s216 = int_to_ptr.vmem [resolvable:$true] %s215
          %221 = dma.hbm_to_vmem [thread:$0]  %s4, 256, %s216, [#allocation11], 128, 128, 8
        $region28: #{tpu_custom_call.1} parent=11 // pred_fallthru
          _
      $region12: #{tpu_custom_call.1} parent=5 // pred_fallthru
        _
      %p222 = scmp.lt.s32.totalorder %s19, 2
      // Predicated region
      $region29: #{tpu_custom_call.1} parent=5 // pred_check
        %p223 = pneg %p222
      $region30: #{tpu_custom_call.1} parent=5 // pred_check_branch
        %225 = sbr.rel (%p223) target = $region32
      $region31: #{tpu_custom_call.1} parent=5 // pred_region
        // Predicated region
        $region33: #{tpu_custom_call.1} parent=31 // pred_check
          %p226 = pneg %p39
        $region34: #{tpu_custom_call.1} parent=31 // pred_check_branch
          %228 = sbr.rel (%p226) target = $region36
        $region35: #{tpu_custom_call.1} parent=31 // pred_region
          %s229 = sand.u32 %s29, 1
          %s230 = scalar_lea.sflag [#allocation5], %s229
          %s231 = sand.u32 %s29, 1
          %s232 = smul.addr %s231, 32
          %s233 = scalar_lea.vmem [#allocation4], %s232
          %s235 = ssub.s32 512, 512
          %236 = vsyncadd %s230, %s235
          %s237 = smul.addr %s19, 8
          %s238 = smul.addr %s237, 64
          %s239 = scalar_lea.hbm %s0, %s238
          %s240 = sshll.u32 %s233, 4
          %s241 = int_to_ptr.vmem [resolvable:$true] %s240
          %246 = dma.hbm_to_vmem [thread:$0]  %s239, 512, %s241, %s230, 64, 64, 4
        $region36: #{tpu_custom_call.1} parent=31 // pred_fallthru
          _
      $region32: #{tpu_custom_call.1} parent=5 // pred_fallthru
        _
      %p247 = scmp.le.s32.totalorder 1, %s19
      %p248 = scmp.lt.s32.totalorder %s19, 3
      %p249 = pnand %p247, %p248
      %p250 = pneg %p249
      // Predicated region
      $region37: #{tpu_custom_call.1} parent=5 // pred_check
        _
      $region38: #{tpu_custom_call.1} parent=5 // pred_check_branch
        %252 = sbr.rel (%p249) target = $region40
      $region39: #{tpu_custom_call.1} parent=5 // pred_region
        %s253 = ssub.s32 %s19, 1
        %s254 = sand.u32 %s32, 1
        %s255 = scalar_lea.sflag [#allocation5], %s254
        %s256 = sand.u32 %s32, 1
        %s257 = smul.addr %s256, 32
        %s258 = scalar_lea.vmem [#allocation4], %s257
        // Predicated region
        $region41: #{tpu_custom_call.1} parent=39 // pred_check
          %p259 = pneg %p45
        $region42: #{tpu_custom_call.1} parent=39 // pred_check_branch
          %261 = sbr.rel (%p259) target = $region44
        $region43: #{tpu_custom_call.1} parent=39 // pred_region
          %262 = dma.done %s255, 512
        $region44: #{tpu_custom_call.1} parent=39 // pred_fallthru
          _
        // Predicated region
        $region45: #{tpu_custom_call.1} parent=39 // pred_check
          %p263 = pneg %p66
        $region46: #{tpu_custom_call.1} parent=39 // pred_check_branch
          %265 = sbr.rel (%p263) target = $region48
        $region47: #{tpu_custom_call.1} parent=39 // pred_region
          %266 = dma.done [#allocation8], 2880
        $region48: #{tpu_custom_call.1} parent=39 // pred_fallthru
          _
        // Predicated region
        $region49: #{tpu_custom_call.1} parent=39 // pred_check
          %p267 = pneg %p87
        $region50: #{tpu_custom_call.1} parent=39 // pred_check_branch
          %269 = sbr.rel (%p267) target = $region52
        $region51: #{tpu_custom_call.1} parent=39 // pred_region
          %270 = dma.done [#allocation8], 11520
        $region52: #{tpu_custom_call.1} parent=39 // pred_fallthru
          _
        // Predicated region
        $region53: #{tpu_custom_call.1} parent=39 // pred_check
          %p271 = pneg %p108
        $region54: #{tpu_custom_call.1} parent=39 // pred_check_branch
          %273 = sbr.rel (%p271) target = $region56
        $region55: #{tpu_custom_call.1} parent=39 // pred_region
          %274 = dma.done [#allocation11], 256
        $region56: #{tpu_custom_call.1} parent=39 // pred_fallthru
          _
        // Predicated region
        $region57: #{tpu_custom_call.1} parent=39 // pred_check
          %p275 = pneg %p129
        $region58: #{tpu_custom_call.1} parent=39 // pred_check_branch
          %277 = sbr.rel (%p275) target = $region60
        $region59: #{tpu_custom_call.1} parent=39 // pred_region
          %278 = dma.done [#allocation11], 256
        $region60: #{tpu_custom_call.1} parent=39 // pred_fallthru
          _
        %s279 = sand.u32 %s32, 1
        %s280 = scalar_lea.sflag [#allocation5], %s279
        %s281 = sand.u32 %s32, 1
        %s282 = smul.addr %s281, 32
        %s283 = scalar_lea.vmem [#allocation4], %s282
        %p284 = pneg %p45
        %p285 = pneg %p42
        %p286 = pneg %p66
        %p287 = pneg %p63
        %p288 = pneg %p87
        %p289 = pneg %p84
        %p290 = pneg %p108
        %p291 = pneg %p105
        %p292 = pneg %p129
        %p293 = pneg %p126
        %p294 = pneg %p155
        %p295 = pneg %p152
        %s296 = sand.u32 %s142, 1
        %s297 = scalar_lea.sflag [#allocation6], %s296
        %s298 = sand.u32 %s142, 1
        %s299 = smul.addr %s298, 64
        %s300 = scalar_lea.vmem [#allocation13], %s299
        %v302 = vld [vmem:[#allocation12] sm:$0xff]
        %v303 = vld [vmem:[#allocation12 + $0x8] sm:$0xff]
        %vm304 = vcmask 322560
        %305 = vst.msk [vmem:[#allocation2] sm:$0xf] %vm304, 0
        %vm306 = vcmask 319488
        %307 = vst.msk [vmem:[#allocation2 + $0x4] sm:$0x1] %vm306, 0
        %308 = vst.msk [vmem:[#allocation2 + $0x8] sm:$0xf] %vm304, 0
        %309 = vst.msk [vmem:[#allocation2 + $0xc] sm:$0x1] %vm306, 0
        %310 = vst.msk [vmem:[#allocation2 + $0x10] sm:$0xf] %vm304, 0
        %311 = vst.msk [vmem:[#allocation2 + $0x14] sm:$0x1] %vm306, 0
        %312 = vst.msk [vmem:[#allocation2 + $0x18] sm:$0xf] %vm304, 0
        %313 = vst.msk [vmem:[#allocation2 + $0x1c] sm:$0x1] %vm306, 0
        %314 = vst.msk [vmem:[#allocation2 + $0x20] sm:$0xf] %vm304, 0
        %315 = vst.msk [vmem:[#allocation2 + $0x24] sm:$0x1] %vm306, 0
        %316 = vst.msk [vmem:[#allocation2 + $0x28] sm:$0xf] %vm304, 0
        %317 = vst.msk [vmem:[#allocation2 + $0x2c] sm:$0x1] %vm306, 0
        %318 = vst.msk [vmem:[#allocation2 + $0x30] sm:$0xf] %vm304, 0
        %319 = vst.msk [vmem:[#allocation2 + $0x34] sm:$0x1] %vm306, 0
        %320 = vst.msk [vmem:[#allocation2 + $0x38] sm:$0xf] %vm304, 0
        %321 = vst.msk [vmem:[#allocation2 + $0x3c] sm:$0x1] %vm306, 0
        %322 = vst.msk [vmem:[#allocation2 + $0x40] sm:$0xf] %vm304, 0
        %323 = vst.msk [vmem:[#allocation2 + $0x44] sm:$0x1] %vm306, 0
        %324 = vst.msk [vmem:[#allocation2 + $0x48] sm:$0xf] %vm304, 0
        %325 = vst.msk [vmem:[#allocation2 + $0x4c] sm:$0x1] %vm306, 0
        %vm326 = vcmask 1043456
        %vm327 = vcmask 261124
        %vm328 = vmor %vm327, %vm326
        %329 = vst.msk [vmem:[#allocation3] sm:$0xff] %vm328, 0
        %vm330 = vcmask 1040384
        %vm331 = vcmask 258052
        %vm332 = vmor %vm331, %vm330
        %333 = vst.msk [vmem:[#allocation3 + $0x8] sm:$0x11] %vm332, 0
        %334 = vst.msk [vmem:[#allocation3 + $0x10] sm:$0xff] %vm328, 0
        %335 = vst.msk [vmem:[#allocation3 + $0x18] sm:$0x11] %vm332, 0
        %336 = vst.msk [vmem:[#allocation3 + $0x20] sm:$0xff] %vm328, 0
        %337 = vst.msk [vmem:[#allocation3 + $0x28] sm:$0x11] %vm332, 0
        %338 = vst.msk [vmem:[#allocation3 + $0x30] sm:$0xff] %vm328, 0
        %339 = vst.msk [vmem:[#allocation3 + $0x38] sm:$0x11] %vm332, 0
        %340 = vst.msk [vmem:[#allocation3 + $0x40] sm:$0xff] %vm328, 0
        %341 = vst.msk [vmem:[#allocation3 + $0x48] sm:$0x11] %vm332, 0
        %342 = vst.msk [vmem:[#allocation3 + $0x50] sm:$0xff] %vm328, 0
        %343 = vst.msk [vmem:[#allocation3 + $0x58] sm:$0x11] %vm332, 0
        %344 = vst.msk [vmem:[#allocation3 + $0x60] sm:$0xff] %vm328, 0
        %345 = vst.msk [vmem:[#allocation3 + $0x68] sm:$0x11] %vm332, 0
        %346 = vst.msk [vmem:[#allocation3 + $0x70] sm:$0xff] %vm328, 0
        %347 = vst.msk [vmem:[#allocation3 + $0x78] sm:$0x11] %vm332, 0
        %348 = vst.msk [vmem:[#allocation3 + $0x80] sm:$0xff] %vm328, 0
        %349 = vst.msk [vmem:[#allocation3 + $0x88] sm:$0x11] %vm332, 0
        %350 = vst.msk [vmem:[#allocation3 + $0x90] sm:$0xff] %vm328, 0
        %351 = vst.msk [vmem:[#allocation3 + $0x98] sm:$0x11] %vm332, 0
        %v352 = vld [vmem:[%s258] sm:$0xf]
        %v353 = vld [vmem:[%s258 + $0x4] sm:$0xf]
        %v354 = vld [vmem:[%s258 + $0x8] sm:$0xf]
        %v355 = vld [vmem:[%s258 + $0xc] sm:$0xf]
        %v356 = vld [vmem:[%s258 + $0x10] sm:$0xf]
        %v357 = vld [vmem:[%s258 + $0x14] sm:$0xf]
        %v358 = vld [vmem:[%s258 + $0x18] sm:$0xf]
        %v359 = vld [vmem:[%s258 + $0x1c] sm:$0xf]
        %v361 = vshrl.u32 %v352, 16
        %v363 = vrot.slane %v361, 7
        %v364 = vshll.u32 %v352, 16
        %v366 = vor.u32 %v363, %v364
        %v367 = vrot.slane %v363, 4
        %v369 = vshrl.u32 %v353, 16
        %v371 = vrot.slane %v369, 7
        %v372 = vshll.u32 %v353, 16
        %v374 = vor.u32 %v371, %v372
        %v375 = vrot.slane %v371, 4
        %v377 = vshrl.u32 %v354, 16
        %v379 = vrot.slane %v377, 7
        %v380 = vshll.u32 %v354, 16
        %v382 = vor.u32 %v379, %v380
        %v383 = vrot.slane %v379, 4
        %v385 = vshrl.u32 %v355, 16
        %v387 = vrot.slane %v385, 7
        %v388 = vshll.u32 %v355, 16
        %v390 = vor.u32 %v387, %v388
        %v391 = vrot.slane %v387, 4
        %v393 = vshrl.u32 %v356, 16
        %v395 = vrot.slane %v393, 7
        %v396 = vshll.u32 %v356, 16
        %v398 = vor.u32 %v395, %v396
        %v399 = vrot.slane %v395, 4
        %v401 = vshrl.u32 %v357, 16
        %v403 = vrot.slane %v401, 7
        %v404 = vshll.u32 %v357, 16
        %v406 = vor.u32 %v403, %v404
        %v407 = vrot.slane %v403, 4
        %v409 = vshrl.u32 %v358, 16
        %v411 = vrot.slane %v409, 7
        %v412 = vshll.u32 %v358, 16
        %v414 = vor.u32 %v411, %v412
        %v415 = vrot.slane %v411, 4
        %v417 = vshrl.u32 %v359, 16
        %v419 = vrot.slane %v417, 7
        %v420 = vshll.u32 %v359, 16
        %v422 = vor.u32 %v419, %v420
        %v423 = vrot.slane %v419, 4
        %424 = vrot.lane.b32.xlu0 %v366, 4
        %v425 = vpop.permute.xlu0 %424
        %426 = vrot.lane.b32.xlu0 %v367, 4
        %v427 = vpop.permute.xlu0 %426
        %428 = vrot.lane.b32.xlu0 %v374, 4
        %v429 = vpop.permute.xlu0 %428
        %430 = vrot.lane.b32.xlu0 %v375, 4
        %v431 = vpop.permute.xlu0 %430
        %432 = vrot.lane.b32.xlu0 %v382, 4
        %v433 = vpop.permute.xlu0 %432
        %434 = vrot.lane.b32.xlu0 %v383, 4
        %v435 = vpop.permute.xlu0 %434
        %436 = vrot.lane.b32.xlu0 %v390, 4
        %v437 = vpop.permute.xlu0 %436
        %438 = vrot.lane.b32.xlu0 %v391, 4
        %v439 = vpop.permute.xlu0 %438
        %440 = vrot.lane.b32.xlu0 %v398, 4
        %v441 = vpop.permute.xlu0 %440
        %442 = vrot.lane.b32.xlu0 %v399, 4
        %v443 = vpop.permute.xlu0 %442
        %444 = vrot.lane.b32.xlu0 %v406, 4
        %v445 = vpop.permute.xlu0 %444
        %446 = vrot.lane.b32.xlu0 %v407, 4
        %v447 = vpop.permute.xlu0 %446
        %448 = vrot.lane.b32.xlu0 %v414, 4
        %v449 = vpop.permute.xlu0 %448
        %450 = vrot.lane.b32.xlu0 %v415, 4
        %v451 = vpop.permute.xlu0 %450
        %452 = vrot.lane.b32.xlu0 %v422, 4
        %v453 = vpop.permute.xlu0 %452
        %454 = vrot.lane.b32.xlu0 %v423, 4
        %v455 = vpop.permute.xlu0 %454
        %s472 = scalar_lea.vmem [#allocation2], 8
        %vm473 = vcmask 289824
        %vm474 = vsmask.f32 7938
        %vm475 = vmand %vm473, %vm474
        %v476 = vld [vmem:[%s472] sm:$0xf]
        %v477 = vsel %vm475, %v425, %v476
        %478 = vst [vmem:[%s472] sm:$0xf] %v477
        %vm479 = vcmask 286752
        %vm480 = vsmask.f32 256
        %vm481 = vmand %vm479, %vm480
        %v482 = vld [vmem:[%s472 + $0x4] sm:$0x1]
        %v483 = vsel %vm481, %v427, %v482
        %484 = vst [vmem:[%s472 + $0x4] sm:$0x1] %v483
        %v485 = vld [vmem:[%s472 + $0x8] sm:$0xf]
        %v486 = vsel %vm475, %v429, %v485
        %487 = vst [vmem:[%s472 + $0x8] sm:$0xf] %v486
        %v488 = vld [vmem:[%s472 + $0xc] sm:$0x1]
        %v489 = vsel %vm481, %v431, %v488
        %490 = vst [vmem:[%s472 + $0xc] sm:$0x1] %v489
        %v491 = vld [vmem:[%s472 + $0x10] sm:$0xf]
        %v492 = vsel %vm475, %v433, %v491
        %493 = vst [vmem:[%s472 + $0x10] sm:$0xf] %v492
        %v494 = vld [vmem:[%s472 + $0x14] sm:$0x1]
        %v495 = vsel %vm481, %v435, %v494
        %496 = vst [vmem:[%s472 + $0x14] sm:$0x1] %v495
        %v497 = vld [vmem:[%s472 + $0x18] sm:$0xf]
        %v498 = vsel %vm475, %v437, %v497
        %499 = vst [vmem:[%s472 + $0x18] sm:$0xf] %v498
        %v500 = vld [vmem:[%s472 + $0x1c] sm:$0x1]
        %v501 = vsel %vm481, %v439, %v500
        %502 = vst [vmem:[%s472 + $0x1c] sm:$0x1] %v501
        %v503 = vld [vmem:[%s472 + $0x20] sm:$0xf]
        %v504 = vsel %vm475, %v441, %v503
        %505 = vst [vmem:[%s472 + $0x20] sm:$0xf] %v504
        %v506 = vld [vmem:[%s472 + $0x24] sm:$0x1]
        %v507 = vsel %vm481, %v443, %v506
        %508 = vst [vmem:[%s472 + $0x24] sm:$0x1] %v507
        %v509 = vld [vmem:[%s472 + $0x28] sm:$0xf]
        %v510 = vsel %vm475, %v445, %v509
        %511 = vst [vmem:[%s472 + $0x28] sm:$0xf] %v510
        %v512 = vld [vmem:[%s472 + $0x2c] sm:$0x1]
        %v513 = vsel %vm481, %v447, %v512
        %514 = vst [vmem:[%s472 + $0x2c] sm:$0x1] %v513
        %v515 = vld [vmem:[%s472 + $0x30] sm:$0xf]
        %v516 = vsel %vm475, %v449, %v515
        %517 = vst [vmem:[%s472 + $0x30] sm:$0xf] %v516
        %v518 = vld [vmem:[%s472 + $0x34] sm:$0x1]
        %v519 = vsel %vm481, %v451, %v518
        %520 = vst [vmem:[%s472 + $0x34] sm:$0x1] %v519
        %v521 = vld [vmem:[%s472 + $0x38] sm:$0xf]
        %v522 = vsel %vm475, %v453, %v521
        %523 = vst [vmem:[%s472 + $0x38] sm:$0xf] %v522
        %v524 = vld [vmem:[%s472 + $0x3c] sm:$0x1]
        %v525 = vsel %vm481, %v455, %v524
        %526 = vst [vmem:[%s472 + $0x3c] sm:$0x1] %v525
        %v527 = vld [vmem:[#allocation2] sm:$0xf]
        %v528 = vld [vmem:[#allocation2 + $0x8] sm:$0xf]
        %v529 = vld [vmem:[#allocation2 + $0x10] sm:$0xf]
        %v530 = vld [vmem:[#allocation2 + $0x18] sm:$0xf]
        %v531 = vld [vmem:[#allocation2 + $0x20] sm:$0xf]
        %v532 = vld [vmem:[#allocation2 + $0x28] sm:$0xf]
        %v533 = vld [vmem:[#allocation2 + $0x30] sm:$0xf]
        %v534 = vld [vmem:[#allocation2 + $0x38] sm:$0xf]
        %v535 = vld [vmem:[#allocation7] sm:$0xf]
        %v536 = vld [vmem:[#allocation7 + $0x4] sm:$0xf]
        %v537 = vld [vmem:[#allocation7 + $0x8] sm:$0xf]
        %v538 = vld [vmem:[#allocation7 + $0xc] sm:$0xf]
        %v539 = vld [vmem:[#allocation7 + $0x10] sm:$0xf]
        %v540 = vld [vmem:[#allocation2 + $0x4] sm:$0x1]
        %v541 = vld [vmem:[#allocation2 + $0xc] sm:$0x1]
        %v542 = vld [vmem:[#allocation2 + $0x14] sm:$0x1]
        %v543 = vld [vmem:[#allocation2 + $0x1c] sm:$0x1]
        %v544 = vld [vmem:[#allocation2 + $0x24] sm:$0x1]
        %v545 = vld [vmem:[#allocation2 + $0x2c] sm:$0x1]
        %v546 = vld [vmem:[#allocation2 + $0x34] sm:$0x1]
        %v547 = vld [vmem:[#allocation2 + $0x3c] sm:$0x1]
        %vm548 = vsmask.f32 3328
        %vm549 = vsmask.f32 7440
        %vm550 = vmor %vm548, %vm549
        %v552 = vshrl.u32 %v527, 16
        %v554 = vrot.slane %v552, 4
        %v555 = vshll.u32 %v527, 16
        %v557 = vrot.slane %v555, 5
        %v558 = vor.u32 %v554, %v557
        %v559 = vrot.slane %v558, 4
        %v561 = vshll.u32 %v540, 16
        %v563 = vrot.slane %v561, 5
        %v564 = vsel %vm550, %v559, %v563
        %v566 = vshrl.u32 %v528, 16
        %v568 = vrot.slane %v566, 4
        %v569 = vshll.u32 %v528, 16
        %v571 = vrot.slane %v569, 5
        %v572 = vor.u32 %v568, %v571
        %v573 = vrot.slane %v572, 4
        %v575 = vshll.u32 %v541, 16
        %v577 = vrot.slane %v575, 5
        %v578 = vsel %vm550, %v573, %v577
        %v580 = vshrl.u32 %v529, 16
        %v582 = vrot.slane %v580, 4
        %v583 = vshll.u32 %v529, 16
        %v585 = vrot.slane %v583, 5
        %v586 = vor.u32 %v582, %v585
        %v587 = vrot.slane %v586, 4
        %v589 = vshll.u32 %v542, 16
        %v591 = vrot.slane %v589, 5
        %v592 = vsel %vm550, %v587, %v591
        %v594 = vshrl.u32 %v530, 16
        %v596 = vrot.slane %v594, 4
        %v597 = vshll.u32 %v530, 16
        %v599 = vrot.slane %v597, 5
        %v600 = vor.u32 %v596, %v599
        %v601 = vrot.slane %v600, 4
        %v603 = vshll.u32 %v543, 16
        %v605 = vrot.slane %v603, 5
        %v606 = vsel %vm550, %v601, %v605
        %v608 = vshrl.u32 %v531, 16
        %v610 = vrot.slane %v608, 4
        %v611 = vshll.u32 %v531, 16
        %v613 = vrot.slane %v611, 5
        %v614 = vor.u32 %v610, %v613
        %v615 = vrot.slane %v614, 4
        %v617 = vshll.u32 %v544, 16
        %v619 = vrot.slane %v617, 5
        %v620 = vsel %vm550, %v615, %v619
        %v622 = vshrl.u32 %v532, 16
        %v624 = vrot.slane %v622, 4
        %v625 = vshll.u32 %v532, 16
        %v627 = vrot.slane %v625, 5
        %v628 = vor.u32 %v624, %v627
        %v629 = vrot.slane %v628, 4
        %v631 = vshll.u32 %v545, 16
        %v633 = vrot.slane %v631, 5
        %v634 = vsel %vm550, %v629, %v633
        %v636 = vshrl.u32 %v533, 16
        %v638 = vrot.slane %v636, 4
        %v639 = vshll.u32 %v533, 16
        %v641 = vrot.slane %v639, 5
        %v642 = vor.u32 %v638, %v641
        %v643 = vrot.slane %v642, 4
        %v645 = vshll.u32 %v546, 16
        %v647 = vrot.slane %v645, 5
        %v648 = vsel %vm550, %v643, %v647
        %v650 = vshrl.u32 %v534, 16
        %v652 = vrot.slane %v650, 4
        %v653 = vshll.u32 %v534, 16
        %v655 = vrot.slane %v653, 5
        %v656 = vor.u32 %v652, %v655
        %v657 = vrot.slane %v656, 4
        %v659 = vshll.u32 %v547, 16
        %v661 = vrot.slane %v659, 5
        %v662 = vsel %vm550, %v657, %v661
        %s663 = scalar_lea.vmem [#allocation7], 20
        %v664 = vld [vmem:[%s663] sm:$0xf]
        %v665 = vld [vmem:[%s663 + $0x4] sm:$0xf]
        %v666 = vld [vmem:[%s663 + $0x8] sm:$0xf]
        %v667 = vld [vmem:[%s663 + $0xc] sm:$0xf]
        %v668 = vld [vmem:[%s663 + $0x10] sm:$0xf]
        %v669 = vunpack.c.l.b16 %v564
        %v670 = vunpack.c.l.b16 %v578
        %v671 = vunpack.c.l.b16 %v592
        %v672 = vunpack.c.l.b16 %v606
        %v673 = vunpack.c.l.b16 %v620
        %v674 = vunpack.c.l.b16 %v634
        %v675 = vunpack.c.l.b16 %v648
        %v676 = vunpack.c.l.b16 %v662
        %v677 = vpack.c.b16 %v670, %v669
        %v678 = vpack.c.b16 %v672, %v671
        %v679 = vpack.c.b16 %v674, %v673
        %v680 = vpack.c.b16 %v676, %v675
        %v686 = vunpack.c.l.b16 %v664
        %v687 = vunpack.c.l.b16 %v665
        %v688 = vunpack.c.l.b16 %v666
        %v689 = vunpack.c.l.b16 %v667
        %v690 = vunpack.c.l.b16 %v668
        %v691 = vpack.c.b16 %v687, %v686
        %v692 = vpack.c.b16 %v689, %v688
        %v693 = vpack.c.b16 %v690, %v690
        %vm696 = vcmask 326656
        %v698 = vsel %vm696, %v677, 0
        %v701 = vsel %vm696, %v678, 0
        %v704 = vsel %vm696, %v679, 0
        %v707 = vsel %vm696, %v680, 0
        %v710 = vsel %vm326, %v693, 0
        %712 = vmatprep.subr.bf16.mxu0 0
        %713 = vmatpush1.bf16.msra.mxu0 %v691
        %714 = vmatprep.subr.bf16.mxu0 0
        %715 = vmatpush1.bf16.msra.mxu0 %v692
        %716 = vmatprep.subr.bf16.mxu0 0
        %717 = vmatpush1.bf16.msra.mxu0 %v710
        %718 = vmatprep.subr.bf16.mxu0 0
        %719 = vmatpush1.bf16.msra.mxu0 0
        %720 = vmatprep.subr.bf16.mxu0 0
        %721 = vmatpush1.bf16.msra.mxu0 0
        %722 = vmatprep.subr.bf16.mxu0 0
        %723 = vmatpush1.bf16.msra.mxu0 0
        %724 = vmatprep.subr.bf16.mxu0 0
        %725 = vmatpush1.bf16.msra.mxu0 0
        %726 = vmatprep.subr.bf16.mxu0 0
        %727 = vmatpush1.bf16.msra.mxu0 0
        %728 = vmatprep.subr.bf16.mxu0 0
        %729 = vmatpush1.bf16.msra.mxu0 0
        %730 = vmatprep.subr.bf16.mxu0 0
        %731 = vmatpush1.bf16.msra.mxu0 0
        %732 = vmatprep.subr.bf16.mxu0 0
        %733 = vmatpush1.bf16.msra.mxu0 0
        %734 = vmatprep.subr.bf16.mxu0 0
        %735 = vmatpush1.bf16.msra.mxu0 0
        %736 = vmatprep.subr.bf16.mxu0 0
        %737 = vmatpush1.bf16.msra.mxu0 0
        %738 = vmatprep.subr.bf16.mxu0 0
        %739 = vmatpush1.bf16.msra.mxu0 0
        %740 = vmatprep.subr.bf16.mxu0 0
        %741 = vmatpush1.bf16.msra.mxu0 0
        %742 = vmatprep.subr.bf16.mxu0 0
        %743 = vmatpush1.bf16.msra.mxu0 0
        %744 = vmatprep.mubr.bf16.mxu0 0
        %745 = vmatmul.mubr.bf16.gmra.mrb[0].mxu0 %v698
        %v746 = vpop.f32.mrb[0].mxu0
        %v747 = vadd.f32 0.0, %v746
        %v748 = vpop.f32.mrb[0].mxu0
        %v749 = vpop.f32.mrb[0].mxu0
        %v750 = vadd.f32 0.0, %v749
        %v751 = vpop.f32.mrb[0].mxu0
        %752 = vmatprep.mubr.bf16.mxu0 0
        %753 = vmatmul.mubr.bf16.gmra.mrb[0].mxu0 %v701
        %v754 = vpop.f32.mrb[0].mxu0
        %v755 = vadd.f32 0.0, %v754
        %v756 = vpop.f32.mrb[0].mxu0
        %v757 = vpop.f32.mrb[0].mxu0
        %v758 = vadd.f32 0.0, %v757
        %v759 = vpop.f32.mrb[0].mxu0
        %760 = vmatprep.mubr.bf16.mxu0 0
        %761 = vmatmul.mubr.bf16.gmra.mrb[0].mxu0 %v704
        %v762 = vpop.f32.mrb[0].mxu0
        %v763 = vadd.f32 0.0, %v762
        %v764 = vpop.f32.mrb[0].mxu0
        %v765 = vpop.f32.mrb[0].mxu0
        %v766 = vadd.f32 0.0, %v765
        %v767 = vpop.f32.mrb[0].mxu0
        %768 = vmatprep.mubr.bf16.mxu0 0
        %769 = vmatmul.mubr.bf16.gmra.mrb[0].mxu0 %v707
        %v770 = vpop.f32.mrb[0].mxu0
        %v771 = vadd.f32 0.0, %v770
        %v772 = vpop.f32.mrb[0].mxu0
        %v773 = vpop.f32.mrb[0].mxu0
        %v774 = vadd.f32 0.0, %v773
        %v775 = vpop.f32.mrb[0].mxu0
        %776 = vdwg.mxu0
        %v785 = vunpack.c.l.b16 %v527
        %v786 = vunpack.c.l.b16 %v528
        %v787 = vunpack.c.l.b16 %v529
        %v788 = vunpack.c.l.b16 %v530
        %v789 = vunpack.c.l.b16 %v531
        %v790 = vunpack.c.l.b16 %v532
        %v791 = vunpack.c.l.b16 %v533
        %v792 = vunpack.c.l.b16 %v534
        %v793 = vpack.c.b16 %v786, %v785
        %v794 = vpack.c.b16 %v788, %v787
        %v795 = vpack.c.b16 %v790, %v789
        %v796 = vpack.c.b16 %v792, %v791
        %v802 = vunpack.c.l.b16 %v535
        %v803 = vunpack.c.l.b16 %v536
        %v804 = vunpack.c.l.b16 %v537
        %v805 = vunpack.c.l.b16 %v538
        %v806 = vunpack.c.l.b16 %v539
        %v807 = vpack.c.b16 %v803, %v802
        %v808 = vpack.c.b16 %v805, %v804
        %v809 = vpack.c.b16 %v806, %v806
        %v813 = vsel %vm696, %v793, 0
        %v816 = vsel %vm696, %v794, 0
        %v819 = vsel %vm696, %v795, 0
        %v822 = vsel %vm696, %v796, 0
        %v825 = vsel %vm326, %v809, 0
        %827 = vmatprep.subr.bf16.mxu0 0
        %828 = vmatpush1.bf16.msra.mxu0 %v807
        %829 = vmatprep.subr.bf16.mxu0 0
        %830 = vmatpush1.bf16.msra.mxu0 %v808
        %831 = vmatprep.subr.bf16.mxu0 0
        %832 = vmatpush1.bf16.msra.mxu0 %v825
        %833 = vmatprep.subr.bf16.mxu0 0
        %834 = vmatpush1.bf16.msra.mxu0 0
        %835 = vmatprep.subr.bf16.mxu0 0
        %836 = vmatpush1.bf16.msra.mxu0 0
        %837 = vmatprep.subr.bf16.mxu0 0
        %838 = vmatpush1.bf16.msra.mxu0 0
        %839 = vmatprep.subr.bf16.mxu0 0
        %840 = vmatpush1.bf16.msra.mxu0 0
        %841 = vmatprep.subr.bf16.mxu0 0
        %842 = vmatpush1.bf16.msra.mxu0 0
        %843 = vmatprep.subr.bf16.mxu0 0
        %844 = vmatpush1.bf16.msra.mxu0 0
        %845 = vmatprep.subr.bf16.mxu0 0
        %846 = vmatpush1.bf16.msra.mxu0 0
        %847 = vmatprep.subr.bf16.mxu0 0
        %848 = vmatpush1.bf16.msra.mxu0 0
        %849 = vmatprep.subr.bf16.mxu0 0
        %850 = vmatpush1.bf16.msra.mxu0 0
        %851 = vmatprep.subr.bf16.mxu0 0
        %852 = vmatpush1.bf16.msra.mxu0 0
        %853 = vmatprep.subr.bf16.mxu0 0
        %854 = vmatpush1.bf16.msra.mxu0 0
        %855 = vmatprep.subr.bf16.mxu0 0
        %856 = vmatpush1.bf16.msra.mxu0 0
        %857 = vmatprep.subr.bf16.mxu0 0
        %858 = vmatpush1.bf16.msra.mxu0 0
        %859 = vmatprep.mubr.bf16.mxu0 0
        %860 = vmatmul.mubr.bf16.gmra.mrb[0].mxu0 %v813
        %v861 = vpop.f32.mrb[0].mxu0
        %v862 = vadd.f32 %v747, %v861
        %v863 = vpop.f32.mrb[0].mxu0
        %v864 = vpop.f32.mrb[0].mxu0
        %v865 = vadd.f32 %v750, %v864
        %v866 = vpop.f32.mrb[0].mxu0
        %867 = vmatprep.mubr.bf16.mxu0 0
        %868 = vmatmul.mubr.bf16.gmra.mrb[0].mxu0 %v816
        %v869 = vpop.f32.mrb[0].mxu0
        %v870 = vadd.f32 %v755, %v869
        %v871 = vpop.f32.mrb[0].mxu0
        %v872 = vpop.f32.mrb[0].mxu0
        %v873 = vadd.f32 %v758, %v872
        %v874 = vpop.f32.mrb[0].mxu0
        %875 = vmatprep.mubr.bf16.mxu0 0
        %876 = vmatmul.mubr.bf16.gmra.mrb[0].mxu0 %v819
        %v877 = vpop.f32.mrb[0].mxu0
        %v878 = vadd.f32 %v763, %v877
        %v879 = vpop.f32.mrb[0].mxu0
        %v880 = vpop.f32.mrb[0].mxu0
        %v881 = vadd.f32 %v766, %v880
        %v882 = vpop.f32.mrb[0].mxu0
        %883 = vmatprep.mubr.bf16.mxu0 0
        %884 = vmatmul.mubr.bf16.gmra.mrb[0].mxu0 %v822
        %v885 = vpop.f32.mrb[0].mxu0
        %v886 = vadd.f32 %v771, %v885
        %v887 = vpop.f32.mrb[0].mxu0
        %v888 = vpop.f32.mrb[0].mxu0
        %v889 = vadd.f32 %v774, %v888
        %v890 = vpop.f32.mrb[0].mxu0
        %891 = vdwg.mxu0
        %v892 = vld [vmem:[#allocation2] sm:$0xe]
        %v893 = vld [vmem:[#allocation2 + $0x8] sm:$0xe]
        %v894 = vld [vmem:[#allocation2 + $0x10] sm:$0xe]
        %v895 = vld [vmem:[#allocation2 + $0x18] sm:$0xe]
        %v896 = vld [vmem:[#allocation2 + $0x20] sm:$0xe]
        %v897 = vld [vmem:[#allocation2 + $0x28] sm:$0xe]
        %v898 = vld [vmem:[#allocation2 + $0x30] sm:$0xe]
        %v899 = vld [vmem:[#allocation2 + $0x38] sm:$0xe]
        %vm916 = vcmask 1042432
        %vm917 = vcmask 1046532
        %vm918 = vmor %vm916, %vm917
        %v919 = vrot.slane %v892, 5
        %v920 = vrot.slane %v919, 4
        %v921 = vrot.slane %v540, 5
        %v922 = vsel %vm918, %v920, %v921
        %v923 = vrot.slane %v893, 5
        %v924 = vrot.slane %v923, 4
        %v925 = vrot.slane %v541, 5
        %v926 = vsel %vm918, %v924, %v925
        %v927 = vrot.slane %v894, 5
        %v928 = vrot.slane %v927, 4
        %v929 = vrot.slane %v542, 5
        %v930 = vsel %vm918, %v928, %v929
        %v931 = vrot.slane %v895, 5
        %v932 = vrot.slane %v931, 4
        %v933 = vrot.slane %v543, 5
        %v934 = vsel %vm918, %v932, %v933
        %v935 = vrot.slane %v896, 5
        %v936 = vrot.slane %v935, 4
        %v937 = vrot.slane %v544, 5
        %v938 = vsel %vm918, %v936, %v937
        %v939 = vrot.slane %v897, 5
        %v940 = vrot.slane %v939, 4
        %v941 = vrot.slane %v545, 5
        %v942 = vsel %vm918, %v940, %v941
        %v943 = vrot.slane %v898, 5
        %v944 = vrot.slane %v943, 4
        %v945 = vrot.slane %v546, 5
        %v946 = vsel %vm918, %v944, %v945
        %v947 = vrot.slane %v899, 5
        %v948 = vrot.slane %v947, 4
        %v949 = vrot.slane %v547, 5
        %v950 = vsel %vm918, %v948, %v949
        %s951 = scalar_lea.vmem [#allocation7], 40
        %v952 = vld [vmem:[%s951] sm:$0xf]
        %v953 = vld [vmem:[%s951 + $0x4] sm:$0xf]
        %v954 = vld [vmem:[%s951 + $0x8] sm:$0xf]
        %v955 = vld [vmem:[%s951 + $0xc] sm:$0xf]
        %v956 = vld [vmem:[%s951 + $0x10] sm:$0xf]
        %v957 = vunpack.c.l.b16 %v922
        %v958 = vunpack.c.l.b16 %v926
        %v959 = vunpack.c.l.b16 %v930
        %v960 = vunpack.c.l.b16 %v934
        %v961 = vunpack.c.l.b16 %v938
        %v962 = vunpack.c.l.b16 %v942
        %v963 = vunpack.c.l.b16 %v946
        %v964 = vunpack.c.l.b16 %v950
        %v965 = vpack.c.b16 %v958, %v957
        %v966 = vpack.c.b16 %v960, %v959
        %v967 = vpack.c.b16 %v962, %v961
        %v968 = vpack.c.b16 %v964, %v963
        %v974 = vunpack.c.l.b16 %v952
        %v975 = vunpack.c.l.b16 %v953
        %v976 = vunpack.c.l.b16 %v954
        %v977 = vunpack.c.l.b16 %v955
        %v978 = vunpack.c.l.b16 %v956
        %v979 = vpack.c.b16 %v975, %v974
        %v980 = vpack.c.b16 %v977, %v976
        %v981 = vpack.c.b16 %v978, %v978
        %v985 = vsel %vm696, %v965, 0
        %v988 = vsel %vm696, %v966, 0
        %v991 = vsel %vm696, %v967, 0
        %v994 = vsel %vm696, %v968, 0
        %v997 = vsel %vm326, %v981, 0
        %999 = vmatprep.subr.bf16.mxu0 0
        %1000 = vmatpush1.bf16.msra.mxu0 %v979
        %1001 = vmatprep.subr.bf16.mxu0 0
        %1002 = vmatpush1.bf16.msra.mxu0 %v980
        %1003 = vmatprep.subr.bf16.mxu0 0
        %1004 = vmatpush1.bf16.msra.mxu0 %v997
        %1005 = vmatprep.subr.bf16.mxu0 0
        %1006 = vmatpush1.bf16.msra.mxu0 0
        %1007 = vmatprep.subr.bf16.mxu0 0
        %1008 = vmatpush1.bf16.msra.mxu0 0
        %1009 = vmatprep.subr.bf16.mxu0 0
        %1010 = vmatpush1.bf16.msra.mxu0 0
        %1011 = vmatprep.subr.bf16.mxu0 0
        %1012 = vmatpush1.bf16.msra.mxu0 0
        %1013 = vmatprep.subr.bf16.mxu0 0
        %1014 = vmatpush1.bf16.msra.mxu0 0
        %1015 = vmatprep.subr.bf16.mxu0 0
        %1016 = vmatpush1.bf16.msra.mxu0 0
        %1017 = vmatprep.subr.bf16.mxu0 0
        %1018 = vmatpush1.bf16.msra.mxu0 0
        %1019 = vmatprep.subr.bf16.mxu0 0
        %1020 = vmatpush1.bf16.msra.mxu0 0
        %1021 = vmatprep.subr.bf16.mxu0 0
        %1022 = vmatpush1.bf16.msra.mxu0 0
        %1023 = vmatprep.subr.bf16.mxu0 0
        %1024 = vmatpush1.bf16.msra.mxu0 0
        %1025 = vmatprep.subr.bf16.mxu0 0
        %1026 = vmatpush1.bf16.msra.mxu0 0
        %1027 = vmatprep.subr.bf16.mxu0 0
        %1028 = vmatpush1.bf16.msra.mxu0 0
        %1029 = vmatprep.subr.bf16.mxu0 0
        %1030 = vmatpush1.bf16.msra.mxu0 0
        %1031 = vmatprep.mubr.bf16.mxu0 0
        %1032 = vmatmul.mubr.bf16.gmra.mrb[0].mxu0 %v985
        %v1033 = vpop.f32.mrb[0].mxu0
        %v1034 = vadd.f32 0.0, %v1033
        %v1035 = vpop.f32.mrb[0].mxu0
        %v1036 = vpop.f32.mrb[0].mxu0
        %v1037 = vadd.f32 0.0, %v1036
        %v1038 = vpop.f32.mrb[0].mxu0
        %1039 = vmatprep.mubr.bf16.mxu0 0
        %1040 = vmatmul.mubr.bf16.gmra.mrb[0].mxu0 %v988
        %v1041 = vpop.f32.mrb[0].mxu0
        %v1042 = vadd.f32 0.0, %v1041
        %v1043 = vpop.f32.mrb[0].mxu0
        %v1044 = vpop.f32.mrb[0].mxu0
        %v1045 = vadd.f32 0.0, %v1044
        %v1046 = vpop.f32.mrb[0].mxu0
        %1047 = vmatprep.mubr.bf16.mxu0 0
        %1048 = vmatmul.mubr.bf16.gmra.mrb[0].mxu0 %v991
        %v1049 = vpop.f32.mrb[0].mxu0
        %v1050 = vadd.f32 0.0, %v1049
        %v1051 = vpop.f32.mrb[0].mxu0
        %v1052 = vpop.f32.mrb[0].mxu0
        %v1053 = vadd.f32 0.0, %v1052
        %v1054 = vpop.f32.mrb[0].mxu0
        %1055 = vmatprep.mubr.bf16.mxu0 0
        %1056 = vmatmul.mubr.bf16.gmra.mrb[0].mxu0 %v994
        %v1057 = vpop.f32.mrb[0].mxu0
        %v1058 = vadd.f32 0.0, %v1057
        %v1059 = vpop.f32.mrb[0].mxu0
        %v1060 = vpop.f32.mrb[0].mxu0
        %v1061 = vadd.f32 0.0, %v1060
        %v1062 = vpop.f32.mrb[0].mxu0
        %1063 = vdwg.mxu0
        %v1064 = vadd.f32 %v862, %v1034
        %v1065 = vadd.f32 %v865, %v1037
        %v1066 = vadd.f32 %v870, %v1042
        %v1067 = vadd.f32 %v873, %v1045
        %v1068 = vadd.f32 %v878, %v1050
        %v1069 = vadd.f32 %v881, %v1053
        %v1070 = vadd.f32 %v886, %v1058
        %v1071 = vadd.f32 %v889, %v1061
        %v1072 = vld [vmem:[%s472] sm:$0xf]
        %v1073 = vld [vmem:[%s472 + $0x8] sm:$0xf]
        %v1074 = vld [vmem:[%s472 + $0x10] sm:$0xf]
        %v1075 = vld [vmem:[%s472 + $0x18] sm:$0xf]
        %v1076 = vld [vmem:[%s472 + $0x20] sm:$0xf]
        %v1077 = vld [vmem:[%s472 + $0x28] sm:$0xf]
        %v1078 = vld [vmem:[%s472 + $0x30] sm:$0xf]
        %v1079 = vld [vmem:[%s472 + $0x38] sm:$0xf]
        %s1080 = scalar_lea.vmem [#allocation7], 60
        %v1081 = vld [vmem:[%s1080] sm:$0xf]
        %v1082 = vld [vmem:[%s1080 + $0x4] sm:$0xf]
        %v1083 = vld [vmem:[%s1080 + $0x8] sm:$0xf]
        %v1084 = vld [vmem:[%s1080 + $0xc] sm:$0xf]
        %v1085 = vld [vmem:[%s1080 + $0x10] sm:$0xf]
        %v1094 = vunpack.c.l.b16 %v1072
        %v1095 = vunpack.c.l.b16 %v1073
        %v1096 = vunpack.c.l.b16 %v1074
        %v1097 = vunpack.c.l.b16 %v1075
        %v1098 = vunpack.c.l.b16 %v1076
        %v1099 = vunpack.c.l.b16 %v1077
        %v1100 = vunpack.c.l.b16 %v1078
        %v1101 = vunpack.c.l.b16 %v1079
        %v1102 = vpack.c.b16 %v1095, %v1094
        %v1103 = vpack.c.b16 %v1097, %v1096
        %v1104 = vpack.c.b16 %v1099, %v1098
        %v1105 = vpack.c.b16 %v1101, %v1100
        %v1111 = vunpack.c.l.b16 %v1081
        %v1112 = vunpack.c.l.b16 %v1082
        %v1113 = vunpack.c.l.b16 %v1083
        %v1114 = vunpack.c.l.b16 %v1084
        %v1115 = vunpack.c.l.b16 %v1085
        %v1116 = vpack.c.b16 %v1112, %v1111
        %v1117 = vpack.c.b16 %v1114, %v1113
        %v1118 = vpack.c.b16 %v1115, %v1115
        %v1122 = vsel %vm696, %v1102, 0
        %v1125 = vsel %vm696, %v1103, 0
        %v1128 = vsel %vm696, %v1104, 0
        %v1131 = vsel %vm696, %v1105, 0
        %v1134 = vsel %vm326, %v1118, 0
        %1136 = vmatprep.subr.bf16.mxu0 0
        %1137 = vmatpush1.bf16.msra.mxu0 %v1116
        %1138 = vmatprep.subr.bf16.mxu0 0
        %1139 = vmatpush1.bf16.msra.mxu0 %v1117
        %1140 = vmatprep.subr.bf16.mxu0 0
        %1141 = vmatpush1.bf16.msra.mxu0 %v1134
        %1142 = vmatprep.subr.bf16.mxu0 0
        %1143 = vmatpush1.bf16.msra.mxu0 0
        %1144 = vmatprep.subr.bf16.mxu0 0
        %1145 = vmatpush1.bf16.msra.mxu0 0
        %1146 = vmatprep.subr.bf16.mxu0 0
        %1147 = vmatpush1.bf16.msra.mxu0 0
        %1148 = vmatprep.subr.bf16.mxu0 0
        %1149 = vmatpush1.bf16.msra.mxu0 0
        %1150 = vmatprep.subr.bf16.mxu0 0
        %1151 = vmatpush1.bf16.msra.mxu0 0
        %1152 = vmatprep.subr.bf16.mxu0 0
        %1153 = vmatpush1.bf16.msra.mxu0 0
        %1154 = vmatprep.subr.bf16.mxu0 0
        %1155 = vmatpush1.bf16.msra.mxu0 0
        %1156 = vmatprep.subr.bf16.mxu0 0
        %1157 = vmatpush1.bf16.msra.mxu0 0
        %1158 = vmatprep.subr.bf16.mxu0 0
        %1159 = vmatpush1.bf16.msra.mxu0 0
        %1160 = vmatprep.subr.bf16.mxu0 0
        %1161 = vmatpush1.bf16.msra.mxu0 0
        %1162 = vmatprep.subr.bf16.mxu0 0
        %1163 = vmatpush1.bf16.msra.mxu0 0
        %1164 = vmatprep.subr.bf16.mxu0 0
        %1165 = vmatpush1.bf16.msra.mxu0 0
        %1166 = vmatprep.subr.bf16.mxu0 0
        %1167 = vmatpush1.bf16.msra.mxu0 0
        %1168 = vmatprep.mubr.bf16.mxu0 0
        %1169 = vmatmul.mubr.bf16.gmra.mrb[0].mxu0 %v1122
        %v1170 = vpop.f32.mrb[0].mxu0
        %v1171 = vadd.f32 0.0, %v1170
        %v1172 = vpop.f32.mrb[0].mxu0
        %v1173 = vpop.f32.mrb[0].mxu0
        %v1174 = vadd.f32 0.0, %v1173
        %v1175 = vpop.f32.mrb[0].mxu0
        %1176 = vmatprep.mubr.bf16.mxu0 0
        %1177 = vmatmul.mubr.bf16.gmra.mrb[0].mxu0 %v1125
        %v1178 = vpop.f32.mrb[0].mxu0
        %v1179 = vadd.f32 0.0, %v1178
        %v1180 = vpop.f32.mrb[0].mxu0
        %v1181 = vpop.f32.mrb[0].mxu0
        %v1182 = vadd.f32 0.0, %v1181
        %v1183 = vpop.f32.mrb[0].mxu0
        %1184 = vmatprep.mubr.bf16.mxu0 0
        %1185 = vmatmul.mubr.bf16.gmra.mrb[0].mxu0 %v1128
        %v1186 = vpop.f32.mrb[0].mxu0
        %v1187 = vadd.f32 0.0, %v1186
        %v1188 = vpop.f32.mrb[0].mxu0
        %v1189 = vpop.f32.mrb[0].mxu0
        %v1190 = vadd.f32 0.0, %v1189
        %v1191 = vpop.f32.mrb[0].mxu0
        %1192 = vmatprep.mubr.bf16.mxu0 0
        %1193 = vmatmul.mubr.bf16.gmra.mrb[0].mxu0 %v1131
        %v1194 = vpop.f32.mrb[0].mxu0
        %v1195 = vadd.f32 0.0, %v1194
        %v1196 = vpop.f32.mrb[0].mxu0
        %v1197 = vpop.f32.mrb[0].mxu0
        %v1198 = vadd.f32 0.0, %v1197
        %v1199 = vpop.f32.mrb[0].mxu0
        %1200 = vdwg.mxu0
        %v1201 = vadd.f32 %v1064, %v1171
        %v1202 = vadd.f32 %v1065, %v1174
        %v1203 = vadd.f32 %v1066, %v1179
        %v1204 = vadd.f32 %v1067, %v1182
        %v1205 = vadd.f32 %v1068, %v1187
        %v1206 = vadd.f32 %v1069, %v1190
        %v1207 = vadd.f32 %v1070, %v1195
        %v1208 = vadd.f32 %v1071, %v1198
        %v1209 = vld [vmem:[%s472] sm:$0xf]
        %v1210 = vld [vmem:[%s472 + $0x4] sm:$0x1]
        %v1211 = vld [vmem:[%s472 + $0x8] sm:$0xf]
        %v1212 = vld [vmem:[%s472 + $0xc] sm:$0x1]
        %v1213 = vld [vmem:[%s472 + $0x10] sm:$0xf]
        %v1214 = vld [vmem:[%s472 + $0x14] sm:$0x1]
        %v1215 = vld [vmem:[%s472 + $0x18] sm:$0xf]
        %v1216 = vld [vmem:[%s472 + $0x1c] sm:$0x1]
        %v1217 = vld [vmem:[%s472 + $0x20] sm:$0xf]
        %v1218 = vld [vmem:[%s472 + $0x24] sm:$0x1]
        %v1219 = vld [vmem:[%s472 + $0x28] sm:$0xf]
        %v1220 = vld [vmem:[%s472 + $0x2c] sm:$0x1]
        %v1221 = vld [vmem:[%s472 + $0x30] sm:$0xf]
        %v1222 = vld [vmem:[%s472 + $0x34] sm:$0x1]
        %v1223 = vld [vmem:[%s472 + $0x38] sm:$0xf]
        %v1224 = vld [vmem:[%s472 + $0x3c] sm:$0x1]
        %v1226 = vshrl.u32 %v1209, 16
        %v1228 = vrot.slane %v1226, 4
        %v1229 = vshll.u32 %v1209, 16
        %v1231 = vrot.slane %v1229, 5
        %v1232 = vor.u32 %v1228, %v1231
        %v1233 = vrot.slane %v1232, 4
        %v1235 = vshll.u32 %v1210, 16
        %v1237 = vrot.slane %v1235, 5
        %v1238 = vsel %vm550, %v1233, %v1237
        %v1240 = vshrl.u32 %v1211, 16
        %v1242 = vrot.slane %v1240, 4
        %v1243 = vshll.u32 %v1211, 16
        %v1245 = vrot.slane %v1243, 5
        %v1246 = vor.u32 %v1242, %v1245
        %v1247 = vrot.slane %v1246, 4
        %v1249 = vshll.u32 %v1212, 16
        %v1251 = vrot.slane %v1249, 5
        %v1252 = vsel %vm550, %v1247, %v1251
        %v1254 = vshrl.u32 %v1213, 16
        %v1256 = vrot.slane %v1254, 4
        %v1257 = vshll.u32 %v1213, 16
        %v1259 = vrot.slane %v1257, 5
        %v1260 = vor.u32 %v1256, %v1259
        %v1261 = vrot.slane %v1260, 4
        %v1263 = vshll.u32 %v1214, 16
        %v1265 = vrot.slane %v1263, 5
        %v1266 = vsel %vm550, %v1261, %v1265
        %v1268 = vshrl.u32 %v1215, 16
        %v1270 = vrot.slane %v1268, 4
        %v1271 = vshll.u32 %v1215, 16
        %v1273 = vrot.slane %v1271, 5
        %v1274 = vor.u32 %v1270, %v1273
        %v1275 = vrot.slane %v1274, 4
        %v1277 = vshll.u32 %v1216, 16
        %v1279 = vrot.slane %v1277, 5
        %v1280 = vsel %vm550, %v1275, %v1279
        %v1282 = vshrl.u32 %v1217, 16
        %v1284 = vrot.slane %v1282, 4
        %v1285 = vshll.u32 %v1217, 16
        %v1287 = vrot.slane %v1285, 5
        %v1288 = vor.u32 %v1284, %v1287
        %v1289 = vrot.slane %v1288, 4
        %v1291 = vshll.u32 %v1218, 16
        %v1293 = vrot.slane %v1291, 5
        %v1294 = vsel %vm550, %v1289, %v1293
        %v1296 = vshrl.u32 %v1219, 16
        %v1298 = vrot.slane %v1296, 4
        %v1299 = vshll.u32 %v1219, 16
        %v1301 = vrot.slane %v1299, 5
        %v1302 = vor.u32 %v1298, %v1301
        %v1303 = vrot.slane %v1302, 4
        %v1305 = vshll.u32 %v1220, 16
        %v1307 = vrot.slane %v1305, 5
        %v1308 = vsel %vm550, %v1303, %v1307
        %v1310 = vshrl.u32 %v1221, 16
        %v1312 = vrot.slane %v1310, 4
        %v1313 = vshll.u32 %v1221, 16
        %v1315 = vrot.slane %v1313, 5
        %v1316 = vor.u32 %v1312, %v1315
        %v1317 = vrot.slane %v1316, 4
        %v1319 = vshll.u32 %v1222, 16
        %v1321 = vrot.slane %v1319, 5
        %v1322 = vsel %vm550, %v1317, %v1321
        %v1324 = vshrl.u32 %v1223, 16
        %v1326 = vrot.slane %v1324, 4
        %v1327 = vshll.u32 %v1223, 16
        %v1329 = vrot.slane %v1327, 5
        %v1330 = vor.u32 %v1326, %v1329
        %v1331 = vrot.slane %v1330, 4
        %v1333 = vshll.u32 %v1224, 16
        %v1335 = vrot.slane %v1333, 5
        %v1336 = vsel %vm550, %v1331, %v1335
        %s1337 = scalar_lea.vmem [#allocation7], 80
        %v1338 = vld [vmem:[%s1337] sm:$0xf]
        %v1339 = vld [vmem:[%s1337 + $0x4] sm:$0xf]
        %v1340 = vld [vmem:[%s1337 + $0x8] sm:$0xf]
        %v1341 = vld [vmem:[%s1337 + $0xc] sm:$0xf]
        %v1342 = vld [vmem:[%s1337 + $0x10] sm:$0xf]
        %v1343 = vunpack.c.l.b16 %v1238
        %v1344 = vunpack.c.l.b16 %v1252
        %v1345 = vunpack.c.l.b16 %v1266
        %v1346 = vunpack.c.l.b16 %v1280
        %v1347 = vunpack.c.l.b16 %v1294
        %v1348 = vunpack.c.l.b16 %v1308
        %v1349 = vunpack.c.l.b16 %v1322
        %v1350 = vunpack.c.l.b16 %v1336
        %v1351 = vpack.c.b16 %v1344, %v1343
        %v1352 = vpack.c.b16 %v1346, %v1345
        %v1353 = vpack.c.b16 %v1348, %v1347
        %v1354 = vpack.c.b16 %v1350, %v1349
        %v1360 = vunpack.c.l.b16 %v1338
        %v1361 = vunpack.c.l.b16 %v1339
        %v1362 = vunpack.c.l.b16 %v1340
        %v1363 = vunpack.c.l.b16 %v1341
        %v1364 = vunpack.c.l.b16 %v1342
        %v1365 = vpack.c.b16 %v1361, %v1360
        %v1366 = vpack.c.b16 %v1363, %v1362
        %v1367 = vpack.c.b16 %v1364, %v1364
        %v1371 = vsel %vm696, %v1351, 0
        %v1374 = vsel %vm696, %v1352, 0
        %v1377 = vsel %vm696, %v1353, 0
        %v1380 = vsel %vm696, %v1354, 0
        %v1383 = vsel %vm326, %v1367, 0
        %1385 = vmatprep.subr.bf16.mxu0 0
        %1386 = vmatpush1.bf16.msra.mxu0 %v1365
        %1387 = vmatprep.subr.bf16.mxu0 0
        %1388 = vmatpush1.bf16.msra.mxu0 %v1366
        %1389 = vmatprep.subr.bf16.mxu0 0
        %1390 = vmatpush1.bf16.msra.mxu0 %v1383
        %1391 = vmatprep.subr.bf16.mxu0 0
        %1392 = vmatpush1.bf16.msra.mxu0 0
        %1393 = vmatprep.subr.bf16.mxu0 0
        %1394 = vmatpush1.bf16.msra.mxu0 0
        %1395 = vmatprep.subr.bf16.mxu0 0
        %1396 = vmatpush1.bf16.msra.mxu0 0
        %1397 = vmatprep.subr.bf16.mxu0 0
        %1398 = vmatpush1.bf16.msra.mxu0 0
        %1399 = vmatprep.subr.bf16.mxu0 0
        %1400 = vmatpush1.bf16.msra.mxu0 0
        %1401 = vmatprep.subr.bf16.mxu0 0
        %1402 = vmatpush1.bf16.msra.mxu0 0
        %1403 = vmatprep.subr.bf16.mxu0 0
        %1404 = vmatpush1.bf16.msra.mxu0 0
        %1405 = vmatprep.subr.bf16.mxu0 0
        %1406 = vmatpush1.bf16.msra.mxu0 0
        %1407 = vmatprep.subr.bf16.mxu0 0
        %1408 = vmatpush1.bf16.msra.mxu0 0
        %1409 = vmatprep.subr.bf16.mxu0 0
        %1410 = vmatpush1.bf16.msra.mxu0 0
        %1411 = vmatprep.subr.bf16.mxu0 0
        %1412 = vmatpush1.bf16.msra.mxu0 0
        %1413 = vmatprep.subr.bf16.mxu0 0
        %1414 = vmatpush1.bf16.msra.mxu0 0
        %1415 = vmatprep.subr.bf16.mxu0 0
        %1416 = vmatpush1.bf16.msra.mxu0 0
        %1417 = vmatprep.mubr.bf16.mxu0 0
        %1418 = vmatmul.mubr.bf16.gmra.mrb[0].mxu0 %v1371
        %v1419 = vpop.f32.mrb[0].mxu0
        %v1420 = vadd.f32 0.0, %v1419
        %v1421 = vpop.f32.mrb[0].mxu0
        %v1422 = vpop.f32.mrb[0].mxu0
        %v1423 = vadd.f32 0.0, %v1422
        %v1424 = vpop.f32.mrb[0].mxu0
        %1425 = vmatprep.mubr.bf16.mxu0 0
        %1426 = vmatmul.mubr.bf16.gmra.mrb[0].mxu0 %v1374
        %v1427 = vpop.f32.mrb[0].mxu0
        %v1428 = vadd.f32 0.0, %v1427
        %v1429 = vpop.f32.mrb[0].mxu0
        %v1430 = vpop.f32.mrb[0].mxu0
        %v1431 = vadd.f32 0.0, %v1430
        %v1432 = vpop.f32.mrb[0].mxu0
        %1433 = vmatprep.mubr.bf16.mxu0 0
        %1434 = vmatmul.mubr.bf16.gmra.mrb[0].mxu0 %v1377
        %v1435 = vpop.f32.mrb[0].mxu0
        %v1436 = vadd.f32 0.0, %v1435
        %v1437 = vpop.f32.mrb[0].mxu0
        %v1438 = vpop.f32.mrb[0].mxu0
        %v1439 = vadd.f32 0.0, %v1438
        %v1440 = vpop.f32.mrb[0].mxu0
        %1441 = vmatprep.mubr.bf16.mxu0 0
        %1442 = vmatmul.mubr.bf16.gmra.mrb[0].mxu0 %v1380
        %v1443 = vpop.f32.mrb[0].mxu0
        %v1444 = vadd.f32 0.0, %v1443
        %v1445 = vpop.f32.mrb[0].mxu0
        %v1446 = vpop.f32.mrb[0].mxu0
        %v1447 = vadd.f32 0.0, %v1446
        %v1448 = vpop.f32.mrb[0].mxu0
        %1449 = vdwg.mxu0
        %v1450 = vadd.f32 %v1201, %v1420
        %v1451 = vadd.f32 %v1202, %v1423
        %v1452 = vadd.f32 %v1203, %v1428
        %v1453 = vadd.f32 %v1204, %v1431
        %v1454 = vadd.f32 %v1205, %v1436
        %v1455 = vadd.f32 %v1206, %v1439
        %v1456 = vadd.f32 %v1207, %v1444
        %v1457 = vadd.f32 %v1208, %v1447
        %v1458 = vld [vmem:[%s472] sm:$0xe]
        %v1459 = vld [vmem:[%s472 + $0x8] sm:$0xe]
        %v1460 = vld [vmem:[%s472 + $0x10] sm:$0xe]
        %v1461 = vld [vmem:[%s472 + $0x18] sm:$0xe]
        %v1462 = vld [vmem:[%s472 + $0x20] sm:$0xe]
        %v1463 = vld [vmem:[%s472 + $0x28] sm:$0xe]
        %v1464 = vld [vmem:[%s472 + $0x30] sm:$0xe]
        %v1465 = vld [vmem:[%s472 + $0x38] sm:$0xe]
        %v1482 = vrot.slane %v1458, 5
        %v1483 = vrot.slane %v1482, 4
        %v1484 = vrot.slane %v1210, 5
        %v1485 = vsel %vm918, %v1483, %v1484
        %v1486 = vrot.slane %v1459, 5
        %v1487 = vrot.slane %v1486, 4
        %v1488 = vrot.slane %v1212, 5
        %v1489 = vsel %vm918, %v1487, %v1488
        %v1490 = vrot.slane %v1460, 5
        %v1491 = vrot.slane %v1490, 4
        %v1492 = vrot.slane %v1214, 5
        %v1493 = vsel %vm918, %v1491, %v1492
        %v1494 = vrot.slane %v1461, 5
        %v1495 = vrot.slane %v1494, 4
        %v1496 = vrot.slane %v1216, 5
        %v1497 = vsel %vm918, %v1495, %v1496
        %v1498 = vrot.slane %v1462, 5
        %v1499 = vrot.slane %v1498, 4
        %v1500 = vrot.slane %v1218, 5
        %v1501 = vsel %vm918, %v1499, %v1500
        %v1502 = vrot.slane %v1463, 5
        %v1503 = vrot.slane %v1502, 4
        %v1504 = vrot.slane %v1220, 5
        %v1505 = vsel %vm918, %v1503, %v1504
        %v1506 = vrot.slane %v1464, 5
        %v1507 = vrot.slane %v1506, 4
        %v1508 = vrot.slane %v1222, 5
        %v1509 = vsel %vm918, %v1507, %v1508
        %v1510 = vrot.slane %v1465, 5
        %v1511 = vrot.slane %v1510, 4
        %v1512 = vrot.slane %v1224, 5
        %v1513 = vsel %vm918, %v1511, %v1512
        %s1514 = scalar_lea.vmem [#allocation7], 100
        %v1515 = vld [vmem:[%s1514] sm:$0xf]
        %v1516 = vld [vmem:[%s1514 + $0x4] sm:$0xf]
        %v1517 = vld [vmem:[%s1514 + $0x8] sm:$0xf]
        %v1518 = vld [vmem:[%s1514 + $0xc] sm:$0xf]
        %v1519 = vld [vmem:[%s1514 + $0x10] sm:$0xf]
        %v1520 = vunpack.c.l.b16 %v1485
        %v1521 = vunpack.c.l.b16 %v1489
        %v1522 = vunpack.c.l.b16 %v1493
        %v1523 = vunpack.c.l.b16 %v1497
        %v1524 = vunpack.c.l.b16 %v1501
        %v1525 = vunpack.c.l.b16 %v1505
        %v1526 = vunpack.c.l.b16 %v1509
        %v1527 = vunpack.c.l.b16 %v1513
        %v1528 = vpack.c.b16 %v1521, %v1520
        %v1529 = vpack.c.b16 %v1523, %v1522
        %v1530 = vpack.c.b16 %v1525, %v1524
        %v1531 = vpack.c.b16 %v1527, %v1526
        %v1537 = vunpack.c.l.b16 %v1515
        %v1538 = vunpack.c.l.b16 %v1516
        %v1539 = vunpack.c.l.b16 %v1517
        %v1540 = vunpack.c.l.b16 %v1518
        %v1541 = vunpack.c.l.b16 %v1519
        %v1542 = vpack.c.b16 %v1538, %v1537
        %v1543 = vpack.c.b16 %v1540, %v1539
        %v1544 = vpack.c.b16 %v1541, %v1541
        %v1548 = vsel %vm696, %v1528, 0
        %v1551 = vsel %vm696, %v1529, 0
        %v1554 = vsel %vm696, %v1530, 0
        %v1557 = vsel %vm696, %v1531, 0
        %v1560 = vsel %vm326, %v1544, 0
        %1562 = vmatprep.subr.bf16.mxu0 0
        %1563 = vmatpush1.bf16.msra.mxu0 %v1542
        %1564 = vmatprep.subr.bf16.mxu0 0
        %1565 = vmatpush1.bf16.msra.mxu0 %v1543
        %1566 = vmatprep.subr.bf16.mxu0 0
        %1567 = vmatpush1.bf16.msra.mxu0 %v1560
        %1568 = vmatprep.subr.bf16.mxu0 0
        %1569 = vmatpush1.bf16.msra.mxu0 0
        %1570 = vmatprep.subr.bf16.mxu0 0
        %1571 = vmatpush1.bf16.msra.mxu0 0
        %1572 = vmatprep.subr.bf16.mxu0 0
        %1573 = vmatpush1.bf16.msra.mxu0 0
        %1574 = vmatprep.subr.bf16.mxu0 0
        %1575 = vmatpush1.bf16.msra.mxu0 0
        %1576 = vmatprep.subr.bf16.mxu0 0
        %1577 = vmatpush1.bf16.msra.mxu0 0
        %1578 = vmatprep.subr.bf16.mxu0 0
        %1579 = vmatpush1.bf16.msra.mxu0 0
        %1580 = vmatprep.subr.bf16.mxu0 0
        %1581 = vmatpush1.bf16.msra.mxu0 0
        %1582 = vmatprep.subr.bf16.mxu0 0
        %1583 = vmatpush1.bf16.msra.mxu0 0
        %1584 = vmatprep.subr.bf16.mxu0 0
        %1585 = vmatpush1.bf16.msra.mxu0 0
        %1586 = vmatprep.subr.bf16.mxu0 0
        %1587 = vmatpush1.bf16.msra.mxu0 0
        %1588 = vmatprep.subr.bf16.mxu0 0
        %1589 = vmatpush1.bf16.msra.mxu0 0
        %1590 = vmatprep.subr.bf16.mxu0 0
        %1591 = vmatpush1.bf16.msra.mxu0 0
        %1592 = vmatprep.subr.bf16.mxu0 0
        %1593 = vmatpush1.bf16.msra.mxu0 0
        %1594 = vmatprep.mubr.bf16.mxu0 0
        %1595 = vmatmul.mubr.bf16.gmra.mrb[0].mxu0 %v1548
        %v1596 = vpop.f32.mrb[0].mxu0
        %v1597 = vadd.f32 0.0, %v1596
        %v1598 = vpop.f32.mrb[0].mxu0
        %v1599 = vpop.f32.mrb[0].mxu0
        %v1600 = vadd.f32 0.0, %v1599
        %v1601 = vpop.f32.mrb[0].mxu0
        %1602 = vmatprep.mubr.bf16.mxu0 0
        %1603 = vmatmul.mubr.bf16.gmra.mrb[0].mxu0 %v1551
        %v1604 = vpop.f32.mrb[0].mxu0
        %v1605 = vadd.f32 0.0, %v1604
        %v1606 = vpop.f32.mrb[0].mxu0
        %v1607 = vpop.f32.mrb[0].mxu0
        %v1608 = vadd.f32 0.0, %v1607
        %v1609 = vpop.f32.mrb[0].mxu0
        %1610 = vmatprep.mubr.bf16.mxu0 0
        %1611 = vmatmul.mubr.bf16.gmra.mrb[0].mxu0 %v1554
        %v1612 = vpop.f32.mrb[0].mxu0
        %v1613 = vadd.f32 0.0, %v1612
        %v1614 = vpop.f32.mrb[0].mxu0
        %v1615 = vpop.f32.mrb[0].mxu0
        %v1616 = vadd.f32 0.0, %v1615
        %v1617 = vpop.f32.mrb[0].mxu0
        %1618 = vmatprep.mubr.bf16.mxu0 0
        %1619 = vmatmul.mubr.bf16.gmra.mrb[0].mxu0 %v1557
        %v1620 = vpop.f32.mrb[0].mxu0
        %v1621 = vadd.f32 0.0, %v1620
        %v1622 = vpop.f32.mrb[0].mxu0
        %v1623 = vpop.f32.mrb[0].mxu0
        %v1624 = vadd.f32 0.0, %v1623
        %v1625 = vpop.f32.mrb[0].mxu0
        %1626 = vdwg.mxu0
        %v1627 = vadd.f32 %v1450, %v1597
        %v1628 = vadd.f32 %v1451, %v1600
        %v1629 = vadd.f32 %v1452, %v1605
        %v1630 = vadd.f32 %v1453, %v1608
        %v1631 = vadd.f32 %v1454, %v1613
        %v1632 = vadd.f32 %v1455, %v1616
        %v1633 = vadd.f32 %v1456, %v1621
        %v1634 = vadd.f32 %v1457, %v1624
        %s1635 = scalar_lea.vmem [#allocation2], 16
        %v1636 = vld [vmem:[%s1635] sm:$0xf]
        %v1637 = vld [vmem:[%s1635 + $0x8] sm:$0xf]
        %v1638 = vld [vmem:[%s1635 + $0x10] sm:$0xf]
        %v1639 = vld [vmem:[%s1635 + $0x18] sm:$0xf]
        %v1640 = vld [vmem:[%s1635 + $0x20] sm:$0xf]
        %v1641 = vld [vmem:[%s1635 + $0x28] sm:$0xf]
        %v1642 = vld [vmem:[%s1635 + $0x30] sm:$0xf]
        %v1643 = vld [vmem:[%s1635 + $0x38] sm:$0xf]
        %s1644 = scalar_lea.vmem [#allocation7], 120
        %v1645 = vld [vmem:[%s1644] sm:$0xf]
        %v1646 = vld [vmem:[%s1644 + $0x4] sm:$0xf]
        %v1647 = vld [vmem:[%s1644 + $0x8] sm:$0xf]
        %v1648 = vld [vmem:[%s1644 + $0xc] sm:$0xf]
        %v1649 = vld [vmem:[%s1644 + $0x10] sm:$0xf]
        %v1658 = vunpack.c.l.b16 %v1636
        %v1659 = vunpack.c.l.b16 %v1637
        %v1660 = vunpack.c.l.b16 %v1638
        %v1661 = vunpack.c.l.b16 %v1639
        %v1662 = vunpack.c.l.b16 %v1640
        %v1663 = vunpack.c.l.b16 %v1641
        %v1664 = vunpack.c.l.b16 %v1642
        %v1665 = vunpack.c.l.b16 %v1643
        %v1666 = vpack.c.b16 %v1659, %v1658
        %v1667 = vpack.c.b16 %v1661, %v1660
        %v1668 = vpack.c.b16 %v1663, %v1662
        %v1669 = vpack.c.b16 %v1665, %v1664
        %v1675 = vunpack.c.l.b16 %v1645
        %v1676 = vunpack.c.l.b16 %v1646
        %v1677 = vunpack.c.l.b16 %v1647
        %v1678 = vunpack.c.l.b16 %v1648
        %v1679 = vunpack.c.l.b16 %v1649
        %v1680 = vpack.c.b16 %v1676, %v1675
        %v1681 = vpack.c.b16 %v1678, %v1677
        %v1682 = vpack.c.b16 %v1679, %v1679
        %v1686 = vsel %vm696, %v1666, 0
        %v1689 = vsel %vm696, %v1667, 0
        %v1692 = vsel %vm696, %v1668, 0
        %v1695 = vsel %vm696, %v1669, 0
        %v1698 = vsel %vm326, %v1682, 0
        %1700 = vmatprep.subr.bf16.mxu0 0
        %1701 = vmatpush1.bf16.msra.mxu0 %v1680
        %1702 = vmatprep.subr.bf16.mxu0 0
        %1703 = vmatpush1.bf16.msra.mxu0 %v1681
        %1704 = vmatprep.subr.bf16.mxu0 0
        %1705 = vmatpush1.bf16.msra.mxu0 %v1698
        %1706 = vmatprep.subr.bf16.mxu0 0
        %1707 = vmatpush1.bf16.msra.mxu0 0
        %1708 = vmatprep.subr.bf16.mxu0 0
        %1709 = vmatpush1.bf16.msra.mxu0 0
        %1710 = vmatprep.subr.bf16.mxu0 0
        %1711 = vmatpush1.bf16.msra.mxu0 0
        %1712 = vmatprep.subr.bf16.mxu0 0
        %1713 = vmatpush1.bf16.msra.mxu0 0
        %1714 = vmatprep.subr.bf16.mxu0 0
        %1715 = vmatpush1.bf16.msra.mxu0 0
        %1716 = vmatprep.subr.bf16.mxu0 0
        %1717 = vmatpush1.bf16.msra.mxu0 0
        %1718 = vmatprep.subr.bf16.mxu0 0
        %1719 = vmatpush1.bf16.msra.mxu0 0
        %1720 = vmatprep.subr.bf16.mxu0 0
        %1721 = vmatpush1.bf16.msra.mxu0 0
        %1722 = vmatprep.subr.bf16.mxu0 0
        %1723 = vmatpush1.bf16.msra.mxu0 0
        %1724 = vmatprep.subr.bf16.mxu0 0
        %1725 = vmatpush1.bf16.msra.mxu0 0
        %1726 = vmatprep.subr.bf16.mxu0 0
        %1727 = vmatpush1.bf16.msra.mxu0 0
        %1728 = vmatprep.subr.bf16.mxu0 0
        %1729 = vmatpush1.bf16.msra.mxu0 0
        %1730 = vmatprep.subr.bf16.mxu0 0
        %1731 = vmatpush1.bf16.msra.mxu0 0
        %1732 = vmatprep.mubr.bf16.mxu0 0
        %1733 = vmatmul.mubr.bf16.gmra.mrb[0].mxu0 %v1686
        %v1734 = vpop.f32.mrb[0].mxu0
        %v1735 = vadd.f32 0.0, %v1734
        %v1736 = vpop.f32.mrb[0].mxu0
        %v1737 = vpop.f32.mrb[0].mxu0
        %v1738 = vadd.f32 0.0, %v1737
        %v1739 = vpop.f32.mrb[0].mxu0
        %1740 = vmatprep.mubr.bf16.mxu0 0
        %1741 = vmatmul.mubr.bf16.gmra.mrb[0].mxu0 %v1689
        %v1742 = vpop.f32.mrb[0].mxu0
        %v1743 = vadd.f32 0.0, %v1742
        %v1744 = vpop.f32.mrb[0].mxu0
        %v1745 = vpop.f32.mrb[0].mxu0
        %v1746 = vadd.f32 0.0, %v1745
        %v1747 = vpop.f32.mrb[0].mxu0
        %1748 = vmatprep.mubr.bf16.mxu0 0
        %1749 = vmatmul.mubr.bf16.gmra.mrb[0].mxu0 %v1692
        %v1750 = vpop.f32.mrb[0].mxu0
        %v1751 = vadd.f32 0.0, %v1750
        %v1752 = vpop.f32.mrb[0].mxu0
        %v1753 = vpop.f32.mrb[0].mxu0
        %v1754 = vadd.f32 0.0, %v1753
        %v1755 = vpop.f32.mrb[0].mxu0
        %1756 = vmatprep.mubr.bf16.mxu0 0
        %1757 = vmatmul.mubr.bf16.gmra.mrb[0].mxu0 %v1695
        %v1758 = vpop.f32.mrb[0].mxu0
        %v1759 = vadd.f32 0.0, %v1758
        %v1760 = vpop.f32.mrb[0].mxu0
        %v1761 = vpop.f32.mrb[0].mxu0
        %v1762 = vadd.f32 0.0, %v1761
        %v1763 = vpop.f32.mrb[0].mxu0
        %1764 = vdwg.mxu0
        %v1765 = vadd.f32 %v1627, %v1735
        %v1766 = vadd.f32 %v1628, %v1738
        %v1767 = vadd.f32 %v1629, %v1743
        %v1768 = vadd.f32 %v1630, %v1746
        %v1769 = vadd.f32 %v1631, %v1751
        %v1770 = vadd.f32 %v1632, %v1754
        %v1771 = vadd.f32 %v1633, %v1759
        %v1772 = vadd.f32 %v1634, %v1762
        %v1773 = vld [vmem:[%s1635] sm:$0xf]
        %v1774 = vld [vmem:[%s1635 + $0x4] sm:$0x1]
        %v1775 = vld [vmem:[%s1635 + $0x8] sm:$0xf]
        %v1776 = vld [vmem:[%s1635 + $0xc] sm:$0x1]
        %v1777 = vld [vmem:[%s1635 + $0x10] sm:$0xf]
        %v1778 = vld [vmem:[%s1635 + $0x14] sm:$0x1]
        %v1779 = vld [vmem:[%s1635 + $0x18] sm:$0xf]
        %v1780 = vld [vmem:[%s1635 + $0x1c] sm:$0x1]
        %v1781 = vld [vmem:[%s1635 + $0x20] sm:$0xf]
        %v1782 = vld [vmem:[%s1635 + $0x24] sm:$0x1]
        %v1783 = vld [vmem:[%s1635 + $0x28] sm:$0xf]
        %v1784 = vld [vmem:[%s1635 + $0x2c] sm:$0x1]
        %v1785 = vld [vmem:[%s1635 + $0x30] sm:$0xf]
        %v1786 = vld [vmem:[%s1635 + $0x34] sm:$0x1]
        %v1787 = vld [vmem:[%s1635 + $0x38] sm:$0xf]
        %v1788 = vld [vmem:[%s1635 + $0x3c] sm:$0x1]
        %v1790 = vshrl.u32 %v1773, 16
        %v1792 = vrot.slane %v1790, 4
        %v1793 = vshll.u32 %v1773, 16
        %v1795 = vrot.slane %v1793, 5
        %v1796 = vor.u32 %v1792, %v1795
        %v1797 = vrot.slane %v1796, 4
        %v1799 = vshll.u32 %v1774, 16
        %v1801 = vrot.slane %v1799, 5
        %v1802 = vsel %vm550, %v1797, %v1801
        %v1804 = vshrl.u32 %v1775, 16
        %v1806 = vrot.slane %v1804, 4
        %v1807 = vshll.u32 %v1775, 16
        %v1809 = vrot.slane %v1807, 5
        %v1810 = vor.u32 %v1806, %v1809
        %v1811 = vrot.slane %v1810, 4
        %v1813 = vshll.u32 %v1776, 16
        %v1815 = vrot.slane %v1813, 5
        %v1816 = vsel %vm550, %v1811, %v1815
        %v1818 = vshrl.u32 %v1777, 16
        %v1820 = vrot.slane %v1818, 4
        %v1821 = vshll.u32 %v1777, 16
        %v1823 = vrot.slane %v1821, 5
        %v1824 = vor.u32 %v1820, %v1823
        %v1825 = vrot.slane %v1824, 4
        %v1827 = vshll.u32 %v1778, 16
        %v1829 = vrot.slane %v1827, 5
        %v1830 = vsel %vm550, %v1825, %v1829
        %v1832 = vshrl.u32 %v1779, 16
        %v1834 = vrot.slane %v1832, 4
        %v1835 = vshll.u32 %v1779, 16
        %v1837 = vrot.slane %v1835, 5
        %v1838 = vor.u32 %v1834, %v1837
        %v1839 = vrot.slane %v1838, 4
        %v1841 = vshll.u32 %v1780, 16
        %v1843 = vrot.slane %v1841, 5
        %v1844 = vsel %vm550, %v1839, %v1843
        %v1846 = vshrl.u32 %v1781, 16
        %v1848 = vrot.slane %v1846, 4
        %v1849 = vshll.u32 %v1781, 16
        %v1851 = vrot.slane %v1849, 5
        %v1852 = vor.u32 %v1848, %v1851
        %v1853 = vrot.slane %v1852, 4
        %v1855 = vshll.u32 %v1782, 16
        %v1857 = vrot.slane %v1855, 5
        %v1858 = vsel %vm550, %v1853, %v1857
        %v1860 = vshrl.u32 %v1783, 16
        %v1862 = vrot.slane %v1860, 4
        %v1863 = vshll.u32 %v1783, 16
        %v1865 = vrot.slane %v1863, 5
        %v1866 = vor.u32 %v1862, %v1865
        %v1867 = vrot.slane %v1866, 4
        %v1869 = vshll.u32 %v1784, 16
        %v1871 = vrot.slane %v1869, 5
        %v1872 = vsel %vm550, %v1867, %v1871
        %v1874 = vshrl.u32 %v1785, 16
        %v1876 = vrot.slane %v1874, 4
        %v1877 = vshll.u32 %v1785, 16
        %v1879 = vrot.slane %v1877, 5
        %v1880 = vor.u32 %v1876, %v1879
        %v1881 = vrot.slane %v1880, 4
        %v1883 = vshll.u32 %v1786, 16
        %v1885 = vrot.slane %v1883, 5
        %v1886 = vsel %vm550, %v1881, %v1885
        %v1888 = vshrl.u32 %v1787, 16
        %v1890 = vrot.slane %v1888, 4
        %v1891 = vshll.u32 %v1787, 16
        %v1893 = vrot.slane %v1891, 5
        %v1894 = vor.u32 %v1890, %v1893
        %v1895 = vrot.slane %v1894, 4
        %v1897 = vshll.u32 %v1788, 16
        %v1899 = vrot.slane %v1897, 5
        %v1900 = vsel %vm550, %v1895, %v1899
        %s1901 = scalar_lea.vmem [#allocation7], 140
        %v1902 = vld [vmem:[%s1901] sm:$0xf]
        %v1903 = vld [vmem:[%s1901 + $0x4] sm:$0xf]
        %v1904 = vld [vmem:[%s1901 + $0x8] sm:$0xf]
        %v1905 = vld [vmem:[%s1901 + $0xc] sm:$0xf]
        %v1906 = vld [vmem:[%s1901 + $0x10] sm:$0xf]
        %v1907 = vunpack.c.l.b16 %v1802
        %v1908 = vunpack.c.l.b16 %v1816
        %v1909 = vunpack.c.l.b16 %v1830
        %v1910 = vunpack.c.l.b16 %v1844
        %v1911 = vunpack.c.l.b16 %v1858
        %v1912 = vunpack.c.l.b16 %v1872
        %v1913 = vunpack.c.l.b16 %v1886
        %v1914 = vunpack.c.l.b16 %v1900
        %v1915 = vpack.c.b16 %v1908, %v1907
        %v1916 = vpack.c.b16 %v1910, %v1909
        %v1917 = vpack.c.b16 %v1912, %v1911
        %v1918 = vpack.c.b16 %v1914, %v1913
        %v1924 = vunpack.c.l.b16 %v1902
        %v1925 = vunpack.c.l.b16 %v1903
        %v1926 = vunpack.c.l.b16 %v1904
        %v1927 = vunpack.c.l.b16 %v1905
        %v1928 = vunpack.c.l.b16 %v1906
        %v1929 = vpack.c.b16 %v1925, %v1924
        %v1930 = vpack.c.b16 %v1927, %v1926
        %v1931 = vpack.c.b16 %v1928, %v1928
        %v1935 = vsel %vm696, %v1915, 0
        %v1938 = vsel %vm696, %v1916, 0
        %v1941 = vsel %vm696, %v1917, 0
        %v1944 = vsel %vm696, %v1918, 0
        %v1947 = vsel %vm326, %v1931, 0
        %1949 = vmatprep.subr.bf16.mxu0 0
        %1950 = vmatpush1.bf16.msra.mxu0 %v1929
        %1951 = vmatprep.subr.bf16.mxu0 0
        %1952 = vmatpush1.bf16.msra.mxu0 %v1930
        %1953 = vmatprep.subr.bf16.mxu0 0
        %1954 = vmatpush1.bf16.msra.mxu0 %v1947
        %1955 = vmatprep.subr.bf16.mxu0 0
        %1956 = vmatpush1.bf16.msra.mxu0 0
        %1957 = vmatprep.subr.bf16.mxu0 0
        %1958 = vmatpush1.bf16.msra.mxu0 0
        %1959 = vmatprep.subr.bf16.mxu0 0
        %1960 = vmatpush1.bf16.msra.mxu0 0
        %1961 = vmatprep.subr.bf16.mxu0 0
        %1962 = vmatpush1.bf16.msra.mxu0 0
        %1963 = vmatprep.subr.bf16.mxu0 0
        %1964 = vmatpush1.bf16.msra.mxu0 0
        %1965 = vmatprep.subr.bf16.mxu0 0
        %1966 = vmatpush1.bf16.msra.mxu0 0
        %1967 = vmatprep.subr.bf16.mxu0 0
        %1968 = vmatpush1.bf16.msra.mxu0 0
        %1969 = vmatprep.subr.bf16.mxu0 0
        %1970 = vmatpush1.bf16.msra.mxu0 0
        %1971 = vmatprep.subr.bf16.mxu0 0
        %1972 = vmatpush1.bf16.msra.mxu0 0
        %1973 = vmatprep.subr.bf16.mxu0 0
        %1974 = vmatpush1.bf16.msra.mxu0 0
        %1975 = vmatprep.subr.bf16.mxu0 0
        %1976 = vmatpush1.bf16.msra.mxu0 0
        %1977 = vmatprep.subr.bf16.mxu0 0
        %1978 = vmatpush1.bf16.msra.mxu0 0
        %1979 = vmatprep.subr.bf16.mxu0 0
        %1980 = vmatpush1.bf16.msra.mxu0 0
        %1981 = vmatprep.mubr.bf16.mxu0 0
        %1982 = vmatmul.mubr.bf16.gmra.mrb[0].mxu0 %v1935
        %v1983 = vpop.f32.mrb[0].mxu0
        %v1984 = vadd.f32 0.0, %v1983
        %v1985 = vpop.f32.mrb[0].mxu0
        %v1986 = vpop.f32.mrb[0].mxu0
        %v1987 = vadd.f32 0.0, %v1986
        %v1988 = vpop.f32.mrb[0].mxu0
        %1989 = vmatprep.mubr.bf16.mxu0 0
        %1990 = vmatmul.mubr.bf16.gmra.mrb[0].mxu0 %v1938
        %v1991 = vpop.f32.mrb[0].mxu0
        %v1992 = vadd.f32 0.0, %v1991
        %v1993 = vpop.f32.mrb[0].mxu0
        %v1994 = vpop.f32.mrb[0].mxu0
        %v1995 = vadd.f32 0.0, %v1994
        %v1996 = vpop.f32.mrb[0].mxu0
        %1997 = vmatprep.mubr.bf16.mxu0 0
        %1998 = vmatmul.mubr.bf16.gmra.mrb[0].mxu0 %v1941
        %v1999 = vpop.f32.mrb[0].mxu0
        %v2000 = vadd.f32 0.0, %v1999
        %v2001 = vpop.f32.mrb[0].mxu0
        %v2002 = vpop.f32.mrb[0].mxu0
        %v2003 = vadd.f32 0.0, %v2002
        %v2004 = vpop.f32.mrb[0].mxu0
        %2005 = vmatprep.mubr.bf16.mxu0 0
        %2006 = vmatmul.mubr.bf16.gmra.mrb[0].mxu0 %v1944
        %v2007 = vpop.f32.mrb[0].mxu0
        %v2008 = vadd.f32 0.0, %v2007
        %v2009 = vpop.f32.mrb[0].mxu0
        %v2010 = vpop.f32.mrb[0].mxu0
        %v2011 = vadd.f32 0.0, %v2010
        %v2012 = vpop.f32.mrb[0].mxu0
        %2013 = vdwg.mxu0
        %v2014 = vadd.f32 %v1765, %v1984
        %v2015 = vadd.f32 %v1766, %v1987
        %v2016 = vadd.f32 %v1767, %v1992
        %v2017 = vadd.f32 %v1768, %v1995
        %v2018 = vadd.f32 %v1769, %v2000
        %v2019 = vadd.f32 %v1770, %v2003
        %v2020 = vadd.f32 %v1771, %v2008
        %v2021 = vadd.f32 %v1772, %v2011
        %v2022 = vld [vmem:[%s1635] sm:$0xe]
        %v2023 = vld [vmem:[%s1635 + $0x8] sm:$0xe]
        %v2024 = vld [vmem:[%s1635 + $0x10] sm:$0xe]
        %v2025 = vld [vmem:[%s1635 + $0x18] sm:$0xe]
        %v2026 = vld [vmem:[%s1635 + $0x20] sm:$0xe]
        %v2027 = vld [vmem:[%s1635 + $0x28] sm:$0xe]
        %v2028 = vld [vmem:[%s1635 + $0x30] sm:$0xe]
        %v2029 = vld [vmem:[%s1635 + $0x38] sm:$0xe]
        %v2046 = vrot.slane %v2022, 5
        %v2047 = vrot.slane %v2046, 4
        %v2048 = vrot.slane %v1774, 5
        %v2049 = vsel %vm918, %v2047, %v2048
        %v2050 = vrot.slane %v2023, 5
        %v2051 = vrot.slane %v2050, 4
        %v2052 = vrot.slane %v1776, 5
        %v2053 = vsel %vm918, %v2051, %v2052
        %v2054 = vrot.slane %v2024, 5
        %v2055 = vrot.slane %v2054, 4
        %v2056 = vrot.slane %v1778, 5
        %v2057 = vsel %vm918, %v2055, %v2056
        %v2058 = vrot.slane %v2025, 5
        %v2059 = vrot.slane %v2058, 4
        %v2060 = vrot.slane %v1780, 5
        %v2061 = vsel %vm918, %v2059, %v2060
        %v2062 = vrot.slane %v2026, 5
        %v2063 = vrot.slane %v2062, 4
        %v2064 = vrot.slane %v1782, 5
        %v2065 = vsel %vm918, %v2063, %v2064
        %v2066 = vrot.slane %v2027, 5
        %v2067 = vrot.slane %v2066, 4
        %v2068 = vrot.slane %v1784, 5
        %v2069 = vsel %vm918, %v2067, %v2068
        %v2070 = vrot.slane %v2028, 5
        %v2071 = vrot.slane %v2070, 4
        %v2072 = vrot.slane %v1786, 5
        %v2073 = vsel %vm918, %v2071, %v2072
        %v2074 = vrot.slane %v2029, 5
        %v2075 = vrot.slane %v2074, 4
        %v2076 = vrot.slane %v1788, 5
        %v2077 = vsel %vm918, %v2075, %v2076
        %s2078 = scalar_lea.vmem [#allocation7], 160
        %v2079 = vld [vmem:[%s2078] sm:$0xf]
        %v2080 = vld [vmem:[%s2078 + $0x4] sm:$0xf]
        %v2081 = vld [vmem:[%s2078 + $0x8] sm:$0xf]
        %v2082 = vld [vmem:[%s2078 + $0xc] sm:$0xf]
        %v2083 = vld [vmem:[%s2078 + $0x10] sm:$0xf]
        %v2084 = vunpack.c.l.b16 %v2049
        %v2085 = vunpack.c.l.b16 %v2053
        %v2086 = vunpack.c.l.b16 %v2057
        %v2087 = vunpack.c.l.b16 %v2061
        %v2088 = vunpack.c.l.b16 %v2065
        %v2089 = vunpack.c.l.b16 %v2069
        %v2090 = vunpack.c.l.b16 %v2073
        %v2091 = vunpack.c.l.b16 %v2077
        %v2092 = vpack.c.b16 %v2085, %v2084
        %v2093 = vpack.c.b16 %v2087, %v2086
        %v2094 = vpack.c.b16 %v2089, %v2088
        %v2095 = vpack.c.b16 %v2091, %v2090
        %v2101 = vunpack.c.l.b16 %v2079
        %v2102 = vunpack.c.l.b16 %v2080
        %v2103 = vunpack.c.l.b16 %v2081
        %v2104 = vunpack.c.l.b16 %v2082
        %v2105 = vunpack.c.l.b16 %v2083
        %v2106 = vpack.c.b16 %v2102, %v2101
        %v2107 = vpack.c.b16 %v2104, %v2103
        %v2108 = vpack.c.b16 %v2105, %v2105
        %v2112 = vsel %vm696, %v2092, 0
        %v2115 = vsel %vm696, %v2093, 0
        %v2118 = vsel %vm696, %v2094, 0
        %v2121 = vsel %vm696, %v2095, 0
        %v2124 = vsel %vm326, %v2108, 0
        %2126 = vmatprep.subr.bf16.mxu0 0
        %2127 = vmatpush1.bf16.msra.mxu0 %v2106
        %2128 = vmatprep.subr.bf16.mxu0 0
        %2129 = vmatpush1.bf16.msra.mxu0 %v2107
        %2130 = vmatprep.subr.bf16.mxu0 0
        %2131 = vmatpush1.bf16.msra.mxu0 %v2124
        %2132 = vmatprep.subr.bf16.mxu0 0
        %2133 = vmatpush1.bf16.msra.mxu0 0
        %2134 = vmatprep.subr.bf16.mxu0 0
        %2135 = vmatpush1.bf16.msra.mxu0 0
        %2136 = vmatprep.subr.bf16.mxu0 0
        %2137 = vmatpush1.bf16.msra.mxu0 0
        %2138 = vmatprep.subr.bf16.mxu0 0
        %2139 = vmatpush1.bf16.msra.mxu0 0
        %2140 = vmatprep.subr.bf16.mxu0 0
        %2141 = vmatpush1.bf16.msra.mxu0 0
        %2142 = vmatprep.subr.bf16.mxu0 0
        %2143 = vmatpush1.bf16.msra.mxu0 0
        %2144 = vmatprep.subr.bf16.mxu0 0
        %2145 = vmatpush1.bf16.msra.mxu0 0
        %2146 = vmatprep.subr.bf16.mxu0 0
        %2147 = vmatpush1.bf16.msra.mxu0 0
        %2148 = vmatprep.subr.bf16.mxu0 0
        %2149 = vmatpush1.bf16.msra.mxu0 0
        %2150 = vmatprep.subr.bf16.mxu0 0
        %2151 = vmatpush1.bf16.msra.mxu0 0
        %2152 = vmatprep.subr.bf16.mxu0 0
        %2153 = vmatpush1.bf16.msra.mxu0 0
        %2154 = vmatprep.subr.bf16.mxu0 0
        %2155 = vmatpush1.bf16.msra.mxu0 0
        %2156 = vmatprep.subr.bf16.mxu0 0
        %2157 = vmatpush1.bf16.msra.mxu0 0
        %2158 = vmatprep.mubr.bf16.mxu0 0
        %2159 = vmatmul.mubr.bf16.gmra.mrb[0].mxu0 %v2112
        %v2160 = vpop.f32.mrb[0].mxu0
        %v2161 = vadd.f32 0.0, %v2160
        %v2162 = vpop.f32.mrb[0].mxu0
        %v2163 = vpop.f32.mrb[0].mxu0
        %v2164 = vadd.f32 0.0, %v2163
        %v2165 = vpop.f32.mrb[0].mxu0
        %2166 = vmatprep.mubr.bf16.mxu0 0
        %2167 = vmatmul.mubr.bf16.gmra.mrb[0].mxu0 %v2115
        %v2168 = vpop.f32.mrb[0].mxu0
        %v2169 = vadd.f32 0.0, %v2168
        %v2170 = vpop.f32.mrb[0].mxu0
        %v2171 = vpop.f32.mrb[0].mxu0
        %v2172 = vadd.f32 0.0, %v2171
        %v2173 = vpop.f32.mrb[0].mxu0
        %2174 = vmatprep.mubr.bf16.mxu0 0
        %2175 = vmatmul.mubr.bf16.gmra.mrb[0].mxu0 %v2118
        %v2176 = vpop.f32.mrb[0].mxu0
        %v2177 = vadd.f32 0.0, %v2176
        %v2178 = vpop.f32.mrb[0].mxu0
        %v2179 = vpop.f32.mrb[0].mxu0
        %v2180 = vadd.f32 0.0, %v2179
        %v2181 = vpop.f32.mrb[0].mxu0
        %2182 = vmatprep.mubr.bf16.mxu0 0
        %2183 = vmatmul.mubr.bf16.gmra.mrb[0].mxu0 %v2121
        %v2184 = vpop.f32.mrb[0].mxu0
        %v2185 = vadd.f32 0.0, %v2184
        %v2186 = vpop.f32.mrb[0].mxu0
        %v2187 = vpop.f32.mrb[0].mxu0
        %v2188 = vadd.f32 0.0, %v2187
        %v2189 = vpop.f32.mrb[0].mxu0
        %2190 = vdwg.mxu0
        %v2191 = vadd.f32 %v2014, %v2161
        %v2192 = vadd.f32 %v2015, %v2164
        %v2193 = vadd.f32 %v2016, %v2169
        %v2194 = vadd.f32 %v2017, %v2172
        %v2195 = vadd.f32 %v2018, %v2177
        %v2196 = vadd.f32 %v2019, %v2180
        %v2197 = vadd.f32 %v2020, %v2185
        %v2198 = vadd.f32 %v2021, %v2188
        %v2199 = vlaneseq
        %v2200 = vshrl.u32 %v2199, 7
        %v2201 = vsub.s32 0, %v2200
        %v2202 = vrot.slane %v302, %v2201
        %v2203 = vadd.f32 %v2191, %v2202
        %v2204 = vadd.f32 %v2192, %v2202
        %v2205 = vadd.f32 %v2193, %v2202
        %v2206 = vadd.f32 %v2194, %v2202
        %v2207 = vadd.f32 %v2195, %v2202
        %v2208 = vadd.f32 %v2196, %v2202
        %v2209 = vadd.f32 %v2197, %v2202
        %v2210 = vadd.f32 %v2198, %v2202
        %v2211 = vadd.f32 %v2203, %v2204
        %v2212 = vadd.f32 %v2211, %v2205
        %v2213 = vadd.f32 %v2212, %v2206
        %v2214 = vadd.f32 %v2213, %v2207
        %v2215 = vadd.f32 %v2214, %v2208
        %v2216 = vadd.f32 %v2215, %v2209
        %v2217 = vadd.f32 %v2216, %v2210
        %v2218 = vrot.slane %v2217, 4
        %v2219 = vadd.f32 %v2217, %v2218
        %v2220 = vrot.slane %v2219, 2
        %v2221 = vadd.f32 %v2219, %v2220
        %v2222 = vrot.slane %v2221, 1
        %v2223 = vadd.f32 %v2221, %v2222
        %v2224 = vmul.f32 %v2203, %v2203
        %v2225 = vmul.f32 %v2204, %v2204
        %v2226 = vmul.f32 %v2205, %v2205
        %v2227 = vmul.f32 %v2206, %v2206
        %v2228 = vmul.f32 %v2207, %v2207
        %v2229 = vmul.f32 %v2208, %v2208
        %v2230 = vmul.f32 %v2209, %v2209
        %v2231 = vmul.f32 %v2210, %v2210
        %v2232 = vadd.f32 %v2224, %v2225
        %v2233 = vadd.f32 %v2232, %v2226
        %v2234 = vadd.f32 %v2233, %v2227
        %v2235 = vadd.f32 %v2234, %v2228
        %v2236 = vadd.f32 %v2235, %v2229
        %v2237 = vadd.f32 %v2236, %v2230
        %v2238 = vadd.f32 %v2237, %v2231
        %v2239 = vrot.slane %v2238, 4
        %v2240 = vadd.f32 %v2238, %v2239
        %v2241 = vrot.slane %v2240, 2
        %v2242 = vadd.f32 %v2240, %v2241
        %v2243 = vrot.slane %v2242, 1
        %v2244 = vadd.f32 %v2242, %v2243
        %v2245 = vsel %vm330, %v2223, %v2244
        %2246 = vmatprep.subr.mxu0 0.0
        %2247 = vmatpush1.xpose.msra.mxu0 %v303
        %2248 = vmatprep.subr.mxu0 0.0
        %2249 = vmatpush1.xpose.msra.mxu0 0.0
        %2250 = vmatprep.subr.mxu0 0.0
        %2251 = vmatpush1.xpose.msra.mxu0 0.0
        %2252 = vmatprep.subr.mxu0 0.0
        %2253 = vmatpush1.xpose.msra.mxu0 0.0
        %2254 = vmatprep.subr.mxu0 0.0
        %2255 = vmatpush1.xpose.msra.mxu0 0.0
        %2256 = vmatprep.subr.mxu0 0.0
        %2257 = vmatpush1.xpose.msra.mxu0 0.0
        %2258 = vmatprep.subr.mxu0 0.0
        %2259 = vmatpush1.xpose.msra.mxu0 0.0
        %2260 = vmatprep.subr.mxu0 0.0
        %2261 = vmatpush1.xpose.msra.mxu0 0.0
        %2262 = vmatprep.subr.mxu0 0.0
        %2263 = vmatpush1.xpose.msra.mxu0 0.0
        %2264 = vmatprep.subr.mxu0 0.0
        %2265 = vmatpush1.xpose.msra.mxu0 0.0
        %2266 = vmatprep.subr.mxu0 0.0
        %2267 = vmatpush1.xpose.msra.mxu0 0.0
        %2268 = vmatprep.subr.mxu0 0.0
        %2269 = vmatpush1.xpose.msra.mxu0 0.0
        %2270 = vmatprep.subr.mxu0 0.0
        %2271 = vmatpush1.xpose.msra.mxu0 0.0
        %2272 = vmatprep.subr.mxu0 0.0
        %2273 = vmatpush1.xpose.msra.mxu0 0.0
        %2274 = vmatprep.subr.mxu0 0.0
        %2275 = vmatpush1.xpose.msra.mxu0 0.0
        %2276 = vmatprep.subr.mxu0 0.0
        %2277 = vmatpush1.xpose.msra.mxu0 0.0
        %2278 = vmatprep.subr.mxu0 0.0
        %2279 = vmatpush1.xpose.msra.mxu0 0.0
        %2280 = vmatprep.subr.mxu0 0.0
        %2281 = vmatpush1.xpose.msra.mxu0 0.0
        %2282 = vmatprep.subr.mxu0 0.0
        %2283 = vmatpush1.xpose.msra.mxu0 0.0
        %2284 = vmatprep.subr.mxu0 0.0
        %2285 = vmatpush1.xpose.msra.mxu0 0.0
        %2286 = vmatprep.subr.mxu0 0.0
        %2287 = vmatpush1.xpose.msra.mxu0 0.0
        %2288 = vmatprep.subr.mxu0 0.0
        %2289 = vmatpush1.xpose.msra.mxu0 0.0
        %2290 = vmatprep.subr.mxu0 0.0
        %2291 = vmatpush1.xpose.msra.mxu0 0.0
        %2292 = vmatprep.subr.mxu0 0.0
        %2293 = vmatpush1.xpose.msra.mxu0 0.0
        %2294 = vmatprep.subr.mxu0 0.0
        %2295 = vmatpush1.xpose.msra.mxu0 0.0
        %2296 = vmatprep.subr.mxu0 0.0
        %2297 = vmatpush1.xpose.msra.mxu0 0.0
        %2298 = vmatprep.subr.mxu0 0.0
        %2299 = vmatpush1.xpose.msra.mxu0 0.0
        %2300 = vmatprep.subr.mxu0 0.0
        %2301 = vmatpush1.xpose.msra.mxu0 0.0
        %2302 = vmatprep.subr.mxu0 0.0
        %2303 = vmatpush1.xpose.msra.mxu0 0.0
        %2304 = vmatprep.subr.mxu0 0.0
        %2305 = vmatpush1.xpose.msra.mxu0 0.0
        %2306 = vmatprep.subr.mxu0 0.0
        %2307 = vmatpush1.xpose.msra.mxu0 0.0
        %2308 = vmatprep.subr.mxu0 0.0
        %2309 = vmatpush1.xpose.msra.mxu0 0.0
        %2310 = vmatprep.mubr.f32.mxu0 0.0
        %2311 = vmatmul.mubr.f32.gmra.mrb[0].mxu0 %v2245
        %v2312 = vpop.f32.mrb[0].mxu0
        %v2313 = vadd.f32 0.0, %v2312
        %v2314 = vpop.f32.mrb[0].mxu0
        %2315 = vdwg.mxu0
        %v2316 = vrcp.pop 1024.0
        %v2317 = vmul.f32 %v2313, %v2316
        %v2318 = vmul.f32 %v2317, %v2317
        %v2320 = vrot.slane %v2318, 7
        %v2322 = vsub.f32 %v2317, %v2320
        %v2323 = vmax.f32 %v2322, 0.0
        %v2324 = vadd.f32 %v2323, 1e-05
        %v2325 = vrsqrt.pop %v2324
        %v2326 = vsel %vm330, %v2317, %v2325
        %vm2327 = vcmask 64512
        %v2329 = vsel %vm2327, %v2326, 0
        %2331 = vmatprep.subr.mxu0 0.0
        %2332 = vmatpush1.msra.mxu0 %v303
        %2333 = vmatprep.subr.mxu0 0.0
        %2334 = vmatpush1.msra.mxu0 0.0
        %2335 = vmatprep.subr.mxu0 0.0
        %2336 = vmatpush1.msra.mxu0 0.0
        %2337 = vmatprep.subr.mxu0 0.0
        %2338 = vmatpush1.msra.mxu0 0.0
        %2339 = vmatprep.subr.mxu0 0.0
        %2340 = vmatpush1.msra.mxu0 0.0
        %2341 = vmatprep.subr.mxu0 0.0
        %2342 = vmatpush1.msra.mxu0 0.0
        %2343 = vmatprep.subr.mxu0 0.0
        %2344 = vmatpush1.msra.mxu0 0.0
        %2345 = vmatprep.subr.mxu0 0.0
        %2346 = vmatpush1.msra.mxu0 0.0
        %2347 = vmatprep.subr.mxu0 0.0
        %2348 = vmatpush1.msra.mxu0 0.0
        %2349 = vmatprep.subr.mxu0 0.0
        %2350 = vmatpush1.msra.mxu0 0.0
        %2351 = vmatprep.subr.mxu0 0.0
        %2352 = vmatpush1.msra.mxu0 0.0
        %2353 = vmatprep.subr.mxu0 0.0
        %2354 = vmatpush1.msra.mxu0 0.0
        %2355 = vmatprep.subr.mxu0 0.0
        %2356 = vmatpush1.msra.mxu0 0.0
        %2357 = vmatprep.subr.mxu0 0.0
        %2358 = vmatpush1.msra.mxu0 0.0
        %2359 = vmatprep.subr.mxu0 0.0
        %2360 = vmatpush1.msra.mxu0 0.0
        %2361 = vmatprep.subr.mxu0 0.0
        %2362 = vmatpush1.msra.mxu0 0.0
        %2363 = vmatprep.subr.mxu0 0.0
        %2364 = vmatpush1.msra.mxu0 0.0
        %2365 = vmatprep.subr.mxu0 0.0
        %2366 = vmatpush1.msra.mxu0 0.0
        %2367 = vmatprep.subr.mxu0 0.0
        %2368 = vmatpush1.msra.mxu0 0.0
        %2369 = vmatprep.subr.mxu0 0.0
        %2370 = vmatpush1.msra.mxu0 0.0
        %2371 = vmatprep.subr.mxu0 0.0
        %2372 = vmatpush1.msra.mxu0 0.0
        %2373 = vmatprep.subr.mxu0 0.0
        %2374 = vmatpush1.msra.mxu0 0.0
        %2375 = vmatprep.subr.mxu0 0.0
        %2376 = vmatpush1.msra.mxu0 0.0
        %2377 = vmatprep.subr.mxu0 0.0
        %2378 = vmatpush1.msra.mxu0 0.0
        %2379 = vmatprep.subr.mxu0 0.0
        %2380 = vmatpush1.msra.mxu0 0.0
        %2381 = vmatprep.subr.mxu0 0.0
        %2382 = vmatpush1.msra.mxu0 0.0
        %2383 = vmatprep.subr.mxu0 0.0
        %2384 = vmatpush1.msra.mxu0 0.0
        %2385 = vmatprep.subr.mxu0 0.0
        %2386 = vmatpush1.msra.mxu0 0.0
        %2387 = vmatprep.subr.mxu0 0.0
        %2388 = vmatpush1.msra.mxu0 0.0
        %2389 = vmatprep.subr.mxu0 0.0
        %2390 = vmatpush1.msra.mxu0 0.0
        %2391 = vmatprep.subr.mxu0 0.0
        %2392 = vmatpush1.msra.mxu0 0.0
        %2393 = vmatprep.subr.mxu0 0.0
        %2394 = vmatpush1.msra.mxu0 0.0
        %2395 = vmatprep.mubr.f32.mxu0 0.0
        %2396 = vmatmul.mubr.f32.gmra.mrb[0].mxu0 %v2329
        %v2397 = vpop.f32.mrb[0].mxu0
        %v2398 = vadd.f32 0.0, %v2397
        %v2399 = vpop.f32.mrb[0].mxu0
        %2400 = vdwg.mxu0
        %v2401 = vlaneseq
        %v2402 = vshrl.u32 %v2401, 7
        %v2403 = vsub.s32 0, %v2402
        %v2404 = vrot.slane %v2398, %v2403
        %v2405 = vsub.f32 %v2203, %v2404
        %v2406 = vsub.f32 %v2204, %v2404
        %v2407 = vsub.f32 %v2205, %v2404
        %v2408 = vsub.f32 %v2206, %v2404
        %v2409 = vsub.f32 %v2207, %v2404
        %v2410 = vsub.f32 %v2208, %v2404
        %v2411 = vsub.f32 %v2209, %v2404
        %v2412 = vsub.f32 %v2210, %v2404
        %v2413 = vlaneseq
        %v2414 = vshrl.u32 %v2413, 7
        %v2415 = vsub.s32 1, %v2414
        %v2416 = vrot.slane %v2398, %v2415
        %v2417 = vmul.f32 %v2405, %v2416
        %v2418 = vmul.f32 %v2406, %v2416
        %v2419 = vmul.f32 %v2407, %v2416
        %v2420 = vmul.f32 %v2408, %v2416
        %v2421 = vmul.f32 %v2409, %v2416
        %v2422 = vmul.f32 %v2410, %v2416
        %v2423 = vmul.f32 %v2411, %v2416
        %v2424 = vmul.f32 %v2412, %v2416
        %v2425 = vlaneseq
        %v2426 = vshrl.u32 %v2425, 7
        %v2427 = vsub.s32 1, %v2426
        %v2428 = vrot.slane %v302, %v2427
        %v2429 = vmul.f32 %v2417, %v2428
        %v2430 = vmul.f32 %v2418, %v2428
        %v2431 = vmul.f32 %v2419, %v2428
        %v2432 = vmul.f32 %v2420, %v2428
        %v2433 = vmul.f32 %v2421, %v2428
        %v2434 = vmul.f32 %v2422, %v2428
        %v2435 = vmul.f32 %v2423, %v2428
        %v2436 = vmul.f32 %v2424, %v2428
        %v2437 = vlaneseq
        %v2438 = vshrl.u32 %v2437, 7
        %v2439 = vsub.s32 2, %v2438
        %v2440 = vrot.slane %v302, %v2439
        %v2441 = vadd.f32 %v2429, %v2440
        %v2442 = vadd.f32 %v2430, %v2440
        %v2443 = vadd.f32 %v2431, %v2440
        %v2444 = vadd.f32 %v2432, %v2440
        %v2445 = vadd.f32 %v2433, %v2440
        %v2446 = vadd.f32 %v2434, %v2440
        %v2447 = vadd.f32 %v2435, %v2440
        %v2448 = vadd.f32 %v2436, %v2440
        %v2449 = vmax.f32 %v2441, 0.0
        %v2450 = vmax.f32 %v2442, 0.0
        %v2451 = vmax.f32 %v2443, 0.0
        %v2452 = vmax.f32 %v2444, 0.0
        %v2453 = vmax.f32 %v2445, 0.0
        %v2454 = vmax.f32 %v2446, 0.0
        %v2455 = vmax.f32 %v2447, 0.0
        %v2456 = vmax.f32 %v2448, 0.0
        %v2457 = vpack.c.bf16 %v2449, %v2449
        %v2458 = vpack.c.bf16 %v2450, %v2450
        %v2459 = vpack.c.bf16 %v2451, %v2451
        %v2460 = vpack.c.bf16 %v2452, %v2452
        %v2461 = vpack.c.bf16 %v2453, %v2453
        %v2462 = vpack.c.bf16 %v2454, %v2454
        %v2463 = vpack.c.bf16 %v2455, %v2455
        %v2464 = vpack.c.bf16 %v2456, %v2456
        %v2473 = vunpack.c.l.b16 %v2457
        %v2474 = vunpack.c.l.b16 %v2458
        %v2475 = vunpack.c.l.b16 %v2459
        %v2476 = vunpack.c.l.b16 %v2460
        %v2477 = vunpack.c.l.b16 %v2461
        %v2478 = vunpack.c.l.b16 %v2462
        %v2479 = vunpack.c.l.b16 %v2463
        %v2480 = vunpack.c.l.b16 %v2464
        %v2481 = vpack.c.b16 %v2473, %v2473
        %v2482 = vpack.c.b16 %v2474, %v2474
        %v2483 = vpack.c.b16 %v2475, %v2475
        %v2484 = vpack.c.b16 %v2476, %v2476
        %v2485 = vpack.c.b16 %v2477, %v2477
        %v2486 = vpack.c.b16 %v2478, %v2478
        %v2487 = vpack.c.b16 %v2479, %v2479
        %v2488 = vpack.c.b16 %v2480, %v2480
        %v2490 = vshrl.u32 %v2481, 16
        %v2492 = vrot.slane %v2490, 7
        %v2493 = vshll.u32 %v2481, 16
        %v2495 = vor.u32 %v2492, %v2493
        %v2496 = vrot.slane %v2492, 4
        %v2498 = vshrl.u32 %v2482, 16
        %v2500 = vrot.slane %v2498, 7
        %v2501 = vshll.u32 %v2482, 16
        %v2503 = vor.u32 %v2500, %v2501
        %v2504 = vrot.slane %v2500, 4
        %v2506 = vshrl.u32 %v2483, 16
        %v2508 = vrot.slane %v2506, 7
        %v2509 = vshll.u32 %v2483, 16
        %v2511 = vor.u32 %v2508, %v2509
        %v2512 = vrot.slane %v2508, 4
        %v2514 = vshrl.u32 %v2484, 16
        %v2516 = vrot.slane %v2514, 7
        %v2517 = vshll.u32 %v2484, 16
        %v2519 = vor.u32 %v2516, %v2517
        %v2520 = vrot.slane %v2516, 4
        %v2522 = vshrl.u32 %v2485, 16
        %v2524 = vrot.slane %v2522, 7
        %v2525 = vshll.u32 %v2485, 16
        %v2527 = vor.u32 %v2524, %v2525
        %v2528 = vrot.slane %v2524, 4
        %v2530 = vshrl.u32 %v2486, 16
        %v2532 = vrot.slane %v2530, 7
        %v2533 = vshll.u32 %v2486, 16
        %v2535 = vor.u32 %v2532, %v2533
        %v2536 = vrot.slane %v2532, 4
        %v2538 = vshrl.u32 %v2487, 16
        %v2540 = vrot.slane %v2538, 7
        %v2541 = vshll.u32 %v2487, 16
        %v2543 = vor.u32 %v2540, %v2541
        %v2544 = vrot.slane %v2540, 4
        %v2546 = vshrl.u32 %v2488, 16
        %v2548 = vrot.slane %v2546, 7
        %v2549 = vshll.u32 %v2488, 16
        %v2551 = vor.u32 %v2548, %v2549
        %v2552 = vrot.slane %v2548, 4
        %2553 = vrot.lane.b32.xlu0 %v2495, 16
        %v2554 = vpop.permute.xlu0 %2553
        %2555 = vrot.lane.b32.xlu0 %v2496, 16
        %v2556 = vpop.permute.xlu0 %2555
        %2557 = vrot.lane.b32.xlu0 %v2503, 16
        %v2558 = vpop.permute.xlu0 %2557
        %2559 = vrot.lane.b32.xlu0 %v2504, 16
        %v2560 = vpop.permute.xlu0 %2559
        %2561 = vrot.lane.b32.xlu0 %v2511, 16
        %v2562 = vpop.permute.xlu0 %2561
        %2563 = vrot.lane.b32.xlu0 %v2512, 16
        %v2564 = vpop.permute.xlu0 %2563
        %2565 = vrot.lane.b32.xlu0 %v2519, 16
        %v2566 = vpop.permute.xlu0 %2565
        %2567 = vrot.lane.b32.xlu0 %v2520, 16
        %v2568 = vpop.permute.xlu0 %2567
        %2569 = vrot.lane.b32.xlu0 %v2527, 16
        %v2570 = vpop.permute.xlu0 %2569
        %2571 = vrot.lane.b32.xlu0 %v2528, 16
        %v2572 = vpop.permute.xlu0 %2571
        %2573 = vrot.lane.b32.xlu0 %v2535, 16
        %v2574 = vpop.permute.xlu0 %2573
        %2575 = vrot.lane.b32.xlu0 %v2536, 16
        %v2576 = vpop.permute.xlu0 %2575
        %2577 = vrot.lane.b32.xlu0 %v2543, 16
        %v2578 = vpop.permute.xlu0 %2577
        %2579 = vrot.lane.b32.xlu0 %v2544, 16
        %v2580 = vpop.permute.xlu0 %2579
        %2581 = vrot.lane.b32.xlu0 %v2551, 16
        %v2582 = vpop.permute.xlu0 %2581
        %2583 = vrot.lane.b32.xlu0 %v2552, 16
        %v2584 = vpop.permute.xlu0 %2583
        %v2585 = vrot.slane %v2554, 4
        %v2586 = vrot.slane %v2556, 4
        %v2587 = vrot.slane %v2558, 4
        %v2588 = vrot.slane %v2560, 4
        %v2589 = vrot.slane %v2562, 4
        %v2590 = vrot.slane %v2564, 4
        %v2591 = vrot.slane %v2566, 4
        %v2592 = vrot.slane %v2568, 4
        %v2593 = vrot.slane %v2570, 4
        %v2594 = vrot.slane %v2572, 4
        %v2595 = vrot.slane %v2574, 4
        %v2596 = vrot.slane %v2576, 4
        %v2597 = vrot.slane %v2578, 4
        %v2598 = vrot.slane %v2580, 4
        %v2599 = vrot.slane %v2582, 4
        %v2600 = vrot.slane %v2584, 4
        %vm2601 = vcmask 130048
        %v2602 = vsel %vm2601, %v2585, %v2554
        %v2603 = vsel %vm2601, %v2586, %v2556
        %v2604 = vsel %vm2601, %v2587, %v2558
        %v2605 = vsel %vm2601, %v2588, %v2560
        %v2606 = vsel %vm2601, %v2589, %v2562
        %v2607 = vsel %vm2601, %v2590, %v2564
        %v2608 = vsel %vm2601, %v2591, %v2566
        %v2609 = vsel %vm2601, %v2592, %v2568
        %v2610 = vsel %vm2601, %v2593, %v2570
        %v2611 = vsel %vm2601, %v2594, %v2572
        %v2612 = vsel %vm2601, %v2595, %v2574
        %v2613 = vsel %vm2601, %v2596, %v2576
        %v2614 = vsel %vm2601, %v2597, %v2578
        %v2615 = vsel %vm2601, %v2598, %v2580
        %v2616 = vsel %vm2601, %v2599, %v2582
        %v2617 = vsel %vm2601, %v2600, %v2584
        %s2634 = scalar_lea.vmem [#allocation3], 16
        %vm2635 = vcmask 1043584
        %vm2636 = vmand %vm2635, %vm474
        %vm2637 = vcmask 130052
        %vm2638 = vsmask.f32 7954
        %vm2639 = vmand %vm2637, %vm2638
        %vm2640 = vmor %vm2639, %vm2636
        %v2641 = vld [vmem:[%s2634] sm:$0xff]
        %v2642 = vsel %vm2640, %v2602, %v2641
        %2643 = vst [vmem:[%s2634] sm:$0xff] %v2642
        %vm2644 = vcmask 1040512
        %vm2645 = vmand %vm2644, %vm480
        %vm2646 = vcmask 126980
        %vm2647 = vsmask.f32 4352
        %vm2648 = vmand %vm2646, %vm2647
        %vm2649 = vmor %vm2648, %vm2645
        %v2650 = vld [vmem:[%s2634 + $0x8] sm:$0x11]
        %v2651 = vsel %vm2649, %v2603, %v2650
        %2652 = vst [vmem:[%s2634 + $0x8] sm:$0x11] %v2651
        %v2653 = vld [vmem:[%s2634 + $0x10] sm:$0xff]
        %v2654 = vsel %vm2640, %v2604, %v2653
        %2655 = vst [vmem:[%s2634 + $0x10] sm:$0xff] %v2654
        %v2656 = vld [vmem:[%s2634 + $0x18] sm:$0x11]
        %v2657 = vsel %vm2649, %v2605, %v2656
        %2658 = vst [vmem:[%s2634 + $0x18] sm:$0x11] %v2657
        %v2659 = vld [vmem:[%s2634 + $0x20] sm:$0xff]
        %v2660 = vsel %vm2640, %v2606, %v2659
        %2661 = vst [vmem:[%s2634 + $0x20] sm:$0xff] %v2660
        %v2662 = vld [vmem:[%s2634 + $0x28] sm:$0x11]
        %v2663 = vsel %vm2649, %v2607, %v2662
        %2664 = vst [vmem:[%s2634 + $0x28] sm:$0x11] %v2663
        %v2665 = vld [vmem:[%s2634 + $0x30] sm:$0xff]
        %v2666 = vsel %vm2640, %v2608, %v2665
        %2667 = vst [vmem:[%s2634 + $0x30] sm:$0xff] %v2666
        %v2668 = vld [vmem:[%s2634 + $0x38] sm:$0x11]
        %v2669 = vsel %vm2649, %v2609, %v2668
        %2670 = vst [vmem:[%s2634 + $0x38] sm:$0x11] %v2669
        %v2671 = vld [vmem:[%s2634 + $0x40] sm:$0xff]
        %v2672 = vsel %vm2640, %v2610, %v2671
        %2673 = vst [vmem:[%s2634 + $0x40] sm:$0xff] %v2672
        %v2674 = vld [vmem:[%s2634 + $0x48] sm:$0x11]
        %v2675 = vsel %vm2649, %v2611, %v2674
        %2676 = vst [vmem:[%s2634 + $0x48] sm:$0x11] %v2675
        %v2677 = vld [vmem:[%s2634 + $0x50] sm:$0xff]
        %v2678 = vsel %vm2640, %v2612, %v2677
        %2679 = vst [vmem:[%s2634 + $0x50] sm:$0xff] %v2678
        %v2680 = vld [vmem:[%s2634 + $0x58] sm:$0x11]
        %v2681 = vsel %vm2649, %v2613, %v2680
        %2682 = vst [vmem:[%s2634 + $0x58] sm:$0x11] %v2681
        %v2683 = vld [vmem:[%s2634 + $0x60] sm:$0xff]
        %v2684 = vsel %vm2640, %v2614, %v2683
        %2685 = vst [vmem:[%s2634 + $0x60] sm:$0xff] %v2684
        %v2686 = vld [vmem:[%s2634 + $0x68] sm:$0x11]
        %v2687 = vsel %vm2649, %v2615, %v2686
        %2688 = vst [vmem:[%s2634 + $0x68] sm:$0x11] %v2687
        %v2689 = vld [vmem:[%s2634 + $0x70] sm:$0xff]
        %v2690 = vsel %vm2640, %v2616, %v2689
        %2691 = vst [vmem:[%s2634 + $0x70] sm:$0xff] %v2690
        %v2692 = vld [vmem:[%s2634 + $0x78] sm:$0x11]
        %v2693 = vsel %vm2649, %v2617, %v2692
        %2694 = vst [vmem:[%s2634 + $0x78] sm:$0x11] %v2693
        %v2695 = vld [vmem:[#allocation3] sm:$0xff]
        %v2696 = vld [vmem:[#allocation3 + $0x10] sm:$0xff]
        %v2697 = vld [vmem:[#allocation3 + $0x20] sm:$0xff]
        %v2698 = vld [vmem:[#allocation3 + $0x30] sm:$0xff]
        %v2699 = vld [vmem:[#allocation3 + $0x40] sm:$0xff]
        %v2700 = vld [vmem:[#allocation3 + $0x50] sm:$0xff]
        %v2701 = vld [vmem:[#allocation3 + $0x60] sm:$0xff]
        %v2702 = vld [vmem:[#allocation3 + $0x70] sm:$0xff]
        %v2703 = vld [vmem:[#allocation9] sm:$0xf]
        %v2704 = vld [vmem:[#allocation9 + $0x4] sm:$0xf]
        %v2705 = vld [vmem:[#allocation9 + $0x8] sm:$0xf]
        %v2706 = vld [vmem:[#allocation9 + $0xc] sm:$0xf]
        %v2707 = vld [vmem:[#allocation9 + $0x10] sm:$0xf]
        %v2708 = vld [vmem:[#allocation9 + $0x14] sm:$0xf]
        %v2709 = vld [vmem:[#allocation9 + $0x18] sm:$0xf]
        %v2710 = vld [vmem:[#allocation9 + $0x1c] sm:$0xf]
        %v2711 = vld [vmem:[#allocation9 + $0x20] sm:$0xf]
        %v2712 = vld [vmem:[#allocation9 + $0x24] sm:$0xf]
        %v2713 = vld [vmem:[#allocation9 + $0x28] sm:$0xf]
        %v2714 = vld [vmem:[#allocation9 + $0x2c] sm:$0xf]
        %v2715 = vld [vmem:[#allocation9 + $0x30] sm:$0xf]
        %v2716 = vld [vmem:[#allocation9 + $0x34] sm:$0xf]
        %v2717 = vld [vmem:[#allocation9 + $0x38] sm:$0xf]
        %v2718 = vld [vmem:[#allocation9 + $0x3c] sm:$0xf]
        %v2719 = vld [vmem:[#allocation9 + $0x40] sm:$0xf]
        %v2720 = vld [vmem:[#allocation9 + $0x44] sm:$0xf]
        %v2721 = vld [vmem:[#allocation9 + $0x48] sm:$0xf]
        %v2722 = vld [vmem:[#allocation9 + $0x4c] sm:$0xf]
        %v2723 = vld [vmem:[#allocation3 + $0x8] sm:$0x11]
        %v2724 = vld [vmem:[#allocation3 + $0x18] sm:$0x11]
        %v2725 = vld [vmem:[#allocation3 + $0x28] sm:$0x11]
        %v2726 = vld [vmem:[#allocation3 + $0x38] sm:$0x11]
        %v2727 = vld [vmem:[#allocation3 + $0x48] sm:$0x11]
        %v2728 = vld [vmem:[#allocation3 + $0x58] sm:$0x11]
        %v2729 = vld [vmem:[#allocation3 + $0x68] sm:$0x11]
        %v2730 = vld [vmem:[#allocation3 + $0x78] sm:$0x11]
        %v2732 = vshrl.u32 %v2695, 16
        %v2734 = vrot.slane %v2732, 4
        %v2735 = vshll.u32 %v2695, 16
        %v2737 = vrot.slane %v2735, 5
        %v2738 = vor.u32 %v2734, %v2737
        %v2739 = vrot.slane %v2738, 4
        %v2741 = vshll.u32 %v2723, 16
        %v2743 = vrot.slane %v2741, 5
        %v2744 = vsel %vm550, %v2739, %v2743
        %v2746 = vshrl.u32 %v2696, 16
        %v2748 = vrot.slane %v2746, 4
        %v2749 = vshll.u32 %v2696, 16
        %v2751 = vrot.slane %v2749, 5
        %v2752 = vor.u32 %v2748, %v2751
        %v2753 = vrot.slane %v2752, 4
        %v2755 = vshll.u32 %v2724, 16
        %v2757 = vrot.slane %v2755, 5
        %v2758 = vsel %vm550, %v2753, %v2757
        %v2760 = vshrl.u32 %v2697, 16
        %v2762 = vrot.slane %v2760, 4
        %v2763 = vshll.u32 %v2697, 16
        %v2765 = vrot.slane %v2763, 5
        %v2766 = vor.u32 %v2762, %v2765
        %v2767 = vrot.slane %v2766, 4
        %v2769 = vshll.u32 %v2725, 16
        %v2771 = vrot.slane %v2769, 5
        %v2772 = vsel %vm550, %v2767, %v2771
        %v2774 = vshrl.u32 %v2698, 16
        %v2776 = vrot.slane %v2774, 4
        %v2777 = vshll.u32 %v2698, 16
        %v2779 = vrot.slane %v2777, 5
        %v2780 = vor.u32 %v2776, %v2779
        %v2781 = vrot.slane %v2780, 4
        %v2783 = vshll.u32 %v2726, 16
        %v2785 = vrot.slane %v2783, 5
        %v2786 = vsel %vm550, %v2781, %v2785
        %v2788 = vshrl.u32 %v2699, 16
        %v2790 = vrot.slane %v2788, 4
        %v2791 = vshll.u32 %v2699, 16
        %v2793 = vrot.slane %v2791, 5
        %v2794 = vor.u32 %v2790, %v2793
        %v2795 = vrot.slane %v2794, 4
        %v2797 = vshll.u32 %v2727, 16
        %v2799 = vrot.slane %v2797, 5
        %v2800 = vsel %vm550, %v2795, %v2799
        %v2802 = vshrl.u32 %v2700, 16
        %v2804 = vrot.slane %v2802, 4
        %v2805 = vshll.u32 %v2700, 16
        %v2807 = vrot.slane %v2805, 5
        %v2808 = vor.u32 %v2804, %v2807
        %v2809 = vrot.slane %v2808, 4
        %v2811 = vshll.u32 %v2728, 16
        %v2813 = vrot.slane %v2811, 5
        %v2814 = vsel %vm550, %v2809, %v2813
        %v2816 = vshrl.u32 %v2701, 16
        %v2818 = vrot.slane %v2816, 4
        %v2819 = vshll.u32 %v2701, 16
        %v2821 = vrot.slane %v2819, 5
        %v2822 = vor.u32 %v2818, %v2821
        %v2823 = vrot.slane %v2822, 4
        %v2825 = vshll.u32 %v2729, 16
        %v2827 = vrot.slane %v2825, 5
        %v2828 = vsel %vm550, %v2823, %v2827
        %v2830 = vshrl.u32 %v2702, 16
        %v2832 = vrot.slane %v2830, 4
        %v2833 = vshll.u32 %v2702, 16
        %v2835 = vrot.slane %v2833, 5
        %v2836 = vor.u32 %v2832, %v2835
        %v2837 = vrot.slane %v2836, 4
        %v2839 = vshll.u32 %v2730, 16
        %v2841 = vrot.slane %v2839, 5
        %v2842 = vsel %vm550, %v2837, %v2841
        %s2843 = scalar_lea.vmem [#allocation9], 80
        %v2844 = vld [vmem:[%s2843] sm:$0xf]
        %v2845 = vld [vmem:[%s2843 + $0x4] sm:$0xf]
        %v2846 = vld [vmem:[%s2843 + $0x8] sm:$0xf]
        %v2847 = vld [vmem:[%s2843 + $0xc] sm:$0xf]
        %v2848 = vld [vmem:[%s2843 + $0x10] sm:$0xf]
        %v2849 = vld [vmem:[%s2843 + $0x14] sm:$0xf]
        %v2850 = vld [vmem:[%s2843 + $0x18] sm:$0xf]
        %v2851 = vld [vmem:[%s2843 + $0x1c] sm:$0xf]
        %v2852 = vld [vmem:[%s2843 + $0x20] sm:$0xf]
        %v2853 = vld [vmem:[%s2843 + $0x24] sm:$0xf]
        %v2854 = vld [vmem:[%s2843 + $0x28] sm:$0xf]
        %v2855 = vld [vmem:[%s2843 + $0x2c] sm:$0xf]
        %v2856 = vld [vmem:[%s2843 + $0x30] sm:$0xf]
        %v2857 = vld [vmem:[%s2843 + $0x34] sm:$0xf]
        %v2858 = vld [vmem:[%s2843 + $0x38] sm:$0xf]
        %v2859 = vld [vmem:[%s2843 + $0x3c] sm:$0xf]
        %v2860 = vld [vmem:[%s2843 + $0x40] sm:$0xf]
        %v2861 = vld [vmem:[%s2843 + $0x44] sm:$0xf]
        %v2862 = vld [vmem:[%s2843 + $0x48] sm:$0xf]
        %v2863 = vld [vmem:[%s2843 + $0x4c] sm:$0xf]
        %v2864 = vunpack.c.l.b16 %v2744
        %v2865 = vunpack.c.h.b16 %v2744
        %v2866 = vunpack.c.l.b16 %v2758
        %v2867 = vunpack.c.h.b16 %v2758
        %v2868 = vunpack.c.l.b16 %v2772
        %v2869 = vunpack.c.h.b16 %v2772
        %v2870 = vunpack.c.l.b16 %v2786
        %v2871 = vunpack.c.h.b16 %v2786
        %v2872 = vunpack.c.l.b16 %v2800
        %v2873 = vunpack.c.h.b16 %v2800
        %v2874 = vunpack.c.l.b16 %v2814
        %v2875 = vunpack.c.h.b16 %v2814
        %v2876 = vunpack.c.l.b16 %v2828
        %v2877 = vunpack.c.h.b16 %v2828
        %v2878 = vunpack.c.l.b16 %v2842
        %v2879 = vunpack.c.h.b16 %v2842
        %v2880 = vpack.c.b16 %v2866, %v2864
        %v2881 = vpack.c.b16 %v2867, %v2865
        %v2882 = vpack.c.b16 %v2870, %v2868
        %v2883 = vpack.c.b16 %v2871, %v2869
        %v2884 = vpack.c.b16 %v2874, %v2872
        %v2885 = vpack.c.b16 %v2875, %v2873
        %v2886 = vpack.c.b16 %v2878, %v2876
        %v2887 = vpack.c.b16 %v2879, %v2877
        %v2912 = vunpack.c.l.b16 %v2844
        %v2913 = vunpack.c.l.b16 %v2845
        %v2914 = vunpack.c.l.b16 %v2846
        %v2915 = vunpack.c.l.b16 %v2847
        %v2916 = vunpack.c.l.b16 %v2848
        %v2917 = vunpack.c.l.b16 %v2849
        %v2918 = vunpack.c.l.b16 %v2850
        %v2919 = vunpack.c.l.b16 %v2851
        %v2920 = vunpack.c.l.b16 %v2852
        %v2921 = vunpack.c.l.b16 %v2853
        %v2922 = vunpack.c.l.b16 %v2854
        %v2923 = vunpack.c.l.b16 %v2855
        %v2924 = vunpack.c.l.b16 %v2856
        %v2925 = vunpack.c.l.b16 %v2857
        %v2926 = vunpack.c.l.b16 %v2858
        %v2927 = vunpack.c.l.b16 %v2859
        %v2928 = vunpack.c.l.b16 %v2860
        %v2929 = vunpack.c.l.b16 %v2861
        %v2930 = vunpack.c.l.b16 %v2862
        %v2931 = vunpack.c.l.b16 %v2863
        %v2932 = vpack.c.b16 %v2913, %v2912
        %v2933 = vpack.c.b16 %v2915, %v2914
        %v2934 = vpack.c.b16 %v2917, %v2916
        %v2935 = vpack.c.b16 %v2919, %v2918
        %v2936 = vpack.c.b16 %v2921, %v2920
        %v2937 = vpack.c.b16 %v2923, %v2922
        %v2938 = vpack.c.b16 %v2925, %v2924
        %v2939 = vpack.c.b16 %v2927, %v2926
        %v2940 = vpack.c.b16 %v2929, %v2928
        %v2941 = vpack.c.b16 %v2931, %v2930
        %vm2952 = vcmask 261120
        %v2954 = vsel %vm2952, %v2881, 0
        %v2957 = vsel %vm2952, %v2883, 0
        %v2960 = vsel %vm2952, %v2885, 0
        %v2963 = vsel %vm2952, %v2887, 0
        %2965 = vmatprep.subr.bf16.mxu0 0
        %2966 = vmatpush1.bf16.msra.mxu0 %v2932
        %2967 = vmatprep.subr.bf16.mxu0 0
        %2968 = vmatpush1.bf16.msra.mxu0 %v2933
        %2969 = vmatprep.subr.bf16.mxu0 0
        %2970 = vmatpush1.bf16.msra.mxu0 %v2934
        %2971 = vmatprep.subr.bf16.mxu0 0
        %2972 = vmatpush1.bf16.msra.mxu0 %v2935
        %2973 = vmatprep.subr.bf16.mxu0 0
        %2974 = vmatpush1.bf16.msra.mxu0 %v2936
        %2975 = vmatprep.subr.bf16.mxu0 0
        %2976 = vmatpush1.bf16.msra.mxu0 %v2937
        %2977 = vmatprep.subr.bf16.mxu0 0
        %2978 = vmatpush1.bf16.msra.mxu0 %v2938
        %2979 = vmatprep.subr.bf16.mxu0 0
        %2980 = vmatpush1.bf16.msra.mxu0 %v2939
        %2981 = vmatprep.subr.bf16.mxu0 0
        %2982 = vmatpush1.bf16.msra.mxu0 %v2940
        %2983 = vmatprep.subr.bf16.mxu0 0
        %2984 = vmatpush1.bf16.msra.mxu0 %v2941
        %2985 = vmatprep.subr.bf16.mxu0 0
        %2986 = vmatpush1.bf16.msra.mxu0 0
        %2987 = vmatprep.subr.bf16.mxu0 0
        %2988 = vmatpush1.bf16.msra.mxu0 0
        %2989 = vmatprep.subr.bf16.mxu0 0
        %2990 = vmatpush1.bf16.msra.mxu0 0
        %2991 = vmatprep.subr.bf16.mxu0 0
        %2992 = vmatpush1.bf16.msra.mxu0 0
        %2993 = vmatprep.subr.bf16.mxu0 0
        %2994 = vmatpush1.bf16.msra.mxu0 0
        %2995 = vmatprep.subr.bf16.mxu0 0
        %2996 = vmatpush1.bf16.msra.mxu0 0
        %2997 = vmatprep.mubr.bf16.mxu0 %v2954
        %2998 = vmatmul.mubr.bf16.gmra.mrb[0].mxu0 %v2880
        %v2999 = vpop.f32.mrb[0].mxu0
        %v3000 = vadd.f32 0.0, %v2999
        %v3001 = vpop.f32.mrb[0].mxu0
        %v3002 = vpop.f32.mrb[0].mxu0
        %v3003 = vadd.f32 0.0, %v3002
        %v3004 = vpop.f32.mrb[0].mxu0
        %3005 = vmatprep.mubr.bf16.mxu0 %v2957
        %3006 = vmatmul.mubr.bf16.gmra.mrb[0].mxu0 %v2882
        %v3007 = vpop.f32.mrb[0].mxu0
        %v3008 = vadd.f32 0.0, %v3007
        %v3009 = vpop.f32.mrb[0].mxu0
        %v3010 = vpop.f32.mrb[0].mxu0
        %v3011 = vadd.f32 0.0, %v3010
        %v3012 = vpop.f32.mrb[0].mxu0
        %3013 = vmatprep.mubr.bf16.mxu0 %v2960
        %3014 = vmatmul.mubr.bf16.gmra.mrb[0].mxu0 %v2884
        %v3015 = vpop.f32.mrb[0].mxu0
        %v3016 = vadd.f32 0.0, %v3015
        %v3017 = vpop.f32.mrb[0].mxu0
        %v3018 = vpop.f32.mrb[0].mxu0
        %v3019 = vadd.f32 0.0, %v3018
        %v3020 = vpop.f32.mrb[0].mxu0
        %3021 = vmatprep.mubr.bf16.mxu0 %v2963
        %3022 = vmatmul.mubr.bf16.gmra.mrb[0].mxu0 %v2886
        %v3023 = vpop.f32.mrb[0].mxu0
        %v3024 = vadd.f32 0.0, %v3023
        %v3025 = vpop.f32.mrb[0].mxu0
        %v3026 = vpop.f32.mrb[0].mxu0
        %v3027 = vadd.f32 0.0, %v3026
        %v3028 = vpop.f32.mrb[0].mxu0
        %3029 = vdwg.mxu0
        %v3038 = vunpack.c.l.b16 %v2695
        %v3039 = vunpack.c.h.b16 %v2695
        %v3040 = vunpack.c.l.b16 %v2696
        %v3041 = vunpack.c.h.b16 %v2696
        %v3042 = vunpack.c.l.b16 %v2697
        %v3043 = vunpack.c.h.b16 %v2697
        %v3044 = vunpack.c.l.b16 %v2698
        %v3045 = vunpack.c.h.b16 %v2698
        %v3046 = vunpack.c.l.b16 %v2699
        %v3047 = vunpack.c.h.b16 %v2699
        %v3048 = vunpack.c.l.b16 %v2700
        %v3049 = vunpack.c.h.b16 %v2700
        %v3050 = vunpack.c.l.b16 %v2701
        %v3051 = vunpack.c.h.b16 %v2701
        %v3052 = vunpack.c.l.b16 %v2702
        %v3053 = vunpack.c.h.b16 %v2702
        %v3054 = vpack.c.b16 %v3040, %v3038
        %v3055 = vpack.c.b16 %v3041, %v3039
        %v3056 = vpack.c.b16 %v3044, %v3042
        %v3057 = vpack.c.b16 %v3045, %v3043
        %v3058 = vpack.c.b16 %v3048, %v3046
        %v3059 = vpack.c.b16 %v3049, %v3047
        %v3060 = vpack.c.b16 %v3052, %v3050
        %v3061 = vpack.c.b16 %v3053, %v3051
        %v3086 = vunpack.c.l.b16 %v2703
        %v3087 = vunpack.c.l.b16 %v2704
        %v3088 = vunpack.c.l.b16 %v2705
        %v3089 = vunpack.c.l.b16 %v2706
        %v3090 = vunpack.c.l.b16 %v2707
        %v3091 = vunpack.c.l.b16 %v2708
        %v3092 = vunpack.c.l.b16 %v2709
        %v3093 = vunpack.c.l.b16 %v2710
        %v3094 = vunpack.c.l.b16 %v2711
        %v3095 = vunpack.c.l.b16 %v2712
        %v3096 = vunpack.c.l.b16 %v2713
        %v3097 = vunpack.c.l.b16 %v2714
        %v3098 = vunpack.c.l.b16 %v2715
        %v3099 = vunpack.c.l.b16 %v2716
        %v3100 = vunpack.c.l.b16 %v2717
        %v3101 = vunpack.c.l.b16 %v2718
        %v3102 = vunpack.c.l.b16 %v2719
        %v3103 = vunpack.c.l.b16 %v2720
        %v3104 = vunpack.c.l.b16 %v2721
        %v3105 = vunpack.c.l.b16 %v2722
        %v3106 = vpack.c.b16 %v3087, %v3086
        %v3107 = vpack.c.b16 %v3089, %v3088
        %v3108 = vpack.c.b16 %v3091, %v3090
        %v3109 = vpack.c.b16 %v3093, %v3092
        %v3110 = vpack.c.b16 %v3095, %v3094
        %v3111 = vpack.c.b16 %v3097, %v3096
        %v3112 = vpack.c.b16 %v3099, %v3098
        %v3113 = vpack.c.b16 %v3101, %v3100
        %v3114 = vpack.c.b16 %v3103, %v3102
        %v3115 = vpack.c.b16 %v3105, %v3104
        %v3127 = vsel %vm2952, %v3055, 0
        %v3130 = vsel %vm2952, %v3057, 0
        %v3133 = vsel %vm2952, %v3059, 0
        %v3136 = vsel %vm2952, %v3061, 0
        %3138 = vmatprep.subr.bf16.mxu0 0
        %3139 = vmatpush1.bf16.msra.mxu0 %v3106
        %3140 = vmatprep.subr.bf16.mxu0 0
        %3141 = vmatpush1.bf16.msra.mxu0 %v3107
        %3142 = vmatprep.subr.bf16.mxu0 0
        %3143 = vmatpush1.bf16.msra.mxu0 %v3108
        %3144 = vmatprep.subr.bf16.mxu0 0
        %3145 = vmatpush1.bf16.msra.mxu0 %v3109
        %3146 = vmatprep.subr.bf16.mxu0 0
        %3147 = vmatpush1.bf16.msra.mxu0 %v3110
        %3148 = vmatprep.subr.bf16.mxu0 0
        %3149 = vmatpush1.bf16.msra.mxu0 %v3111
        %3150 = vmatprep.subr.bf16.mxu0 0
        %3151 = vmatpush1.bf16.msra.mxu0 %v3112
        %3152 = vmatprep.subr.bf16.mxu0 0
        %3153 = vmatpush1.bf16.msra.mxu0 %v3113
        %3154 = vmatprep.subr.bf16.mxu0 0
        %3155 = vmatpush1.bf16.msra.mxu0 %v3114
        %3156 = vmatprep.subr.bf16.mxu0 0
        %3157 = vmatpush1.bf16.msra.mxu0 %v3115
        %3158 = vmatprep.subr.bf16.mxu0 0
        %3159 = vmatpush1.bf16.msra.mxu0 0
        %3160 = vmatprep.subr.bf16.mxu0 0
        %3161 = vmatpush1.bf16.msra.mxu0 0
        %3162 = vmatprep.subr.bf16.mxu0 0
        %3163 = vmatpush1.bf16.msra.mxu0 0
        %3164 = vmatprep.subr.bf16.mxu0 0
        %3165 = vmatpush1.bf16.msra.mxu0 0
        %3166 = vmatprep.subr.bf16.mxu0 0
        %3167 = vmatpush1.bf16.msra.mxu0 0
        %3168 = vmatprep.subr.bf16.mxu0 0
        %3169 = vmatpush1.bf16.msra.mxu0 0
        %3170 = vmatprep.mubr.bf16.mxu0 %v3127
        %3171 = vmatmul.mubr.bf16.gmra.mrb[0].mxu0 %v3054
        %v3172 = vpop.f32.mrb[0].mxu0
        %v3173 = vadd.f32 %v3000, %v3172
        %v3174 = vpop.f32.mrb[0].mxu0
        %v3175 = vpop.f32.mrb[0].mxu0
        %v3176 = vadd.f32 %v3003, %v3175
        %v3177 = vpop.f32.mrb[0].mxu0
        %3178 = vmatprep.mubr.bf16.mxu0 %v3130
        %3179 = vmatmul.mubr.bf16.gmra.mrb[0].mxu0 %v3056
        %v3180 = vpop.f32.mrb[0].mxu0
        %v3181 = vadd.f32 %v3008, %v3180
        %v3182 = vpop.f32.mrb[0].mxu0
        %v3183 = vpop.f32.mrb[0].mxu0
        %v3184 = vadd.f32 %v3011, %v3183
        %v3185 = vpop.f32.mrb[0].mxu0
        %3186 = vmatprep.mubr.bf16.mxu0 %v3133
        %3187 = vmatmul.mubr.bf16.gmra.mrb[0].mxu0 %v3058
        %v3188 = vpop.f32.mrb[0].mxu0
        %v3189 = vadd.f32 %v3016, %v3188
        %v3190 = vpop.f32.mrb[0].mxu0
        %v3191 = vpop.f32.mrb[0].mxu0
        %v3192 = vadd.f32 %v3019, %v3191
        %v3193 = vpop.f32.mrb[0].mxu0
        %3194 = vmatprep.mubr.bf16.mxu0 %v3136
        %3195 = vmatmul.mubr.bf16.gmra.mrb[0].mxu0 %v3060
        %v3196 = vpop.f32.mrb[0].mxu0
        %v3197 = vadd.f32 %v3024, %v3196
        %v3198 = vpop.f32.mrb[0].mxu0
        %v3199 = vpop.f32.mrb[0].mxu0
        %v3200 = vadd.f32 %v3027, %v3199
        %v3201 = vpop.f32.mrb[0].mxu0
        %3202 = vdwg.mxu0
        %v3203 = vld [vmem:[#allocation3] sm:$0xee]
        %v3204 = vld [vmem:[#allocation3 + $0x10] sm:$0xee]
        %v3205 = vld [vmem:[#allocation3 + $0x20] sm:$0xee]
        %v3206 = vld [vmem:[#allocation3 + $0x30] sm:$0xee]
        %v3207 = vld [vmem:[#allocation3 + $0x40] sm:$0xee]
        %v3208 = vld [vmem:[#allocation3 + $0x50] sm:$0xee]
        %v3209 = vld [vmem:[#allocation3 + $0x60] sm:$0xee]
        %v3210 = vld [vmem:[#allocation3 + $0x70] sm:$0xee]
        %v3227 = vrot.slane %v3203, 5
        %v3228 = vrot.slane %v3227, 4
        %v3229 = vrot.slane %v2723, 5
        %v3230 = vsel %vm918, %v3228, %v3229
        %v3231 = vrot.slane %v3204, 5
        %v3232 = vrot.slane %v3231, 4
        %v3233 = vrot.slane %v2724, 5
        %v3234 = vsel %vm918, %v3232, %v3233
        %v3235 = vrot.slane %v3205, 5
        %v3236 = vrot.slane %v3235, 4
        %v3237 = vrot.slane %v2725, 5
        %v3238 = vsel %vm918, %v3236, %v3237
        %v3239 = vrot.slane %v3206, 5
        %v3240 = vrot.slane %v3239, 4
        %v3241 = vrot.slane %v2726, 5
        %v3242 = vsel %vm918, %v3240, %v3241
        %v3243 = vrot.slane %v3207, 5
        %v3244 = vrot.slane %v3243, 4
        %v3245 = vrot.slane %v2727, 5
        %v3246 = vsel %vm918, %v3244, %v3245
        %v3247 = vrot.slane %v3208, 5
        %v3248 = vrot.slane %v3247, 4
        %v3249 = vrot.slane %v2728, 5
        %v3250 = vsel %vm918, %v3248, %v3249
        %v3251 = vrot.slane %v3209, 5
        %v3252 = vrot.slane %v3251, 4
        %v3253 = vrot.slane %v2729, 5
        %v3254 = vsel %vm918, %v3252, %v3253
        %v3255 = vrot.slane %v3210, 5
        %v3256 = vrot.slane %v3255, 4
        %v3257 = vrot.slane %v2730, 5
        %v3258 = vsel %vm918, %v3256, %v3257
        %s3259 = scalar_lea.vmem [#allocation9], 160
        %v3260 = vld [vmem:[%s3259] sm:$0xf]
        %v3261 = vld [vmem:[%s3259 + $0x4] sm:$0xf]
        %v3262 = vld [vmem:[%s3259 + $0x8] sm:$0xf]
        %v3263 = vld [vmem:[%s3259 + $0xc] sm:$0xf]
        %v3264 = vld [vmem:[%s3259 + $0x10] sm:$0xf]
        %v3265 = vld [vmem:[%s3259 + $0x14] sm:$0xf]
        %v3266 = vld [vmem:[%s3259 + $0x18] sm:$0xf]
        %v3267 = vld [vmem:[%s3259 + $0x1c] sm:$0xf]
        %v3268 = vld [vmem:[%s3259 + $0x20] sm:$0xf]
        %v3269 = vld [vmem:[%s3259 + $0x24] sm:$0xf]
        %v3270 = vld [vmem:[%s3259 + $0x28] sm:$0xf]
        %v3271 = vld [vmem:[%s3259 + $0x2c] sm:$0xf]
        %v3272 = vld [vmem:[%s3259 + $0x30] sm:$0xf]
        %v3273 = vld [vmem:[%s3259 + $0x34] sm:$0xf]
        %v3274 = vld [vmem:[%s3259 + $0x38] sm:$0xf]
        %v3275 = vld [vmem:[%s3259 + $0x3c] sm:$0xf]
        %v3276 = vld [vmem:[%s3259 + $0x40] sm:$0xf]
        %v3277 = vld [vmem:[%s3259 + $0x44] sm:$0xf]
        %v3278 = vld [vmem:[%s3259 + $0x48] sm:$0xf]
        %v3279 = vld [vmem:[%s3259 + $0x4c] sm:$0xf]
        %v3280 = vunpack.c.l.b16 %v3230
        %v3281 = vunpack.c.h.b16 %v3230
        %v3282 = vunpack.c.l.b16 %v3234
        %v3283 = vunpack.c.h.b16 %v3234
        %v3284 = vunpack.c.l.b16 %v3238
        %v3285 = vunpack.c.h.b16 %v3238
        %v3286 = vunpack.c.l.b16 %v3242
        %v3287 = vunpack.c.h.b16 %v3242
        %v3288 = vunpack.c.l.b16 %v3246
        %v3289 = vunpack.c.h.b16 %v3246
        %v3290 = vunpack.c.l.b16 %v3250
        %v3291 = vunpack.c.h.b16 %v3250
        %v3292 = vunpack.c.l.b16 %v3254
        %v3293 = vunpack.c.h.b16 %v3254
        %v3294 = vunpack.c.l.b16 %v3258
        %v3295 = vunpack.c.h.b16 %v3258
        %v3296 = vpack.c.b16 %v3282, %v3280
        %v3297 = vpack.c.b16 %v3283, %v3281
        %v3298 = vpack.c.b16 %v3286, %v3284
        %v3299 = vpack.c.b16 %v3287, %v3285
        %v3300 = vpack.c.b16 %v3290, %v3288
        %v3301 = vpack.c.b16 %v3291, %v3289
        %v3302 = vpack.c.b16 %v3294, %v3292
        %v3303 = vpack.c.b16 %v3295, %v3293
        %v3328 = vunpack.c.l.b16 %v3260
        %v3329 = vunpack.c.l.b16 %v3261
        %v3330 = vunpack.c.l.b16 %v3262
        %v3331 = vunpack.c.l.b16 %v3263
        %v3332 = vunpack.c.l.b16 %v3264
        %v3333 = vunpack.c.l.b16 %v3265
        %v3334 = vunpack.c.l.b16 %v3266
        %v3335 = vunpack.c.l.b16 %v3267
        %v3336 = vunpack.c.l.b16 %v3268
        %v3337 = vunpack.c.l.b16 %v3269
        %v3338 = vunpack.c.l.b16 %v3270
        %v3339 = vunpack.c.l.b16 %v3271
        %v3340 = vunpack.c.l.b16 %v3272
        %v3341 = vunpack.c.l.b16 %v3273
        %v3342 = vunpack.c.l.b16 %v3274
        %v3343 = vunpack.c.l.b16 %v3275
        %v3344 = vunpack.c.l.b16 %v3276
        %v3345 = vunpack.c.l.b16 %v3277
        %v3346 = vunpack.c.l.b16 %v3278
        %v3347 = vunpack.c.l.b16 %v3279
        %v3348 = vpack.c.b16 %v3329, %v3328
        %v3349 = vpack.c.b16 %v3331, %v3330
        %v3350 = vpack.c.b16 %v3333, %v3332
        %v3351 = vpack.c.b16 %v3335, %v3334
        %v3352 = vpack.c.b16 %v3337, %v3336
        %v3353 = vpack.c.b16 %v3339, %v3338
        %v3354 = vpack.c.b16 %v3341, %v3340
        %v3355 = vpack.c.b16 %v3343, %v3342
        %v3356 = vpack.c.b16 %v3345, %v3344
        %v3357 = vpack.c.b16 %v3347, %v3346
        %v3369 = vsel %vm2952, %v3297, 0
        %v3372 = vsel %vm2952, %v3299, 0
        %v3375 = vsel %vm2952, %v3301, 0
        %v3378 = vsel %vm2952, %v3303, 0
        %3380 = vmatprep.subr.bf16.mxu0 0
        %3381 = vmatpush1.bf16.msra.mxu0 %v3348
        %3382 = vmatprep.subr.bf16.mxu0 0
        %3383 = vmatpush1.bf16.msra.mxu0 %v3349
        %3384 = vmatprep.subr.bf16.mxu0 0
        %3385 = vmatpush1.bf16.msra.mxu0 %v3350
        %3386 = vmatprep.subr.bf16.mxu0 0
        %3387 = vmatpush1.bf16.msra.mxu0 %v3351
        %3388 = vmatprep.subr.bf16.mxu0 0
        %3389 = vmatpush1.bf16.msra.mxu0 %v3352
        %3390 = vmatprep.subr.bf16.mxu0 0
        %3391 = vmatpush1.bf16.msra.mxu0 %v3353
        %3392 = vmatprep.subr.bf16.mxu0 0
        %3393 = vmatpush1.bf16.msra.mxu0 %v3354
        %3394 = vmatprep.subr.bf16.mxu0 0
        %3395 = vmatpush1.bf16.msra.mxu0 %v3355
        %3396 = vmatprep.subr.bf16.mxu0 0
        %3397 = vmatpush1.bf16.msra.mxu0 %v3356
        %3398 = vmatprep.subr.bf16.mxu0 0
        %3399 = vmatpush1.bf16.msra.mxu0 %v3357
        %3400 = vmatprep.subr.bf16.mxu0 0
        %3401 = vmatpush1.bf16.msra.mxu0 0
        %3402 = vmatprep.subr.bf16.mxu0 0
        %3403 = vmatpush1.bf16.msra.mxu0 0
        %3404 = vmatprep.subr.bf16.mxu0 0
        %3405 = vmatpush1.bf16.msra.mxu0 0
        %3406 = vmatprep.subr.bf16.mxu0 0
        %3407 = vmatpush1.bf16.msra.mxu0 0
        %3408 = vmatprep.subr.bf16.mxu0 0
        %3409 = vmatpush1.bf16.msra.mxu0 0
        %3410 = vmatprep.subr.bf16.mxu0 0
        %3411 = vmatpush1.bf16.msra.mxu0 0
        %3412 = vmatprep.mubr.bf16.mxu0 %v3369
        %3413 = vmatmul.mubr.bf16.gmra.mrb[0].mxu0 %v3296
        %v3414 = vpop.f32.mrb[0].mxu0
        %v3415 = vadd.f32 0.0, %v3414
        %v3416 = vpop.f32.mrb[0].mxu0
        %v3417 = vpop.f32.mrb[0].mxu0
        %v3418 = vadd.f32 0.0, %v3417
        %v3419 = vpop.f32.mrb[0].mxu0
        %3420 = vmatprep.mubr.bf16.mxu0 %v3372
        %3421 = vmatmul.mubr.bf16.gmra.mrb[0].mxu0 %v3298
        %v3422 = vpop.f32.mrb[0].mxu0
        %v3423 = vadd.f32 0.0, %v3422
        %v3424 = vpop.f32.mrb[0].mxu0
        %v3425 = vpop.f32.mrb[0].mxu0
        %v3426 = vadd.f32 0.0, %v3425
        %v3427 = vpop.f32.mrb[0].mxu0
        %3428 = vmatprep.mubr.bf16.mxu0 %v3375
        %3429 = vmatmul.mubr.bf16.gmra.mrb[0].mxu0 %v3300
        %v3430 = vpop.f32.mrb[0].mxu0
        %v3431 = vadd.f32 0.0, %v3430
        %v3432 = vpop.f32.mrb[0].mxu0
        %v3433 = vpop.f32.mrb[0].mxu0
        %v3434 = vadd.f32 0.0, %v3433
        %v3435 = vpop.f32.mrb[0].mxu0
        %3436 = vmatprep.mubr.bf16.mxu0 %v3378
        %3437 = vmatmul.mubr.bf16.gmra.mrb[0].mxu0 %v3302
        %v3438 = vpop.f32.mrb[0].mxu0
        %v3439 = vadd.f32 0.0, %v3438
        %v3440 = vpop.f32.mrb[0].mxu0
        %v3441 = vpop.f32.mrb[0].mxu0
        %v3442 = vadd.f32 0.0, %v3441
        %v3443 = vpop.f32.mrb[0].mxu0
        %3444 = vdwg.mxu0
        %v3445 = vadd.f32 %v3173, %v3415
        %v3446 = vadd.f32 %v3176, %v3418
        %v3447 = vadd.f32 %v3181, %v3423
        %v3448 = vadd.f32 %v3184, %v3426
        %v3449 = vadd.f32 %v3189, %v3431
        %v3450 = vadd.f32 %v3192, %v3434
        %v3451 = vadd.f32 %v3197, %v3439
        %v3452 = vadd.f32 %v3200, %v3442
        %v3453 = vld [vmem:[%s2634] sm:$0xff]
        %v3454 = vld [vmem:[%s2634 + $0x10] sm:$0xff]
        %v3455 = vld [vmem:[%s2634 + $0x20] sm:$0xff]
        %v3456 = vld [vmem:[%s2634 + $0x30] sm:$0xff]
        %v3457 = vld [vmem:[%s2634 + $0x40] sm:$0xff]
        %v3458 = vld [vmem:[%s2634 + $0x50] sm:$0xff]
        %v3459 = vld [vmem:[%s2634 + $0x60] sm:$0xff]
        %v3460 = vld [vmem:[%s2634 + $0x70] sm:$0xff]
        %s3461 = scalar_lea.vmem [#allocation9], 240
        %v3462 = vld [vmem:[%s3461] sm:$0xf]
        %v3463 = vld [vmem:[%s3461 + $0x4] sm:$0xf]
        %v3464 = vld [vmem:[%s3461 + $0x8] sm:$0xf]
        %v3465 = vld [vmem:[%s3461 + $0xc] sm:$0xf]
        %v3466 = vld [vmem:[%s3461 + $0x10] sm:$0xf]
        %v3467 = vld [vmem:[%s3461 + $0x14] sm:$0xf]
        %v3468 = vld [vmem:[%s3461 + $0x18] sm:$0xf]
        %v3469 = vld [vmem:[%s3461 + $0x1c] sm:$0xf]
        %v3470 = vld [vmem:[%s3461 + $0x20] sm:$0xf]
        %v3471 = vld [vmem:[%s3461 + $0x24] sm:$0xf]
        %v3472 = vld [vmem:[%s3461 + $0x28] sm:$0xf]
        %v3473 = vld [vmem:[%s3461 + $0x2c] sm:$0xf]
        %v3474 = vld [vmem:[%s3461 + $0x30] sm:$0xf]
        %v3475 = vld [vmem:[%s3461 + $0x34] sm:$0xf]
        %v3476 = vld [vmem:[%s3461 + $0x38] sm:$0xf]
        %v3477 = vld [vmem:[%s3461 + $0x3c] sm:$0xf]
        %v3478 = vld [vmem:[%s3461 + $0x40] sm:$0xf]
        %v3479 = vld [vmem:[%s3461 + $0x44] sm:$0xf]
        %v3480 = vld [vmem:[%s3461 + $0x48] sm:$0xf]
        %v3481 = vld [vmem:[%s3461 + $0x4c] sm:$0xf]
        %v3490 = vunpack.c.l.b16 %v3453
        %v3491 = vunpack.c.h.b16 %v3453
        %v3492 = vunpack.c.l.b16 %v3454
        %v3493 = vunpack.c.h.b16 %v3454
        %v3494 = vunpack.c.l.b16 %v3455
        %v3495 = vunpack.c.h.b16 %v3455
        %v3496 = vunpack.c.l.b16 %v3456
        %v3497 = vunpack.c.h.b16 %v3456
        %v3498 = vunpack.c.l.b16 %v3457
        %v3499 = vunpack.c.h.b16 %v3457
        %v3500 = vunpack.c.l.b16 %v3458
        %v3501 = vunpack.c.h.b16 %v3458
        %v3502 = vunpack.c.l.b16 %v3459
        %v3503 = vunpack.c.h.b16 %v3459
        %v3504 = vunpack.c.l.b16 %v3460
        %v3505 = vunpack.c.h.b16 %v3460
        %v3506 = vpack.c.b16 %v3492, %v3490
        %v3507 = vpack.c.b16 %v3493, %v3491
        %v3508 = vpack.c.b16 %v3496, %v3494
        %v3509 = vpack.c.b16 %v3497, %v3495
        %v3510 = vpack.c.b16 %v3500, %v3498
        %v3511 = vpack.c.b16 %v3501, %v3499
        %v3512 = vpack.c.b16 %v3504, %v3502
        %v3513 = vpack.c.b16 %v3505, %v3503
        %v3538 = vunpack.c.l.b16 %v3462
        %v3539 = vunpack.c.l.b16 %v3463
        %v3540 = vunpack.c.l.b16 %v3464
        %v3541 = vunpack.c.l.b16 %v3465
        %v3542 = vunpack.c.l.b16 %v3466
        %v3543 = vunpack.c.l.b16 %v3467
        %v3544 = vunpack.c.l.b16 %v3468
        %v3545 = vunpack.c.l.b16 %v3469
        %v3546 = vunpack.c.l.b16 %v3470
        %v3547 = vunpack.c.l.b16 %v3471
        %v3548 = vunpack.c.l.b16 %v3472
        %v3549 = vunpack.c.l.b16 %v3473
        %v3550 = vunpack.c.l.b16 %v3474
        %v3551 = vunpack.c.l.b16 %v3475
        %v3552 = vunpack.c.l.b16 %v3476
        %v3553 = vunpack.c.l.b16 %v3477
        %v3554 = vunpack.c.l.b16 %v3478
        %v3555 = vunpack.c.l.b16 %v3479
        %v3556 = vunpack.c.l.b16 %v3480
        %v3557 = vunpack.c.l.b16 %v3481
        %v3558 = vpack.c.b16 %v3539, %v3538
        %v3559 = vpack.c.b16 %v3541, %v3540
        %v3560 = vpack.c.b16 %v3543, %v3542
        %v3561 = vpack.c.b16 %v3545, %v3544
        %v3562 = vpack.c.b16 %v3547, %v3546
        %v3563 = vpack.c.b16 %v3549, %v3548
        %v3564 = vpack.c.b16 %v3551, %v3550
        %v3565 = vpack.c.b16 %v3553, %v3552
        %v3566 = vpack.c.b16 %v3555, %v3554
        %v3567 = vpack.c.b16 %v3557, %v3556
        %v3579 = vsel %vm2952, %v3507, 0
        %v3582 = vsel %vm2952, %v3509, 0
        %v3585 = vsel %vm2952, %v3511, 0
        %v3588 = vsel %vm2952, %v3513, 0
        %3590 = vmatprep.subr.bf16.mxu0 0
        %3591 = vmatpush1.bf16.msra.mxu0 %v3558
        %3592 = vmatprep.subr.bf16.mxu0 0
        %3593 = vmatpush1.bf16.msra.mxu0 %v3559
        %3594 = vmatprep.subr.bf16.mxu0 0
        %3595 = vmatpush1.bf16.msra.mxu0 %v3560
        %3596 = vmatprep.subr.bf16.mxu0 0
        %3597 = vmatpush1.bf16.msra.mxu0 %v3561
        %3598 = vmatprep.subr.bf16.mxu0 0
        %3599 = vmatpush1.bf16.msra.mxu0 %v3562
        %3600 = vmatprep.subr.bf16.mxu0 0
        %3601 = vmatpush1.bf16.msra.mxu0 %v3563
        %3602 = vmatprep.subr.bf16.mxu0 0
        %3603 = vmatpush1.bf16.msra.mxu0 %v3564
        %3604 = vmatprep.subr.bf16.mxu0 0
        %3605 = vmatpush1.bf16.msra.mxu0 %v3565
        %3606 = vmatprep.subr.bf16.mxu0 0
        %3607 = vmatpush1.bf16.msra.mxu0 %v3566
        %3608 = vmatprep.subr.bf16.mxu0 0
        %3609 = vmatpush1.bf16.msra.mxu0 %v3567
        %3610 = vmatprep.subr.bf16.mxu0 0
        %3611 = vmatpush1.bf16.msra.mxu0 0
        %3612 = vmatprep.subr.bf16.mxu0 0
        %3613 = vmatpush1.bf16.msra.mxu0 0
        %3614 = vmatprep.subr.bf16.mxu0 0
        %3615 = vmatpush1.bf16.msra.mxu0 0
        %3616 = vmatprep.subr.bf16.mxu0 0
        %3617 = vmatpush1.bf16.msra.mxu0 0
        %3618 = vmatprep.subr.bf16.mxu0 0
        %3619 = vmatpush1.bf16.msra.mxu0 0
        %3620 = vmatprep.subr.bf16.mxu0 0
        %3621 = vmatpush1.bf16.msra.mxu0 0
        %3622 = vmatprep.mubr.bf16.mxu0 %v3579
        %3623 = vmatmul.mubr.bf16.gmra.mrb[0].mxu0 %v3506
        %v3624 = vpop.f32.mrb[0].mxu0
        %v3625 = vadd.f32 0.0, %v3624
        %v3626 = vpop.f32.mrb[0].mxu0
        %v3627 = vpop.f32.mrb[0].mxu0
        %v3628 = vadd.f32 0.0, %v3627
        %v3629 = vpop.f32.mrb[0].mxu0
        %3630 = vmatprep.mubr.bf16.mxu0 %v3582
        %3631 = vmatmul.mubr.bf16.gmra.mrb[0].mxu0 %v3508
        %v3632 = vpop.f32.mrb[0].mxu0
        %v3633 = vadd.f32 0.0, %v3632
        %v3634 = vpop.f32.mrb[0].mxu0
        %v3635 = vpop.f32.mrb[0].mxu0
        %v3636 = vadd.f32 0.0, %v3635
        %v3637 = vpop.f32.mrb[0].mxu0
        %3638 = vmatprep.mubr.bf16.mxu0 %v3585
        %3639 = vmatmul.mubr.bf16.gmra.mrb[0].mxu0 %v3510
        %v3640 = vpop.f32.mrb[0].mxu0
        %v3641 = vadd.f32 0.0, %v3640
        %v3642 = vpop.f32.mrb[0].mxu0
        %v3643 = vpop.f32.mrb[0].mxu0
        %v3644 = vadd.f32 0.0, %v3643
        %v3645 = vpop.f32.mrb[0].mxu0
        %3646 = vmatprep.mubr.bf16.mxu0 %v3588
        %3647 = vmatmul.mubr.bf16.gmra.mrb[0].mxu0 %v3512
        %v3648 = vpop.f32.mrb[0].mxu0
        %v3649 = vadd.f32 0.0, %v3648
        %v3650 = vpop.f32.mrb[0].mxu0
        %v3651 = vpop.f32.mrb[0].mxu0
        %v3652 = vadd.f32 0.0, %v3651
        %v3653 = vpop.f32.mrb[0].mxu0
        %3654 = vdwg.mxu0
        %v3655 = vadd.f32 %v3445, %v3625
        %v3656 = vadd.f32 %v3446, %v3628
        %v3657 = vadd.f32 %v3447, %v3633
        %v3658 = vadd.f32 %v3448, %v3636
        %v3659 = vadd.f32 %v3449, %v3641
        %v3660 = vadd.f32 %v3450, %v3644
        %v3661 = vadd.f32 %v3451, %v3649
        %v3662 = vadd.f32 %v3452, %v3652
        %v3663 = vld [vmem:[%s2634] sm:$0xff]
        %v3664 = vld [vmem:[%s2634 + $0x8] sm:$0x11]
        %v3665 = vld [vmem:[%s2634 + $0x10] sm:$0xff]
        %v3666 = vld [vmem:[%s2634 + $0x18] sm:$0x11]
        %v3667 = vld [vmem:[%s2634 + $0x20] sm:$0xff]
        %v3668 = vld [vmem:[%s2634 + $0x28] sm:$0x11]
        %v3669 = vld [vmem:[%s2634 + $0x30] sm:$0xff]
        %v3670 = vld [vmem:[%s2634 + $0x38] sm:$0x11]
        %v3671 = vld [vmem:[%s2634 + $0x40] sm:$0xff]
        %v3672 = vld [vmem:[%s2634 + $0x48] sm:$0x11]
        %v3673 = vld [vmem:[%s2634 + $0x50] sm:$0xff]
        %v3674 = vld [vmem:[%s2634 + $0x58] sm:$0x11]
        %v3675 = vld [vmem:[%s2634 + $0x60] sm:$0xff]
        %v3676 = vld [vmem:[%s2634 + $0x68] sm:$0x11]
        %v3677 = vld [vmem:[%s2634 + $0x70] sm:$0xff]
        %v3678 = vld [vmem:[%s2634 + $0x78] sm:$0x11]
        %v3680 = vshrl.u32 %v3663, 16
        %v3682 = vrot.slane %v3680, 4
        %v3683 = vshll.u32 %v3663, 16
        %v3685 = vrot.slane %v3683, 5
        %v3686 = vor.u32 %v3682, %v3685
        %v3687 = vrot.slane %v3686, 4
        %v3689 = vshll.u32 %v3664, 16
        %v3691 = vrot.slane %v3689, 5
        %v3692 = vsel %vm550, %v3687, %v3691
        %v3694 = vshrl.u32 %v3665, 16
        %v3696 = vrot.slane %v3694, 4
        %v3697 = vshll.u32 %v3665, 16
        %v3699 = vrot.slane %v3697, 5
        %v3700 = vor.u32 %v3696, %v3699
        %v3701 = vrot.slane %v3700, 4
        %v3703 = vshll.u32 %v3666, 16
        %v3705 = vrot.slane %v3703, 5
        %v3706 = vsel %vm550, %v3701, %v3705
        %v3708 = vshrl.u32 %v3667, 16
        %v3710 = vrot.slane %v3708, 4
        %v3711 = vshll.u32 %v3667, 16
        %v3713 = vrot.slane %v3711, 5
        %v3714 = vor.u32 %v3710, %v3713
        %v3715 = vrot.slane %v3714, 4
        %v3717 = vshll.u32 %v3668, 16
        %v3719 = vrot.slane %v3717, 5
        %v3720 = vsel %vm550, %v3715, %v3719
        %v3722 = vshrl.u32 %v3669, 16
        %v3724 = vrot.slane %v3722, 4
        %v3725 = vshll.u32 %v3669, 16
        %v3727 = vrot.slane %v3725, 5
        %v3728 = vor.u32 %v3724, %v3727
        %v3729 = vrot.slane %v3728, 4
        %v3731 = vshll.u32 %v3670, 16
        %v3733 = vrot.slane %v3731, 5
        %v3734 = vsel %vm550, %v3729, %v3733
        %v3736 = vshrl.u32 %v3671, 16
        %v3738 = vrot.slane %v3736, 4
        %v3739 = vshll.u32 %v3671, 16
        %v3741 = vrot.slane %v3739, 5
        %v3742 = vor.u32 %v3738, %v3741
        %v3743 = vrot.slane %v3742, 4
        %v3745 = vshll.u32 %v3672, 16
        %v3747 = vrot.slane %v3745, 5
        %v3748 = vsel %vm550, %v3743, %v3747
        %v3750 = vshrl.u32 %v3673, 16
        %v3752 = vrot.slane %v3750, 4
        %v3753 = vshll.u32 %v3673, 16
        %v3755 = vrot.slane %v3753, 5
        %v3756 = vor.u32 %v3752, %v3755
        %v3757 = vrot.slane %v3756, 4
        %v3759 = vshll.u32 %v3674, 16
        %v3761 = vrot.slane %v3759, 5
        %v3762 = vsel %vm550, %v3757, %v3761
        %v3764 = vshrl.u32 %v3675, 16
        %v3766 = vrot.slane %v3764, 4
        %v3767 = vshll.u32 %v3675, 16
        %v3769 = vrot.slane %v3767, 5
        %v3770 = vor.u32 %v3766, %v3769
        %v3771 = vrot.slane %v3770, 4
        %v3773 = vshll.u32 %v3676, 16
        %v3775 = vrot.slane %v3773, 5
        %v3776 = vsel %vm550, %v3771, %v3775
        %v3778 = vshrl.u32 %v3677, 16
        %v3780 = vrot.slane %v3778, 4
        %v3781 = vshll.u32 %v3677, 16
        %v3783 = vrot.slane %v3781, 5
        %v3784 = vor.u32 %v3780, %v3783
        %v3785 = vrot.slane %v3784, 4
        %v3787 = vshll.u32 %v3678, 16
        %v3789 = vrot.slane %v3787, 5
        %v3790 = vsel %vm550, %v3785, %v3789
        %s3791 = scalar_lea.vmem [#allocation9], 320
        %v3792 = vld [vmem:[%s3791] sm:$0xf]
        %v3793 = vld [vmem:[%s3791 + $0x4] sm:$0xf]
        %v3794 = vld [vmem:[%s3791 + $0x8] sm:$0xf]
        %v3795 = vld [vmem:[%s3791 + $0xc] sm:$0xf]
        %v3796 = vld [vmem:[%s3791 + $0x10] sm:$0xf]
        %v3797 = vld [vmem:[%s3791 + $0x14] sm:$0xf]
        %v3798 = vld [vmem:[%s3791 + $0x18] sm:$0xf]
        %v3799 = vld [vmem:[%s3791 + $0x1c] sm:$0xf]
        %v3800 = vld [vmem:[%s3791 + $0x20] sm:$0xf]
        %v3801 = vld [vmem:[%s3791 + $0x24] sm:$0xf]
        %v3802 = vld [vmem:[%s3791 + $0x28] sm:$0xf]
        %v3803 = vld [vmem:[%s3791 + $0x2c] sm:$0xf]
        %v3804 = vld [vmem:[%s3791 + $0x30] sm:$0xf]
        %v3805 = vld [vmem:[%s3791 + $0x34] sm:$0xf]
        %v3806 = vld [vmem:[%s3791 + $0x38] sm:$0xf]
        %v3807 = vld [vmem:[%s3791 + $0x3c] sm:$0xf]
        %v3808 = vld [vmem:[%s3791 + $0x40] sm:$0xf]
        %v3809 = vld [vmem:[%s3791 + $0x44] sm:$0xf]
        %v3810 = vld [vmem:[%s3791 + $0x48] sm:$0xf]
        %v3811 = vld [vmem:[%s3791 + $0x4c] sm:$0xf]
        %v3812 = vunpack.c.l.b16 %v3692
        %v3813 = vunpack.c.h.b16 %v3692
        %v3814 = vunpack.c.l.b16 %v3706
        %v3815 = vunpack.c.h.b16 %v3706
        %v3816 = vunpack.c.l.b16 %v3720
        %v3817 = vunpack.c.h.b16 %v3720
        %v3818 = vunpack.c.l.b16 %v3734
        %v3819 = vunpack.c.h.b16 %v3734
        %v3820 = vunpack.c.l.b16 %v3748
        %v3821 = vunpack.c.h.b16 %v3748
        %v3822 = vunpack.c.l.b16 %v3762
        %v3823 = vunpack.c.h.b16 %v3762
        %v3824 = vunpack.c.l.b16 %v3776
        %v3825 = vunpack.c.h.b16 %v3776
        %v3826 = vunpack.c.l.b16 %v3790
        %v3827 = vunpack.c.h.b16 %v3790
        %v3828 = vpack.c.b16 %v3814, %v3812
        %v3829 = vpack.c.b16 %v3815, %v3813
        %v3830 = vpack.c.b16 %v3818, %v3816
        %v3831 = vpack.c.b16 %v3819, %v3817
        %v3832 = vpack.c.b16 %v3822, %v3820
        %v3833 = vpack.c.b16 %v3823, %v3821
        %v3834 = vpack.c.b16 %v3826, %v3824
        %v3835 = vpack.c.b16 %v3827, %v3825
        %v3860 = vunpack.c.l.b16 %v3792
        %v3861 = vunpack.c.l.b16 %v3793
        %v3862 = vunpack.c.l.b16 %v3794
        %v3863 = vunpack.c.l.b16 %v3795
        %v3864 = vunpack.c.l.b16 %v3796
        %v3865 = vunpack.c.l.b16 %v3797
        %v3866 = vunpack.c.l.b16 %v3798
        %v3867 = vunpack.c.l.b16 %v3799
        %v3868 = vunpack.c.l.b16 %v3800
        %v3869 = vunpack.c.l.b16 %v3801
        %v3870 = vunpack.c.l.b16 %v3802
        %v3871 = vunpack.c.l.b16 %v3803
        %v3872 = vunpack.c.l.b16 %v3804
        %v3873 = vunpack.c.l.b16 %v3805
        %v3874 = vunpack.c.l.b16 %v3806
        %v3875 = vunpack.c.l.b16 %v3807
        %v3876 = vunpack.c.l.b16 %v3808
        %v3877 = vunpack.c.l.b16 %v3809
        %v3878 = vunpack.c.l.b16 %v3810
        %v3879 = vunpack.c.l.b16 %v3811
        %v3880 = vpack.c.b16 %v3861, %v3860
        %v3881 = vpack.c.b16 %v3863, %v3862
        %v3882 = vpack.c.b16 %v3865, %v3864
        %v3883 = vpack.c.b16 %v3867, %v3866
        %v3884 = vpack.c.b16 %v3869, %v3868
        %v3885 = vpack.c.b16 %v3871, %v3870
        %v3886 = vpack.c.b16 %v3873, %v3872
        %v3887 = vpack.c.b16 %v3875, %v3874
        %v3888 = vpack.c.b16 %v3877, %v3876
        %v3889 = vpack.c.b16 %v3879, %v3878
        %v3901 = vsel %vm2952, %v3829, 0
        %v3904 = vsel %vm2952, %v3831, 0
        %v3907 = vsel %vm2952, %v3833, 0
        %v3910 = vsel %vm2952, %v3835, 0
        %3912 = vmatprep.subr.bf16.mxu0 0
        %3913 = vmatpush1.bf16.msra.mxu0 %v3880
        %3914 = vmatprep.subr.bf16.mxu0 0
        %3915 = vmatpush1.bf16.msra.mxu0 %v3881
        %3916 = vmatprep.subr.bf16.mxu0 0
        %3917 = vmatpush1.bf16.msra.mxu0 %v3882
        %3918 = vmatprep.subr.bf16.mxu0 0
        %3919 = vmatpush1.bf16.msra.mxu0 %v3883
        %3920 = vmatprep.subr.bf16.mxu0 0
        %3921 = vmatpush1.bf16.msra.mxu0 %v3884
        %3922 = vmatprep.subr.bf16.mxu0 0
        %3923 = vmatpush1.bf16.msra.mxu0 %v3885
        %3924 = vmatprep.subr.bf16.mxu0 0
        %3925 = vmatpush1.bf16.msra.mxu0 %v3886
        %3926 = vmatprep.subr.bf16.mxu0 0
        %3927 = vmatpush1.bf16.msra.mxu0 %v3887
        %3928 = vmatprep.subr.bf16.mxu0 0
        %3929 = vmatpush1.bf16.msra.mxu0 %v3888
        %3930 = vmatprep.subr.bf16.mxu0 0
        %3931 = vmatpush1.bf16.msra.mxu0 %v3889
        %3932 = vmatprep.subr.bf16.mxu0 0
        %3933 = vmatpush1.bf16.msra.mxu0 0
        %3934 = vmatprep.subr.bf16.mxu0 0
        %3935 = vmatpush1.bf16.msra.mxu0 0
        %3936 = vmatprep.subr.bf16.mxu0 0
        %3937 = vmatpush1.bf16.msra.mxu0 0
        %3938 = vmatprep.subr.bf16.mxu0 0
        %3939 = vmatpush1.bf16.msra.mxu0 0
        %3940 = vmatprep.subr.bf16.mxu0 0
        %3941 = vmatpush1.bf16.msra.mxu0 0
        %3942 = vmatprep.subr.bf16.mxu0 0
        %3943 = vmatpush1.bf16.msra.mxu0 0
        %3944 = vmatprep.mubr.bf16.mxu0 %v3901
        %3945 = vmatmul.mubr.bf16.gmra.mrb[0].mxu0 %v3828
        %v3946 = vpop.f32.mrb[0].mxu0
        %v3947 = vadd.f32 0.0, %v3946
        %v3948 = vpop.f32.mrb[0].mxu0
        %v3949 = vpop.f32.mrb[0].mxu0
        %v3950 = vadd.f32 0.0, %v3949
        %v3951 = vpop.f32.mrb[0].mxu0
        %3952 = vmatprep.mubr.bf16.mxu0 %v3904
        %3953 = vmatmul.mubr.bf16.gmra.mrb[0].mxu0 %v3830
        %v3954 = vpop.f32.mrb[0].mxu0
        %v3955 = vadd.f32 0.0, %v3954
        %v3956 = vpop.f32.mrb[0].mxu0
        %v3957 = vpop.f32.mrb[0].mxu0
        %v3958 = vadd.f32 0.0, %v3957
        %v3959 = vpop.f32.mrb[0].mxu0
        %3960 = vmatprep.mubr.bf16.mxu0 %v3907
        %3961 = vmatmul.mubr.bf16.gmra.mrb[0].mxu0 %v3832
        %v3962 = vpop.f32.mrb[0].mxu0
        %v3963 = vadd.f32 0.0, %v3962
        %v3964 = vpop.f32.mrb[0].mxu0
        %v3965 = vpop.f32.mrb[0].mxu0
        %v3966 = vadd.f32 0.0, %v3965
        %v3967 = vpop.f32.mrb[0].mxu0
        %3968 = vmatprep.mubr.bf16.mxu0 %v3910
        %3969 = vmatmul.mubr.bf16.gmra.mrb[0].mxu0 %v3834
        %v3970 = vpop.f32.mrb[0].mxu0
        %v3971 = vadd.f32 0.0, %v3970
        %v3972 = vpop.f32.mrb[0].mxu0
        %v3973 = vpop.f32.mrb[0].mxu0
        %v3974 = vadd.f32 0.0, %v3973
        %v3975 = vpop.f32.mrb[0].mxu0
        %3976 = vdwg.mxu0
        %v3977 = vadd.f32 %v3655, %v3947
        %v3978 = vadd.f32 %v3656, %v3950
        %v3979 = vadd.f32 %v3657, %v3955
        %v3980 = vadd.f32 %v3658, %v3958
        %v3981 = vadd.f32 %v3659, %v3963
        %v3982 = vadd.f32 %v3660, %v3966
        %v3983 = vadd.f32 %v3661, %v3971
        %v3984 = vadd.f32 %v3662, %v3974
        %v3985 = vld [vmem:[%s2634] sm:$0xee]
        %v3986 = vld [vmem:[%s2634 + $0x10] sm:$0xee]
        %v3987 = vld [vmem:[%s2634 + $0x20] sm:$0xee]
        %v3988 = vld [vmem:[%s2634 + $0x30] sm:$0xee]
        %v3989 = vld [vmem:[%s2634 + $0x40] sm:$0xee]
        %v3990 = vld [vmem:[%s2634 + $0x50] sm:$0xee]
        %v3991 = vld [vmem:[%s2634 + $0x60] sm:$0xee]
        %v3992 = vld [vmem:[%s2634 + $0x70] sm:$0xee]
        %v4009 = vrot.slane %v3985, 5
        %v4010 = vrot.slane %v4009, 4
        %v4011 = vrot.slane %v3664, 5
        %v4012 = vsel %vm918, %v4010, %v4011
        %v4013 = vrot.slane %v3986, 5
        %v4014 = vrot.slane %v4013, 4
        %v4015 = vrot.slane %v3666, 5
        %v4016 = vsel %vm918, %v4014, %v4015
        %v4017 = vrot.slane %v3987, 5
        %v4018 = vrot.slane %v4017, 4
        %v4019 = vrot.slane %v3668, 5
        %v4020 = vsel %vm918, %v4018, %v4019
        %v4021 = vrot.slane %v3988, 5
        %v4022 = vrot.slane %v4021, 4
        %v4023 = vrot.slane %v3670, 5
        %v4024 = vsel %vm918, %v4022, %v4023
        %v4025 = vrot.slane %v3989, 5
        %v4026 = vrot.slane %v4025, 4
        %v4027 = vrot.slane %v3672, 5
        %v4028 = vsel %vm918, %v4026, %v4027
        %v4029 = vrot.slane %v3990, 5
        %v4030 = vrot.slane %v4029, 4
        %v4031 = vrot.slane %v3674, 5
        %v4032 = vsel %vm918, %v4030, %v4031
        %v4033 = vrot.slane %v3991, 5
        %v4034 = vrot.slane %v4033, 4
        %v4035 = vrot.slane %v3676, 5
        %v4036 = vsel %vm918, %v4034, %v4035
        %v4037 = vrot.slane %v3992, 5
        %v4038 = vrot.slane %v4037, 4
        %v4039 = vrot.slane %v3678, 5
        %v4040 = vsel %vm918, %v4038, %v4039
        %s4041 = scalar_lea.vmem [#allocation9], 400
        %v4042 = vld [vmem:[%s4041] sm:$0xf]
        %v4043 = vld [vmem:[%s4041 + $0x4] sm:$0xf]
        %v4044 = vld [vmem:[%s4041 + $0x8] sm:$0xf]
        %v4045 = vld [vmem:[%s4041 + $0xc] sm:$0xf]
        %v4046 = vld [vmem:[%s4041 + $0x10] sm:$0xf]
        %v4047 = vld [vmem:[%s4041 + $0x14] sm:$0xf]
        %v4048 = vld [vmem:[%s4041 + $0x18] sm:$0xf]
        %v4049 = vld [vmem:[%s4041 + $0x1c] sm:$0xf]
        %v4050 = vld [vmem:[%s4041 + $0x20] sm:$0xf]
        %v4051 = vld [vmem:[%s4041 + $0x24] sm:$0xf]
        %v4052 = vld [vmem:[%s4041 + $0x28] sm:$0xf]
        %v4053 = vld [vmem:[%s4041 + $0x2c] sm:$0xf]
        %v4054 = vld [vmem:[%s4041 + $0x30] sm:$0xf]
        %v4055 = vld [vmem:[%s4041 + $0x34] sm:$0xf]
        %v4056 = vld [vmem:[%s4041 + $0x38] sm:$0xf]
        %v4057 = vld [vmem:[%s4041 + $0x3c] sm:$0xf]
        %v4058 = vld [vmem:[%s4041 + $0x40] sm:$0xf]
        %v4059 = vld [vmem:[%s4041 + $0x44] sm:$0xf]
        %v4060 = vld [vmem:[%s4041 + $0x48] sm:$0xf]
        %v4061 = vld [vmem:[%s4041 + $0x4c] sm:$0xf]
        %v4062 = vunpack.c.l.b16 %v4012
        %v4063 = vunpack.c.h.b16 %v4012
        %v4064 = vunpack.c.l.b16 %v4016
        %v4065 = vunpack.c.h.b16 %v4016
        %v4066 = vunpack.c.l.b16 %v4020
        %v4067 = vunpack.c.h.b16 %v4020
        %v4068 = vunpack.c.l.b16 %v4024
        %v4069 = vunpack.c.h.b16 %v4024
        %v4070 = vunpack.c.l.b16 %v4028
        %v4071 = vunpack.c.h.b16 %v4028
        %v4072 = vunpack.c.l.b16 %v4032
        %v4073 = vunpack.c.h.b16 %v4032
        %v4074 = vunpack.c.l.b16 %v4036
        %v4075 = vunpack.c.h.b16 %v4036
        %v4076 = vunpack.c.l.b16 %v4040
        %v4077 = vunpack.c.h.b16 %v4040
        %v4078 = vpack.c.b16 %v4064, %v4062
        %v4079 = vpack.c.b16 %v4065, %v4063
        %v4080 = vpack.c.b16 %v4068, %v4066
        %v4081 = vpack.c.b16 %v4069, %v4067
        %v4082 = vpack.c.b16 %v4072, %v4070
        %v4083 = vpack.c.b16 %v4073, %v4071
        %v4084 = vpack.c.b16 %v4076, %v4074
        %v4085 = vpack.c.b16 %v4077, %v4075
        %v4110 = vunpack.c.l.b16 %v4042
        %v4111 = vunpack.c.l.b16 %v4043
        %v4112 = vunpack.c.l.b16 %v4044
        %v4113 = vunpack.c.l.b16 %v4045
        %v4114 = vunpack.c.l.b16 %v4046
        %v4115 = vunpack.c.l.b16 %v4047
        %v4116 = vunpack.c.l.b16 %v4048
        %v4117 = vunpack.c.l.b16 %v4049
        %v4118 = vunpack.c.l.b16 %v4050
        %v4119 = vunpack.c.l.b16 %v4051
        %v4120 = vunpack.c.l.b16 %v4052
        %v4121 = vunpack.c.l.b16 %v4053
        %v4122 = vunpack.c.l.b16 %v4054
        %v4123 = vunpack.c.l.b16 %v4055
        %v4124 = vunpack.c.l.b16 %v4056
        %v4125 = vunpack.c.l.b16 %v4057
        %v4126 = vunpack.c.l.b16 %v4058
        %v4127 = vunpack.c.l.b16 %v4059
        %v4128 = vunpack.c.l.b16 %v4060
        %v4129 = vunpack.c.l.b16 %v4061
        %v4130 = vpack.c.b16 %v4111, %v4110
        %v4131 = vpack.c.b16 %v4113, %v4112
        %v4132 = vpack.c.b16 %v4115, %v4114
        %v4133 = vpack.c.b16 %v4117, %v4116
        %v4134 = vpack.c.b16 %v4119, %v4118
        %v4135 = vpack.c.b16 %v4121, %v4120
        %v4136 = vpack.c.b16 %v4123, %v4122
        %v4137 = vpack.c.b16 %v4125, %v4124
        %v4138 = vpack.c.b16 %v4127, %v4126
        %v4139 = vpack.c.b16 %v4129, %v4128
        %v4151 = vsel %vm2952, %v4079, 0
        %v4154 = vsel %vm2952, %v4081, 0
        %v4157 = vsel %vm2952, %v4083, 0
        %v4160 = vsel %vm2952, %v4085, 0
        %4162 = vmatprep.subr.bf16.mxu0 0
        %4163 = vmatpush1.bf16.msra.mxu0 %v4130
        %4164 = vmatprep.subr.bf16.mxu0 0
        %4165 = vmatpush1.bf16.msra.mxu0 %v4131
        %4166 = vmatprep.subr.bf16.mxu0 0
        %4167 = vmatpush1.bf16.msra.mxu0 %v4132
        %4168 = vmatprep.subr.bf16.mxu0 0
        %4169 = vmatpush1.bf16.msra.mxu0 %v4133
        %4170 = vmatprep.subr.bf16.mxu0 0
        %4171 = vmatpush1.bf16.msra.mxu0 %v4134
        %4172 = vmatprep.subr.bf16.mxu0 0
        %4173 = vmatpush1.bf16.msra.mxu0 %v4135
        %4174 = vmatprep.subr.bf16.mxu0 0
        %4175 = vmatpush1.bf16.msra.mxu0 %v4136
        %4176 = vmatprep.subr.bf16.mxu0 0
        %4177 = vmatpush1.bf16.msra.mxu0 %v4137
        %4178 = vmatprep.subr.bf16.mxu0 0
        %4179 = vmatpush1.bf16.msra.mxu0 %v4138
        %4180 = vmatprep.subr.bf16.mxu0 0
        %4181 = vmatpush1.bf16.msra.mxu0 %v4139
        %4182 = vmatprep.subr.bf16.mxu0 0
        %4183 = vmatpush1.bf16.msra.mxu0 0
        %4184 = vmatprep.subr.bf16.mxu0 0
        %4185 = vmatpush1.bf16.msra.mxu0 0
        %4186 = vmatprep.subr.bf16.mxu0 0
        %4187 = vmatpush1.bf16.msra.mxu0 0
        %4188 = vmatprep.subr.bf16.mxu0 0
        %4189 = vmatpush1.bf16.msra.mxu0 0
        %4190 = vmatprep.subr.bf16.mxu0 0
        %4191 = vmatpush1.bf16.msra.mxu0 0
        %4192 = vmatprep.subr.bf16.mxu0 0
        %4193 = vmatpush1.bf16.msra.mxu0 0
        %4194 = vmatprep.mubr.bf16.mxu0 %v4151
        %4195 = vmatmul.mubr.bf16.gmra.mrb[0].mxu0 %v4078
        %v4196 = vpop.f32.mrb[0].mxu0
        %v4197 = vadd.f32 0.0, %v4196
        %v4198 = vpop.f32.mrb[0].mxu0
        %v4199 = vpop.f32.mrb[0].mxu0
        %v4200 = vadd.f32 0.0, %v4199
        %v4201 = vpop.f32.mrb[0].mxu0
        %4202 = vmatprep.mubr.bf16.mxu0 %v4154
        %4203 = vmatmul.mubr.bf16.gmra.mrb[0].mxu0 %v4080
        %v4204 = vpop.f32.mrb[0].mxu0
        %v4205 = vadd.f32 0.0, %v4204
        %v4206 = vpop.f32.mrb[0].mxu0
        %v4207 = vpop.f32.mrb[0].mxu0
        %v4208 = vadd.f32 0.0, %v4207
        %v4209 = vpop.f32.mrb[0].mxu0
        %4210 = vmatprep.mubr.bf16.mxu0 %v4157
        %4211 = vmatmul.mubr.bf16.gmra.mrb[0].mxu0 %v4082
        %v4212 = vpop.f32.mrb[0].mxu0
        %v4213 = vadd.f32 0.0, %v4212
        %v4214 = vpop.f32.mrb[0].mxu0
        %v4215 = vpop.f32.mrb[0].mxu0
        %v4216 = vadd.f32 0.0, %v4215
        %v4217 = vpop.f32.mrb[0].mxu0
        %4218 = vmatprep.mubr.bf16.mxu0 %v4160
        %4219 = vmatmul.mubr.bf16.gmra.mrb[0].mxu0 %v4084
        %v4220 = vpop.f32.mrb[0].mxu0
        %v4221 = vadd.f32 0.0, %v4220
        %v4222 = vpop.f32.mrb[0].mxu0
        %v4223 = vpop.f32.mrb[0].mxu0
        %v4224 = vadd.f32 0.0, %v4223
        %v4225 = vpop.f32.mrb[0].mxu0
        %4226 = vdwg.mxu0
        %v4227 = vadd.f32 %v3977, %v4197
        %v4228 = vadd.f32 %v3978, %v4200
        %v4229 = vadd.f32 %v3979, %v4205
        %v4230 = vadd.f32 %v3980, %v4208
        %v4231 = vadd.f32 %v3981, %v4213
        %v4232 = vadd.f32 %v3982, %v4216
        %v4233 = vadd.f32 %v3983, %v4221
        %v4234 = vadd.f32 %v3984, %v4224
        %s4235 = scalar_lea.vmem [#allocation3], 32
        %v4236 = vld [vmem:[%s4235] sm:$0xff]
        %v4237 = vld [vmem:[%s4235 + $0x10] sm:$0xff]
        %v4238 = vld [vmem:[%s4235 + $0x20] sm:$0xff]
        %v4239 = vld [vmem:[%s4235 + $0x30] sm:$0xff]
        %v4240 = vld [vmem:[%s4235 + $0x40] sm:$0xff]
        %v4241 = vld [vmem:[%s4235 + $0x50] sm:$0xff]
        %v4242 = vld [vmem:[%s4235 + $0x60] sm:$0xff]
        %v4243 = vld [vmem:[%s4235 + $0x70] sm:$0xff]
        %s4244 = scalar_lea.vmem [#allocation9], 480
        %v4245 = vld [vmem:[%s4244] sm:$0xf]
        %v4246 = vld [vmem:[%s4244 + $0x4] sm:$0xf]
        %v4247 = vld [vmem:[%s4244 + $0x8] sm:$0xf]
        %v4248 = vld [vmem:[%s4244 + $0xc] sm:$0xf]
        %v4249 = vld [vmem:[%s4244 + $0x10] sm:$0xf]
        %v4250 = vld [vmem:[%s4244 + $0x14] sm:$0xf]
        %v4251 = vld [vmem:[%s4244 + $0x18] sm:$0xf]
        %v4252 = vld [vmem:[%s4244 + $0x1c] sm:$0xf]
        %v4253 = vld [vmem:[%s4244 + $0x20] sm:$0xf]
        %v4254 = vld [vmem:[%s4244 + $0x24] sm:$0xf]
        %v4255 = vld [vmem:[%s4244 + $0x28] sm:$0xf]
        %v4256 = vld [vmem:[%s4244 + $0x2c] sm:$0xf]
        %v4257 = vld [vmem:[%s4244 + $0x30] sm:$0xf]
        %v4258 = vld [vmem:[%s4244 + $0x34] sm:$0xf]
        %v4259 = vld [vmem:[%s4244 + $0x38] sm:$0xf]
        %v4260 = vld [vmem:[%s4244 + $0x3c] sm:$0xf]
        %v4261 = vld [vmem:[%s4244 + $0x40] sm:$0xf]
        %v4262 = vld [vmem:[%s4244 + $0x44] sm:$0xf]
        %v4263 = vld [vmem:[%s4244 + $0x48] sm:$0xf]
        %v4264 = vld [vmem:[%s4244 + $0x4c] sm:$0xf]
        %v4273 = vunpack.c.l.b16 %v4236
        %v4274 = vunpack.c.h.b16 %v4236
        %v4275 = vunpack.c.l.b16 %v4237
        %v4276 = vunpack.c.h.b16 %v4237
        %v4277 = vunpack.c.l.b16 %v4238
        %v4278 = vunpack.c.h.b16 %v4238
        %v4279 = vunpack.c.l.b16 %v4239
        %v4280 = vunpack.c.h.b16 %v4239
        %v4281 = vunpack.c.l.b16 %v4240
        %v4282 = vunpack.c.h.b16 %v4240
        %v4283 = vunpack.c.l.b16 %v4241
        %v4284 = vunpack.c.h.b16 %v4241
        %v4285 = vunpack.c.l.b16 %v4242
        %v4286 = vunpack.c.h.b16 %v4242
        %v4287 = vunpack.c.l.b16 %v4243
        %v4288 = vunpack.c.h.b16 %v4243
        %v4289 = vpack.c.b16 %v4275, %v4273
        %v4290 = vpack.c.b16 %v4276, %v4274
        %v4291 = vpack.c.b16 %v4279, %v4277
        %v4292 = vpack.c.b16 %v4280, %v4278
        %v4293 = vpack.c.b16 %v4283, %v4281
        %v4294 = vpack.c.b16 %v4284, %v4282
        %v4295 = vpack.c.b16 %v4287, %v4285
        %v4296 = vpack.c.b16 %v4288, %v4286
        %v4321 = vunpack.c.l.b16 %v4245
        %v4322 = vunpack.c.l.b16 %v4246
        %v4323 = vunpack.c.l.b16 %v4247
        %v4324 = vunpack.c.l.b16 %v4248
        %v4325 = vunpack.c.l.b16 %v4249
        %v4326 = vunpack.c.l.b16 %v4250
        %v4327 = vunpack.c.l.b16 %v4251
        %v4328 = vunpack.c.l.b16 %v4252
        %v4329 = vunpack.c.l.b16 %v4253
        %v4330 = vunpack.c.l.b16 %v4254
        %v4331 = vunpack.c.l.b16 %v4255
        %v4332 = vunpack.c.l.b16 %v4256
        %v4333 = vunpack.c.l.b16 %v4257
        %v4334 = vunpack.c.l.b16 %v4258
        %v4335 = vunpack.c.l.b16 %v4259
        %v4336 = vunpack.c.l.b16 %v4260
        %v4337 = vunpack.c.l.b16 %v4261
        %v4338 = vunpack.c.l.b16 %v4262
        %v4339 = vunpack.c.l.b16 %v4263
        %v4340 = vunpack.c.l.b16 %v4264
        %v4341 = vpack.c.b16 %v4322, %v4321
        %v4342 = vpack.c.b16 %v4324, %v4323
        %v4343 = vpack.c.b16 %v4326, %v4325
        %v4344 = vpack.c.b16 %v4328, %v4327
        %v4345 = vpack.c.b16 %v4330, %v4329
        %v4346 = vpack.c.b16 %v4332, %v4331
        %v4347 = vpack.c.b16 %v4334, %v4333
        %v4348 = vpack.c.b16 %v4336, %v4335
        %v4349 = vpack.c.b16 %v4338, %v4337
        %v4350 = vpack.c.b16 %v4340, %v4339
        %v4362 = vsel %vm2952, %v4290, 0
        %v4365 = vsel %vm2952, %v4292, 0
        %v4368 = vsel %vm2952, %v4294, 0
        %v4371 = vsel %vm2952, %v4296, 0
        %4373 = vmatprep.subr.bf16.mxu0 0
        %4374 = vmatpush1.bf16.msra.mxu0 %v4341
        %4375 = vmatprep.subr.bf16.mxu0 0
        %4376 = vmatpush1.bf16.msra.mxu0 %v4342
        %4377 = vmatprep.subr.bf16.mxu0 0
        %4378 = vmatpush1.bf16.msra.mxu0 %v4343
        %4379 = vmatprep.subr.bf16.mxu0 0
        %4380 = vmatpush1.bf16.msra.mxu0 %v4344
        %4381 = vmatprep.subr.bf16.mxu0 0
        %4382 = vmatpush1.bf16.msra.mxu0 %v4345
        %4383 = vmatprep.subr.bf16.mxu0 0
        %4384 = vmatpush1.bf16.msra.mxu0 %v4346
        %4385 = vmatprep.subr.bf16.mxu0 0
        %4386 = vmatpush1.bf16.msra.mxu0 %v4347
        %4387 = vmatprep.subr.bf16.mxu0 0
        %4388 = vmatpush1.bf16.msra.mxu0 %v4348
        %4389 = vmatprep.subr.bf16.mxu0 0
        %4390 = vmatpush1.bf16.msra.mxu0 %v4349
        %4391 = vmatprep.subr.bf16.mxu0 0
        %4392 = vmatpush1.bf16.msra.mxu0 %v4350
        %4393 = vmatprep.subr.bf16.mxu0 0
        %4394 = vmatpush1.bf16.msra.mxu0 0
        %4395 = vmatprep.subr.bf16.mxu0 0
        %4396 = vmatpush1.bf16.msra.mxu0 0
        %4397 = vmatprep.subr.bf16.mxu0 0
        %4398 = vmatpush1.bf16.msra.mxu0 0
        %4399 = vmatprep.subr.bf16.mxu0 0
        %4400 = vmatpush1.bf16.msra.mxu0 0
        %4401 = vmatprep.subr.bf16.mxu0 0
        %4402 = vmatpush1.bf16.msra.mxu0 0
        %4403 = vmatprep.subr.bf16.mxu0 0
        %4404 = vmatpush1.bf16.msra.mxu0 0
        %4405 = vmatprep.mubr.bf16.mxu0 %v4362
        %4406 = vmatmul.mubr.bf16.gmra.mrb[0].mxu0 %v4289
        %v4407 = vpop.f32.mrb[0].mxu0
        %v4408 = vadd.f32 0.0, %v4407
        %v4409 = vpop.f32.mrb[0].mxu0
        %v4410 = vpop.f32.mrb[0].mxu0
        %v4411 = vadd.f32 0.0, %v4410
        %v4412 = vpop.f32.mrb[0].mxu0
        %4413 = vmatprep.mubr.bf16.mxu0 %v4365
        %4414 = vmatmul.mubr.bf16.gmra.mrb[0].mxu0 %v4291
        %v4415 = vpop.f32.mrb[0].mxu0
        %v4416 = vadd.f32 0.0, %v4415
        %v4417 = vpop.f32.mrb[0].mxu0
        %v4418 = vpop.f32.mrb[0].mxu0
        %v4419 = vadd.f32 0.0, %v4418
        %v4420 = vpop.f32.mrb[0].mxu0
        %4421 = vmatprep.mubr.bf16.mxu0 %v4368
        %4422 = vmatmul.mubr.bf16.gmra.mrb[0].mxu0 %v4293
        %v4423 = vpop.f32.mrb[0].mxu0
        %v4424 = vadd.f32 0.0, %v4423
        %v4425 = vpop.f32.mrb[0].mxu0
        %v4426 = vpop.f32.mrb[0].mxu0
        %v4427 = vadd.f32 0.0, %v4426
        %v4428 = vpop.f32.mrb[0].mxu0
        %4429 = vmatprep.mubr.bf16.mxu0 %v4371
        %4430 = vmatmul.mubr.bf16.gmra.mrb[0].mxu0 %v4295
        %v4431 = vpop.f32.mrb[0].mxu0
        %v4432 = vadd.f32 0.0, %v4431
        %v4433 = vpop.f32.mrb[0].mxu0
        %v4434 = vpop.f32.mrb[0].mxu0
        %v4435 = vadd.f32 0.0, %v4434
        %v4436 = vpop.f32.mrb[0].mxu0
        %4437 = vdwg.mxu0
        %v4438 = vadd.f32 %v4227, %v4408
        %v4439 = vadd.f32 %v4228, %v4411
        %v4440 = vadd.f32 %v4229, %v4416
        %v4441 = vadd.f32 %v4230, %v4419
        %v4442 = vadd.f32 %v4231, %v4424
        %v4443 = vadd.f32 %v4232, %v4427
        %v4444 = vadd.f32 %v4233, %v4432
        %v4445 = vadd.f32 %v4234, %v4435
        %v4446 = vld [vmem:[%s4235] sm:$0xff]
        %v4447 = vld [vmem:[%s4235 + $0x8] sm:$0x11]
        %v4448 = vld [vmem:[%s4235 + $0x10] sm:$0xff]
        %v4449 = vld [vmem:[%s4235 + $0x18] sm:$0x11]
        %v4450 = vld [vmem:[%s4235 + $0x20] sm:$0xff]
        %v4451 = vld [vmem:[%s4235 + $0x28] sm:$0x11]
        %v4452 = vld [vmem:[%s4235 + $0x30] sm:$0xff]
        %v4453 = vld [vmem:[%s4235 + $0x38] sm:$0x11]
        %v4454 = vld [vmem:[%s4235 + $0x40] sm:$0xff]
        %v4455 = vld [vmem:[%s4235 + $0x48] sm:$0x11]
        %v4456 = vld [vmem:[%s4235 + $0x50] sm:$0xff]
        %v4457 = vld [vmem:[%s4235 + $0x58] sm:$0x11]
        %v4458 = vld [vmem:[%s4235 + $0x60] sm:$0xff]
        %v4459 = vld [vmem:[%s4235 + $0x68] sm:$0x11]
        %v4460 = vld [vmem:[%s4235 + $0x70] sm:$0xff]
        %v4461 = vld [vmem:[%s4235 + $0x78] sm:$0x11]
        %v4463 = vshrl.u32 %v4446, 16
        %v4465 = vrot.slane %v4463, 4
        %v4466 = vshll.u32 %v4446, 16
        %v4468 = vrot.slane %v4466, 5
        %v4469 = vor.u32 %v4465, %v4468
        %v4470 = vrot.slane %v4469, 4
        %v4472 = vshll.u32 %v4447, 16
        %v4474 = vrot.slane %v4472, 5
        %v4475 = vsel %vm550, %v4470, %v4474
        %v4477 = vshrl.u32 %v4448, 16
        %v4479 = vrot.slane %v4477, 4
        %v4480 = vshll.u32 %v4448, 16
        %v4482 = vrot.slane %v4480, 5
        %v4483 = vor.u32 %v4479, %v4482
        %v4484 = vrot.slane %v4483, 4
        %v4486 = vshll.u32 %v4449, 16
        %v4488 = vrot.slane %v4486, 5
        %v4489 = vsel %vm550, %v4484, %v4488
        %v4491 = vshrl.u32 %v4450, 16
        %v4493 = vrot.slane %v4491, 4
        %v4494 = vshll.u32 %v4450, 16
        %v4496 = vrot.slane %v4494, 5
        %v4497 = vor.u32 %v4493, %v4496
        %v4498 = vrot.slane %v4497, 4
        %v4500 = vshll.u32 %v4451, 16
        %v4502 = vrot.slane %v4500, 5
        %v4503 = vsel %vm550, %v4498, %v4502
        %v4505 = vshrl.u32 %v4452, 16
        %v4507 = vrot.slane %v4505, 4
        %v4508 = vshll.u32 %v4452, 16
        %v4510 = vrot.slane %v4508, 5
        %v4511 = vor.u32 %v4507, %v4510
        %v4512 = vrot.slane %v4511, 4
        %v4514 = vshll.u32 %v4453, 16
        %v4516 = vrot.slane %v4514, 5
        %v4517 = vsel %vm550, %v4512, %v4516
        %v4519 = vshrl.u32 %v4454, 16
        %v4521 = vrot.slane %v4519, 4
        %v4522 = vshll.u32 %v4454, 16
        %v4524 = vrot.slane %v4522, 5
        %v4525 = vor.u32 %v4521, %v4524
        %v4526 = vrot.slane %v4525, 4
        %v4528 = vshll.u32 %v4455, 16
        %v4530 = vrot.slane %v4528, 5
        %v4531 = vsel %vm550, %v4526, %v4530
        %v4533 = vshrl.u32 %v4456, 16
        %v4535 = vrot.slane %v4533, 4
        %v4536 = vshll.u32 %v4456, 16
        %v4538 = vrot.slane %v4536, 5
        %v4539 = vor.u32 %v4535, %v4538
        %v4540 = vrot.slane %v4539, 4
        %v4542 = vshll.u32 %v4457, 16
        %v4544 = vrot.slane %v4542, 5
        %v4545 = vsel %vm550, %v4540, %v4544
        %v4547 = vshrl.u32 %v4458, 16
        %v4549 = vrot.slane %v4547, 4
        %v4550 = vshll.u32 %v4458, 16
        %v4552 = vrot.slane %v4550, 5
        %v4553 = vor.u32 %v4549, %v4552
        %v4554 = vrot.slane %v4553, 4
        %v4556 = vshll.u32 %v4459, 16
        %v4558 = vrot.slane %v4556, 5
        %v4559 = vsel %vm550, %v4554, %v4558
        %v4561 = vshrl.u32 %v4460, 16
        %v4563 = vrot.slane %v4561, 4
        %v4564 = vshll.u32 %v4460, 16
        %v4566 = vrot.slane %v4564, 5
        %v4567 = vor.u32 %v4563, %v4566
        %v4568 = vrot.slane %v4567, 4
        %v4570 = vshll.u32 %v4461, 16
        %v4572 = vrot.slane %v4570, 5
        %v4573 = vsel %vm550, %v4568, %v4572
        %s4574 = scalar_lea.vmem [#allocation9], 560
        %v4575 = vld [vmem:[%s4574] sm:$0xf]
        %v4576 = vld [vmem:[%s4574 + $0x4] sm:$0xf]
        %v4577 = vld [vmem:[%s4574 + $0x8] sm:$0xf]
        %v4578 = vld [vmem:[%s4574 + $0xc] sm:$0xf]
        %v4579 = vld [vmem:[%s4574 + $0x10] sm:$0xf]
        %v4580 = vld [vmem:[%s4574 + $0x14] sm:$0xf]
        %v4581 = vld [vmem:[%s4574 + $0x18] sm:$0xf]
        %v4582 = vld [vmem:[%s4574 + $0x1c] sm:$0xf]
        %v4583 = vld [vmem:[%s4574 + $0x20] sm:$0xf]
        %v4584 = vld [vmem:[%s4574 + $0x24] sm:$0xf]
        %v4585 = vld [vmem:[%s4574 + $0x28] sm:$0xf]
        %v4586 = vld [vmem:[%s4574 + $0x2c] sm:$0xf]
        %v4587 = vld [vmem:[%s4574 + $0x30] sm:$0xf]
        %v4588 = vld [vmem:[%s4574 + $0x34] sm:$0xf]
        %v4589 = vld [vmem:[%s4574 + $0x38] sm:$0xf]
        %v4590 = vld [vmem:[%s4574 + $0x3c] sm:$0xf]
        %v4591 = vld [vmem:[%s4574 + $0x40] sm:$0xf]
        %v4592 = vld [vmem:[%s4574 + $0x44] sm:$0xf]
        %v4593 = vld [vmem:[%s4574 + $0x48] sm:$0xf]
        %v4594 = vld [vmem:[%s4574 + $0x4c] sm:$0xf]
        %v4595 = vunpack.c.l.b16 %v4475
        %v4596 = vunpack.c.h.b16 %v4475
        %v4597 = vunpack.c.l.b16 %v4489
        %v4598 = vunpack.c.h.b16 %v4489
        %v4599 = vunpack.c.l.b16 %v4503
        %v4600 = vunpack.c.h.b16 %v4503
        %v4601 = vunpack.c.l.b16 %v4517
        %v4602 = vunpack.c.h.b16 %v4517
        %v4603 = vunpack.c.l.b16 %v4531
        %v4604 = vunpack.c.h.b16 %v4531
        %v4605 = vunpack.c.l.b16 %v4545
        %v4606 = vunpack.c.h.b16 %v4545
        %v4607 = vunpack.c.l.b16 %v4559
        %v4608 = vunpack.c.h.b16 %v4559
        %v4609 = vunpack.c.l.b16 %v4573
        %v4610 = vunpack.c.h.b16 %v4573
        %v4611 = vpack.c.b16 %v4597, %v4595
        %v4612 = vpack.c.b16 %v4598, %v4596
        %v4613 = vpack.c.b16 %v4601, %v4599
        %v4614 = vpack.c.b16 %v4602, %v4600
        %v4615 = vpack.c.b16 %v4605, %v4603
        %v4616 = vpack.c.b16 %v4606, %v4604
        %v4617 = vpack.c.b16 %v4609, %v4607
        %v4618 = vpack.c.b16 %v4610, %v4608
        %v4643 = vunpack.c.l.b16 %v4575
        %v4644 = vunpack.c.l.b16 %v4576
        %v4645 = vunpack.c.l.b16 %v4577
        %v4646 = vunpack.c.l.b16 %v4578
        %v4647 = vunpack.c.l.b16 %v4579
        %v4648 = vunpack.c.l.b16 %v4580
        %v4649 = vunpack.c.l.b16 %v4581
        %v4650 = vunpack.c.l.b16 %v4582
        %v4651 = vunpack.c.l.b16 %v4583
        %v4652 = vunpack.c.l.b16 %v4584
        %v4653 = vunpack.c.l.b16 %v4585
        %v4654 = vunpack.c.l.b16 %v4586
        %v4655 = vunpack.c.l.b16 %v4587
        %v4656 = vunpack.c.l.b16 %v4588
        %v4657 = vunpack.c.l.b16 %v4589
        %v4658 = vunpack.c.l.b16 %v4590
        %v4659 = vunpack.c.l.b16 %v4591
        %v4660 = vunpack.c.l.b16 %v4592
        %v4661 = vunpack.c.l.b16 %v4593
        %v4662 = vunpack.c.l.b16 %v4594
        %v4663 = vpack.c.b16 %v4644, %v4643
        %v4664 = vpack.c.b16 %v4646, %v4645
        %v4665 = vpack.c.b16 %v4648, %v4647
        %v4666 = vpack.c.b16 %v4650, %v4649
        %v4667 = vpack.c.b16 %v4652, %v4651
        %v4668 = vpack.c.b16 %v4654, %v4653
        %v4669 = vpack.c.b16 %v4656, %v4655
        %v4670 = vpack.c.b16 %v4658, %v4657
        %v4671 = vpack.c.b16 %v4660, %v4659
        %v4672 = vpack.c.b16 %v4662, %v4661
        %v4684 = vsel %vm2952, %v4612, 0
        %v4687 = vsel %vm2952, %v4614, 0
        %v4690 = vsel %vm2952, %v4616, 0
        %v4693 = vsel %vm2952, %v4618, 0
        %4695 = vmatprep.subr.bf16.mxu0 0
        %4696 = vmatpush1.bf16.msra.mxu0 %v4663
        %4697 = vmatprep.subr.bf16.mxu0 0
        %4698 = vmatpush1.bf16.msra.mxu0 %v4664
        %4699 = vmatprep.subr.bf16.mxu0 0
        %4700 = vmatpush1.bf16.msra.mxu0 %v4665
        %4701 = vmatprep.subr.bf16.mxu0 0
        %4702 = vmatpush1.bf16.msra.mxu0 %v4666
        %4703 = vmatprep.subr.bf16.mxu0 0
        %4704 = vmatpush1.bf16.msra.mxu0 %v4667
        %4705 = vmatprep.subr.bf16.mxu0 0
        %4706 = vmatpush1.bf16.msra.mxu0 %v4668
        %4707 = vmatprep.subr.bf16.mxu0 0
        %4708 = vmatpush1.bf16.msra.mxu0 %v4669
        %4709 = vmatprep.subr.bf16.mxu0 0
        %4710 = vmatpush1.bf16.msra.mxu0 %v4670
        %4711 = vmatprep.subr.bf16.mxu0 0
        %4712 = vmatpush1.bf16.msra.mxu0 %v4671
        %4713 = vmatprep.subr.bf16.mxu0 0
        %4714 = vmatpush1.bf16.msra.mxu0 %v4672
        %4715 = vmatprep.subr.bf16.mxu0 0
        %4716 = vmatpush1.bf16.msra.mxu0 0
        %4717 = vmatprep.subr.bf16.mxu0 0
        %4718 = vmatpush1.bf16.msra.mxu0 0
        %4719 = vmatprep.subr.bf16.mxu0 0
        %4720 = vmatpush1.bf16.msra.mxu0 0
        %4721 = vmatprep.subr.bf16.mxu0 0
        %4722 = vmatpush1.bf16.msra.mxu0 0
        %4723 = vmatprep.subr.bf16.mxu0 0
        %4724 = vmatpush1.bf16.msra.mxu0 0
        %4725 = vmatprep.subr.bf16.mxu0 0
        %4726 = vmatpush1.bf16.msra.mxu0 0
        %4727 = vmatprep.mubr.bf16.mxu0 %v4684
        %4728 = vmatmul.mubr.bf16.gmra.mrb[0].mxu0 %v4611
        %v4729 = vpop.f32.mrb[0].mxu0
        %v4730 = vadd.f32 0.0, %v4729
        %v4731 = vpop.f32.mrb[0].mxu0
        %v4732 = vpop.f32.mrb[0].mxu0
        %v4733 = vadd.f32 0.0, %v4732
        %v4734 = vpop.f32.mrb[0].mxu0
        %4735 = vmatprep.mubr.bf16.mxu0 %v4687
        %4736 = vmatmul.mubr.bf16.gmra.mrb[0].mxu0 %v4613
        %v4737 = vpop.f32.mrb[0].mxu0
        %v4738 = vadd.f32 0.0, %v4737
        %v4739 = vpop.f32.mrb[0].mxu0
        %v4740 = vpop.f32.mrb[0].mxu0
        %v4741 = vadd.f32 0.0, %v4740
        %v4742 = vpop.f32.mrb[0].mxu0
        %4743 = vmatprep.mubr.bf16.mxu0 %v4690
        %4744 = vmatmul.mubr.bf16.gmra.mrb[0].mxu0 %v4615
        %v4745 = vpop.f32.mrb[0].mxu0
        %v4746 = vadd.f32 0.0, %v4745
        %v4747 = vpop.f32.mrb[0].mxu0
        %v4748 = vpop.f32.mrb[0].mxu0
        %v4749 = vadd.f32 0.0, %v4748
        %v4750 = vpop.f32.mrb[0].mxu0
        %4751 = vmatprep.mubr.bf16.mxu0 %v4693
        %4752 = vmatmul.mubr.bf16.gmra.mrb[0].mxu0 %v4617
        %v4753 = vpop.f32.mrb[0].mxu0
        %v4754 = vadd.f32 0.0, %v4753
        %v4755 = vpop.f32.mrb[0].mxu0
        %v4756 = vpop.f32.mrb[0].mxu0
        %v4757 = vadd.f32 0.0, %v4756
        %v4758 = vpop.f32.mrb[0].mxu0
        %4759 = vdwg.mxu0
        %v4760 = vadd.f32 %v4438, %v4730
        %v4761 = vadd.f32 %v4439, %v4733
        %v4762 = vadd.f32 %v4440, %v4738
        %v4763 = vadd.f32 %v4441, %v4741
        %v4764 = vadd.f32 %v4442, %v4746
        %v4765 = vadd.f32 %v4443, %v4749
        %v4766 = vadd.f32 %v4444, %v4754
        %v4767 = vadd.f32 %v4445, %v4757
        %v4768 = vld [vmem:[%s4235] sm:$0xee]
        %v4769 = vld [vmem:[%s4235 + $0x10] sm:$0xee]
        %v4770 = vld [vmem:[%s4235 + $0x20] sm:$0xee]
        %v4771 = vld [vmem:[%s4235 + $0x30] sm:$0xee]
        %v4772 = vld [vmem:[%s4235 + $0x40] sm:$0xee]
        %v4773 = vld [vmem:[%s4235 + $0x50] sm:$0xee]
        %v4774 = vld [vmem:[%s4235 + $0x60] sm:$0xee]
        %v4775 = vld [vmem:[%s4235 + $0x70] sm:$0xee]
        %v4792 = vrot.slane %v4768, 5
        %v4793 = vrot.slane %v4792, 4
        %v4794 = vrot.slane %v4447, 5
        %v4795 = vsel %vm918, %v4793, %v4794
        %v4796 = vrot.slane %v4769, 5
        %v4797 = vrot.slane %v4796, 4
        %v4798 = vrot.slane %v4449, 5
        %v4799 = vsel %vm918, %v4797, %v4798
        %v4800 = vrot.slane %v4770, 5
        %v4801 = vrot.slane %v4800, 4
        %v4802 = vrot.slane %v4451, 5
        %v4803 = vsel %vm918, %v4801, %v4802
        %v4804 = vrot.slane %v4771, 5
        %v4805 = vrot.slane %v4804, 4
        %v4806 = vrot.slane %v4453, 5
        %v4807 = vsel %vm918, %v4805, %v4806
        %v4808 = vrot.slane %v4772, 5
        %v4809 = vrot.slane %v4808, 4
        %v4810 = vrot.slane %v4455, 5
        %v4811 = vsel %vm918, %v4809, %v4810
        %v4812 = vrot.slane %v4773, 5
        %v4813 = vrot.slane %v4812, 4
        %v4814 = vrot.slane %v4457, 5
        %v4815 = vsel %vm918, %v4813, %v4814
        %v4816 = vrot.slane %v4774, 5
        %v4817 = vrot.slane %v4816, 4
        %v4818 = vrot.slane %v4459, 5
        %v4819 = vsel %vm918, %v4817, %v4818
        %v4820 = vrot.slane %v4775, 5
        %v4821 = vrot.slane %v4820, 4
        %v4822 = vrot.slane %v4461, 5
        %v4823 = vsel %vm918, %v4821, %v4822
        %s4824 = scalar_lea.vmem [#allocation9], 640
        %v4825 = vld [vmem:[%s4824] sm:$0xf]
        %v4826 = vld [vmem:[%s4824 + $0x4] sm:$0xf]
        %v4827 = vld [vmem:[%s4824 + $0x8] sm:$0xf]
        %v4828 = vld [vmem:[%s4824 + $0xc] sm:$0xf]
        %v4829 = vld [vmem:[%s4824 + $0x10] sm:$0xf]
        %v4830 = vld [vmem:[%s4824 + $0x14] sm:$0xf]
        %v4831 = vld [vmem:[%s4824 + $0x18] sm:$0xf]
        %v4832 = vld [vmem:[%s4824 + $0x1c] sm:$0xf]
        %v4833 = vld [vmem:[%s4824 + $0x20] sm:$0xf]
        %v4834 = vld [vmem:[%s4824 + $0x24] sm:$0xf]
        %v4835 = vld [vmem:[%s4824 + $0x28] sm:$0xf]
        %v4836 = vld [vmem:[%s4824 + $0x2c] sm:$0xf]
        %v4837 = vld [vmem:[%s4824 + $0x30] sm:$0xf]
        %v4838 = vld [vmem:[%s4824 + $0x34] sm:$0xf]
        %v4839 = vld [vmem:[%s4824 + $0x38] sm:$0xf]
        %v4840 = vld [vmem:[%s4824 + $0x3c] sm:$0xf]
        %v4841 = vld [vmem:[%s4824 + $0x40] sm:$0xf]
        %v4842 = vld [vmem:[%s4824 + $0x44] sm:$0xf]
        %v4843 = vld [vmem:[%s4824 + $0x48] sm:$0xf]
        %v4844 = vld [vmem:[%s4824 + $0x4c] sm:$0xf]
        %v4845 = vunpack.c.l.b16 %v4795
        %v4846 = vunpack.c.h.b16 %v4795
        %v4847 = vunpack.c.l.b16 %v4799
        %v4848 = vunpack.c.h.b16 %v4799
        %v4849 = vunpack.c.l.b16 %v4803
        %v4850 = vunpack.c.h.b16 %v4803
        %v4851 = vunpack.c.l.b16 %v4807
        %v4852 = vunpack.c.h.b16 %v4807
        %v4853 = vunpack.c.l.b16 %v4811
        %v4854 = vunpack.c.h.b16 %v4811
        %v4855 = vunpack.c.l.b16 %v4815
        %v4856 = vunpack.c.h.b16 %v4815
        %v4857 = vunpack.c.l.b16 %v4819
        %v4858 = vunpack.c.h.b16 %v4819
        %v4859 = vunpack.c.l.b16 %v4823
        %v4860 = vunpack.c.h.b16 %v4823
        %v4861 = vpack.c.b16 %v4847, %v4845
        %v4862 = vpack.c.b16 %v4848, %v4846
        %v4863 = vpack.c.b16 %v4851, %v4849
        %v4864 = vpack.c.b16 %v4852, %v4850
        %v4865 = vpack.c.b16 %v4855, %v4853
        %v4866 = vpack.c.b16 %v4856, %v4854
        %v4867 = vpack.c.b16 %v4859, %v4857
        %v4868 = vpack.c.b16 %v4860, %v4858
        %v4893 = vunpack.c.l.b16 %v4825
        %v4894 = vunpack.c.l.b16 %v4826
        %v4895 = vunpack.c.l.b16 %v4827
        %v4896 = vunpack.c.l.b16 %v4828
        %v4897 = vunpack.c.l.b16 %v4829
        %v4898 = vunpack.c.l.b16 %v4830
        %v4899 = vunpack.c.l.b16 %v4831
        %v4900 = vunpack.c.l.b16 %v4832
        %v4901 = vunpack.c.l.b16 %v4833
        %v4902 = vunpack.c.l.b16 %v4834
        %v4903 = vunpack.c.l.b16 %v4835
        %v4904 = vunpack.c.l.b16 %v4836
        %v4905 = vunpack.c.l.b16 %v4837
        %v4906 = vunpack.c.l.b16 %v4838
        %v4907 = vunpack.c.l.b16 %v4839
        %v4908 = vunpack.c.l.b16 %v4840
        %v4909 = vunpack.c.l.b16 %v4841
        %v4910 = vunpack.c.l.b16 %v4842
        %v4911 = vunpack.c.l.b16 %v4843
        %v4912 = vunpack.c.l.b16 %v4844
        %v4913 = vpack.c.b16 %v4894, %v4893
        %v4914 = vpack.c.b16 %v4896, %v4895
        %v4915 = vpack.c.b16 %v4898, %v4897
        %v4916 = vpack.c.b16 %v4900, %v4899
        %v4917 = vpack.c.b16 %v4902, %v4901
        %v4918 = vpack.c.b16 %v4904, %v4903
        %v4919 = vpack.c.b16 %v4906, %v4905
        %v4920 = vpack.c.b16 %v4908, %v4907
        %v4921 = vpack.c.b16 %v4910, %v4909
        %v4922 = vpack.c.b16 %v4912, %v4911
        %v4934 = vsel %vm2952, %v4862, 0
        %v4937 = vsel %vm2952, %v4864, 0
        %v4940 = vsel %vm2952, %v4866, 0
        %v4943 = vsel %vm2952, %v4868, 0
        %4945 = vmatprep.subr.bf16.mxu0 0
        %4946 = vmatpush1.bf16.msra.mxu0 %v4913
        %4947 = vmatprep.subr.bf16.mxu0 0
        %4948 = vmatpush1.bf16.msra.mxu0 %v4914
        %4949 = vmatprep.subr.bf16.mxu0 0
        %4950 = vmatpush1.bf16.msra.mxu0 %v4915
        %4951 = vmatprep.subr.bf16.mxu0 0
        %4952 = vmatpush1.bf16.msra.mxu0 %v4916
        %4953 = vmatprep.subr.bf16.mxu0 0
        %4954 = vmatpush1.bf16.msra.mxu0 %v4917
        %4955 = vmatprep.subr.bf16.mxu0 0
        %4956 = vmatpush1.bf16.msra.mxu0 %v4918
        %4957 = vmatprep.subr.bf16.mxu0 0
        %4958 = vmatpush1.bf16.msra.mxu0 %v4919
        %4959 = vmatprep.subr.bf16.mxu0 0
        %4960 = vmatpush1.bf16.msra.mxu0 %v4920
        %4961 = vmatprep.subr.bf16.mxu0 0
        %4962 = vmatpush1.bf16.msra.mxu0 %v4921
        %4963 = vmatprep.subr.bf16.mxu0 0
        %4964 = vmatpush1.bf16.msra.mxu0 %v4922
        %4965 = vmatprep.subr.bf16.mxu0 0
        %4966 = vmatpush1.bf16.msra.mxu0 0
        %4967 = vmatprep.subr.bf16.mxu0 0
        %4968 = vmatpush1.bf16.msra.mxu0 0
        %4969 = vmatprep.subr.bf16.mxu0 0
        %4970 = vmatpush1.bf16.msra.mxu0 0
        %4971 = vmatprep.subr.bf16.mxu0 0
        %4972 = vmatpush1.bf16.msra.mxu0 0
        %4973 = vmatprep.subr.bf16.mxu0 0
        %4974 = vmatpush1.bf16.msra.mxu0 0
        %4975 = vmatprep.subr.bf16.mxu0 0
        %4976 = vmatpush1.bf16.msra.mxu0 0
        %4977 = vmatprep.mubr.bf16.mxu0 %v4934
        %4978 = vmatmul.mubr.bf16.gmra.mrb[0].mxu0 %v4861
        %v4979 = vpop.f32.mrb[0].mxu0
        %v4980 = vadd.f32 0.0, %v4979
        %v4981 = vpop.f32.mrb[0].mxu0
        %v4982 = vpop.f32.mrb[0].mxu0
        %v4983 = vadd.f32 0.0, %v4982
        %v4984 = vpop.f32.mrb[0].mxu0
        %4985 = vmatprep.mubr.bf16.mxu0 %v4937
        %4986 = vmatmul.mubr.bf16.gmra.mrb[0].mxu0 %v4863
        %v4987 = vpop.f32.mrb[0].mxu0
        %v4988 = vadd.f32 0.0, %v4987
        %v4989 = vpop.f32.mrb[0].mxu0
        %v4990 = vpop.f32.mrb[0].mxu0
        %v4991 = vadd.f32 0.0, %v4990
        %v4992 = vpop.f32.mrb[0].mxu0
        %4993 = vmatprep.mubr.bf16.mxu0 %v4940
        %4994 = vmatmul.mubr.bf16.gmra.mrb[0].mxu0 %v4865
        %v4995 = vpop.f32.mrb[0].mxu0
        %v4996 = vadd.f32 0.0, %v4995
        %v4997 = vpop.f32.mrb[0].mxu0
        %v4998 = vpop.f32.mrb[0].mxu0
        %v4999 = vadd.f32 0.0, %v4998
        %v5000 = vpop.f32.mrb[0].mxu0
        %5001 = vmatprep.mubr.bf16.mxu0 %v4943
        %5002 = vmatmul.mubr.bf16.gmra.mrb[0].mxu0 %v4867
        %v5003 = vpop.f32.mrb[0].mxu0
        %v5004 = vadd.f32 0.0, %v5003
        %v5005 = vpop.f32.mrb[0].mxu0
        %v5006 = vpop.f32.mrb[0].mxu0
        %v5007 = vadd.f32 0.0, %v5006
        %v5008 = vpop.f32.mrb[0].mxu0
        %5009 = vdwg.mxu0
        %v5010 = vadd.f32 %v4760, %v4980
        %v5011 = vadd.f32 %v4761, %v4983
        %v5012 = vadd.f32 %v4762, %v4988
        %v5013 = vadd.f32 %v4763, %v4991
        %v5014 = vadd.f32 %v4764, %v4996
        %v5015 = vadd.f32 %v4765, %v4999
        %v5016 = vadd.f32 %v4766, %v5004
        %v5017 = vadd.f32 %v4767, %v5007
        %v5018 = vlaneseq
        %v5019 = vshrl.u32 %v5018, 7
        %v5020 = vsub.s32 3, %v5019
        %v5021 = vrot.slane %v302, %v5020
        %v5022 = vadd.f32 %v5010, %v5021
        %v5023 = vadd.f32 %v5011, %v5021
        %v5024 = vadd.f32 %v5012, %v5021
        %v5025 = vadd.f32 %v5013, %v5021
        %v5026 = vadd.f32 %v5014, %v5021
        %v5027 = vadd.f32 %v5015, %v5021
        %v5028 = vadd.f32 %v5016, %v5021
        %v5029 = vadd.f32 %v5017, %v5021
        %v5030 = vadd.f32 %v5022, %v5023
        %v5031 = vadd.f32 %v5030, %v5024
        %v5032 = vadd.f32 %v5031, %v5025
        %v5033 = vadd.f32 %v5032, %v5026
        %v5034 = vadd.f32 %v5033, %v5027
        %v5035 = vadd.f32 %v5034, %v5028
        %v5036 = vadd.f32 %v5035, %v5029
        %v5037 = vrot.slane %v5036, 4
        %v5038 = vadd.f32 %v5036, %v5037
        %v5039 = vrot.slane %v5038, 2
        %v5040 = vadd.f32 %v5038, %v5039
        %v5041 = vrot.slane %v5040, 1
        %v5042 = vadd.f32 %v5040, %v5041
        %v5043 = vmul.f32 %v5022, %v5022
        %v5044 = vmul.f32 %v5023, %v5023
        %v5045 = vmul.f32 %v5024, %v5024
        %v5046 = vmul.f32 %v5025, %v5025
        %v5047 = vmul.f32 %v5026, %v5026
        %v5048 = vmul.f32 %v5027, %v5027
        %v5049 = vmul.f32 %v5028, %v5028
        %v5050 = vmul.f32 %v5029, %v5029
        %v5051 = vadd.f32 %v5043, %v5044
        %v5052 = vadd.f32 %v5051, %v5045
        %v5053 = vadd.f32 %v5052, %v5046
        %v5054 = vadd.f32 %v5053, %v5047
        %v5055 = vadd.f32 %v5054, %v5048
        %v5056 = vadd.f32 %v5055, %v5049
        %v5057 = vadd.f32 %v5056, %v5050
        %v5058 = vrot.slane %v5057, 4
        %v5059 = vadd.f32 %v5057, %v5058
        %v5060 = vrot.slane %v5059, 2
        %v5061 = vadd.f32 %v5059, %v5060
        %v5062 = vrot.slane %v5061, 1
        %v5063 = vadd.f32 %v5061, %v5062
        %v5064 = vsel %vm330, %v5042, %v5063
        %5065 = vmatprep.subr.mxu0 0.0
        %5066 = vmatpush1.xpose.msra.mxu0 %v303
        %5067 = vmatprep.subr.mxu0 0.0
        %5068 = vmatpush1.xpose.msra.mxu0 0.0
        %5069 = vmatprep.subr.mxu0 0.0
        %5070 = vmatpush1.xpose.msra.mxu0 0.0
        %5071 = vmatprep.subr.mxu0 0.0
        %5072 = vmatpush1.xpose.msra.mxu0 0.0
        %5073 = vmatprep.subr.mxu0 0.0
        %5074 = vmatpush1.xpose.msra.mxu0 0.0
        %5075 = vmatprep.subr.mxu0 0.0
        %5076 = vmatpush1.xpose.msra.mxu0 0.0
        %5077 = vmatprep.subr.mxu0 0.0
        %5078 = vmatpush1.xpose.msra.mxu0 0.0
        %5079 = vmatprep.subr.mxu0 0.0
        %5080 = vmatpush1.xpose.msra.mxu0 0.0
        %5081 = vmatprep.subr.mxu0 0.0
        %5082 = vmatpush1.xpose.msra.mxu0 0.0
        %5083 = vmatprep.subr.mxu0 0.0
        %5084 = vmatpush1.xpose.msra.mxu0 0.0
        %5085 = vmatprep.subr.mxu0 0.0
        %5086 = vmatpush1.xpose.msra.mxu0 0.0
        %5087 = vmatprep.subr.mxu0 0.0
        %5088 = vmatpush1.xpose.msra.mxu0 0.0
        %5089 = vmatprep.subr.mxu0 0.0
        %5090 = vmatpush1.xpose.msra.mxu0 0.0
        %5091 = vmatprep.subr.mxu0 0.0
        %5092 = vmatpush1.xpose.msra.mxu0 0.0
        %5093 = vmatprep.subr.mxu0 0.0
        %5094 = vmatpush1.xpose.msra.mxu0 0.0
        %5095 = vmatprep.subr.mxu0 0.0
        %5096 = vmatpush1.xpose.msra.mxu0 0.0
        %5097 = vmatprep.subr.mxu0 0.0
        %5098 = vmatpush1.xpose.msra.mxu0 0.0
        %5099 = vmatprep.subr.mxu0 0.0
        %5100 = vmatpush1.xpose.msra.mxu0 0.0
        %5101 = vmatprep.subr.mxu0 0.0
        %5102 = vmatpush1.xpose.msra.mxu0 0.0
        %5103 = vmatprep.subr.mxu0 0.0
        %5104 = vmatpush1.xpose.msra.mxu0 0.0
        %5105 = vmatprep.subr.mxu0 0.0
        %5106 = vmatpush1.xpose.msra.mxu0 0.0
        %5107 = vmatprep.subr.mxu0 0.0
        %5108 = vmatpush1.xpose.msra.mxu0 0.0
        %5109 = vmatprep.subr.mxu0 0.0
        %5110 = vmatpush1.xpose.msra.mxu0 0.0
        %5111 = vmatprep.subr.mxu0 0.0
        %5112 = vmatpush1.xpose.msra.mxu0 0.0
        %5113 = vmatprep.subr.mxu0 0.0
        %5114 = vmatpush1.xpose.msra.mxu0 0.0
        %5115 = vmatprep.subr.mxu0 0.0
        %5116 = vmatpush1.xpose.msra.mxu0 0.0
        %5117 = vmatprep.subr.mxu0 0.0
        %5118 = vmatpush1.xpose.msra.mxu0 0.0
        %5119 = vmatprep.subr.mxu0 0.0
        %5120 = vmatpush1.xpose.msra.mxu0 0.0
        %5121 = vmatprep.subr.mxu0 0.0
        %5122 = vmatpush1.xpose.msra.mxu0 0.0
        %5123 = vmatprep.subr.mxu0 0.0
        %5124 = vmatpush1.xpose.msra.mxu0 0.0
        %5125 = vmatprep.subr.mxu0 0.0
        %5126 = vmatpush1.xpose.msra.mxu0 0.0
        %5127 = vmatprep.subr.mxu0 0.0
        %5128 = vmatpush1.xpose.msra.mxu0 0.0
        %5129 = vmatprep.mubr.f32.mxu0 0.0
        %5130 = vmatmul.mubr.f32.gmra.mrb[0].mxu0 %v5064
        %v5131 = vpop.f32.mrb[0].mxu0
        %v5132 = vadd.f32 0.0, %v5131
        %v5133 = vpop.f32.mrb[0].mxu0
        %5134 = vdwg.mxu0
        %v5135 = vmul.f32 %v5132, %v2316
        %v5136 = vmul.f32 %v5135, %v5135
        %v5138 = vrot.slane %v5136, 7
        %v5140 = vsub.f32 %v5135, %v5138
        %v5141 = vmax.f32 %v5140, 0.0
        %v5142 = vadd.f32 %v5141, 1e-05
        %v5143 = vrsqrt.pop %v5142
        %v5144 = vsel %vm330, %v5135, %v5143
        %v5146 = vsel %vm2327, %v5144, 0
        %5148 = vmatprep.subr.mxu0 0.0
        %5149 = vmatpush1.msra.mxu0 %v303
        %5150 = vmatprep.subr.mxu0 0.0
        %5151 = vmatpush1.msra.mxu0 0.0
        %5152 = vmatprep.subr.mxu0 0.0
        %5153 = vmatpush1.msra.mxu0 0.0
        %5154 = vmatprep.subr.mxu0 0.0
        %5155 = vmatpush1.msra.mxu0 0.0
        %5156 = vmatprep.subr.mxu0 0.0
        %5157 = vmatpush1.msra.mxu0 0.0
        %5158 = vmatprep.subr.mxu0 0.0
        %5159 = vmatpush1.msra.mxu0 0.0
        %5160 = vmatprep.subr.mxu0 0.0
        %5161 = vmatpush1.msra.mxu0 0.0
        %5162 = vmatprep.subr.mxu0 0.0
        %5163 = vmatpush1.msra.mxu0 0.0
        %5164 = vmatprep.subr.mxu0 0.0
        %5165 = vmatpush1.msra.mxu0 0.0
        %5166 = vmatprep.subr.mxu0 0.0
        %5167 = vmatpush1.msra.mxu0 0.0
        %5168 = vmatprep.subr.mxu0 0.0
        %5169 = vmatpush1.msra.mxu0 0.0
        %5170 = vmatprep.subr.mxu0 0.0
        %5171 = vmatpush1.msra.mxu0 0.0
        %5172 = vmatprep.subr.mxu0 0.0
        %5173 = vmatpush1.msra.mxu0 0.0
        %5174 = vmatprep.subr.mxu0 0.0
        %5175 = vmatpush1.msra.mxu0 0.0
        %5176 = vmatprep.subr.mxu0 0.0
        %5177 = vmatpush1.msra.mxu0 0.0
        %5178 = vmatprep.subr.mxu0 0.0
        %5179 = vmatpush1.msra.mxu0 0.0
        %5180 = vmatprep.subr.mxu0 0.0
        %5181 = vmatpush1.msra.mxu0 0.0
        %5182 = vmatprep.subr.mxu0 0.0
        %5183 = vmatpush1.msra.mxu0 0.0
        %5184 = vmatprep.subr.mxu0 0.0
        %5185 = vmatpush1.msra.mxu0 0.0
        %5186 = vmatprep.subr.mxu0 0.0
        %5187 = vmatpush1.msra.mxu0 0.0
        %5188 = vmatprep.subr.mxu0 0.0
        %5189 = vmatpush1.msra.mxu0 0.0
        %5190 = vmatprep.subr.mxu0 0.0
        %5191 = vmatpush1.msra.mxu0 0.0
        %5192 = vmatprep.subr.mxu0 0.0
        %5193 = vmatpush1.msra.mxu0 0.0
        %5194 = vmatprep.subr.mxu0 0.0
        %5195 = vmatpush1.msra.mxu0 0.0
        %5196 = vmatprep.subr.mxu0 0.0
        %5197 = vmatpush1.msra.mxu0 0.0
        %5198 = vmatprep.subr.mxu0 0.0
        %5199 = vmatpush1.msra.mxu0 0.0
        %5200 = vmatprep.subr.mxu0 0.0
        %5201 = vmatpush1.msra.mxu0 0.0
        %5202 = vmatprep.subr.mxu0 0.0
        %5203 = vmatpush1.msra.mxu0 0.0
        %5204 = vmatprep.subr.mxu0 0.0
        %5205 = vmatpush1.msra.mxu0 0.0
        %5206 = vmatprep.subr.mxu0 0.0
        %5207 = vmatpush1.msra.mxu0 0.0
        %5208 = vmatprep.subr.mxu0 0.0
        %5209 = vmatpush1.msra.mxu0 0.0
        %5210 = vmatprep.subr.mxu0 0.0
        %5211 = vmatpush1.msra.mxu0 0.0
        %5212 = vmatprep.mubr.f32.mxu0 0.0
        %5213 = vmatmul.mubr.f32.gmra.mrb[0].mxu0 %v5146
        %v5214 = vpop.f32.mrb[0].mxu0
        %v5215 = vadd.f32 0.0, %v5214
        %v5216 = vpop.f32.mrb[0].mxu0
        %5217 = vdwg.mxu0
        %v5218 = vlaneseq
        %v5219 = vshrl.u32 %v5218, 7
        %v5220 = vsub.s32 0, %v5219
        %v5221 = vrot.slane %v5215, %v5220
        %v5222 = vsub.f32 %v5022, %v5221
        %v5223 = vsub.f32 %v5023, %v5221
        %v5224 = vsub.f32 %v5024, %v5221
        %v5225 = vsub.f32 %v5025, %v5221
        %v5226 = vsub.f32 %v5026, %v5221
        %v5227 = vsub.f32 %v5027, %v5221
        %v5228 = vsub.f32 %v5028, %v5221
        %v5229 = vsub.f32 %v5029, %v5221
        %v5230 = vlaneseq
        %v5231 = vshrl.u32 %v5230, 7
        %v5232 = vsub.s32 1, %v5231
        %v5233 = vrot.slane %v5215, %v5232
        %v5234 = vmul.f32 %v5222, %v5233
        %v5235 = vmul.f32 %v5223, %v5233
        %v5236 = vmul.f32 %v5224, %v5233
        %v5237 = vmul.f32 %v5225, %v5233
        %v5238 = vmul.f32 %v5226, %v5233
        %v5239 = vmul.f32 %v5227, %v5233
        %v5240 = vmul.f32 %v5228, %v5233
        %v5241 = vmul.f32 %v5229, %v5233
        %v5242 = vlaneseq
        %v5243 = vshrl.u32 %v5242, 7
        %v5244 = vsub.s32 4, %v5243
        %v5245 = vrot.slane %v302, %v5244
        %v5246 = vmul.f32 %v5234, %v5245
        %v5247 = vmul.f32 %v5235, %v5245
        %v5248 = vmul.f32 %v5236, %v5245
        %v5249 = vmul.f32 %v5237, %v5245
        %v5250 = vmul.f32 %v5238, %v5245
        %v5251 = vmul.f32 %v5239, %v5245
        %v5252 = vmul.f32 %v5240, %v5245
        %v5253 = vmul.f32 %v5241, %v5245
        %v5254 = vlaneseq
        %v5255 = vshrl.u32 %v5254, 7
        %v5256 = vsub.s32 5, %v5255
        %v5257 = vrot.slane %v302, %v5256
        %v5258 = vadd.f32 %v5246, %v5257
        %v5259 = vadd.f32 %v5247, %v5257
        %v5260 = vadd.f32 %v5248, %v5257
        %v5261 = vadd.f32 %v5249, %v5257
        %v5262 = vadd.f32 %v5250, %v5257
        %v5263 = vadd.f32 %v5251, %v5257
        %v5264 = vadd.f32 %v5252, %v5257
        %v5265 = vadd.f32 %v5253, %v5257
        %v5266 = vmax.f32 %v5258, 0.0
        %v5267 = vmax.f32 %v5259, 0.0
        %v5268 = vmax.f32 %v5260, 0.0
        %v5269 = vmax.f32 %v5261, 0.0
        %v5270 = vmax.f32 %v5262, 0.0
        %v5271 = vmax.f32 %v5263, 0.0
        %v5272 = vmax.f32 %v5264, 0.0
        %v5273 = vmax.f32 %v5265, 0.0
        %v5274 = vld [vmem:[#allocation10] sm:$0xf]
        %v5275 = vld [vmem:[#allocation10 + $0x4] sm:$0xf]
        %v5276 = vld [vmem:[#allocation10 + $0x8] sm:$0xf]
        %v5277 = vld [vmem:[#allocation10 + $0xc] sm:$0xf]
        %v5278 = vlaneseq
        %v5279 = vshrl.u32 %v5278, 7
        %v5280 = vsub.s32 6, %v5279
        %v5281 = vrot.slane %v302, %v5280
        %v5290 = vunpack.c.l.b16 %v352
        %v5291 = vunpack.c.l.b16 %v353
        %v5292 = vunpack.c.l.b16 %v354
        %v5293 = vunpack.c.l.b16 %v355
        %v5294 = vunpack.c.l.b16 %v356
        %v5295 = vunpack.c.l.b16 %v357
        %v5296 = vunpack.c.l.b16 %v358
        %v5297 = vunpack.c.l.b16 %v359
        %v5298 = vpack.c.b16 %v5291, %v5290
        %v5299 = vpack.c.b16 %v5293, %v5292
        %v5300 = vpack.c.b16 %v5295, %v5294
        %v5301 = vpack.c.b16 %v5297, %v5296
        %v5306 = vunpack.c.l.b16 %v5274
        %v5307 = vunpack.c.l.b16 %v5275
        %v5308 = vunpack.c.l.b16 %v5276
        %v5309 = vunpack.c.l.b16 %v5277
        %v5310 = vpack.c.b16 %v5307, %v5306
        %v5311 = vpack.c.b16 %v5309, %v5308
        %v5315 = vsel %vm2952, %v5298, 0
        %v5318 = vsel %vm2952, %v5299, 0
        %v5321 = vsel %vm2952, %v5300, 0
        %v5324 = vsel %vm2952, %v5301, 0
        %5326 = vmatprep.subr.bf16.mxu0 0
        %5327 = vmatpush1.bf16.msra.mxu0 %v5310
        %5328 = vmatprep.subr.bf16.mxu0 0
        %5329 = vmatpush1.bf16.msra.mxu0 %v5311
        %5330 = vmatprep.subr.bf16.mxu0 0
        %5331 = vmatpush1.bf16.msra.mxu0 0
        %5332 = vmatprep.subr.bf16.mxu0 0
        %5333 = vmatpush1.bf16.msra.mxu0 0
        %5334 = vmatprep.subr.bf16.mxu0 0
        %5335 = vmatpush1.bf16.msra.mxu0 0
        %5336 = vmatprep.subr.bf16.mxu0 0
        %5337 = vmatpush1.bf16.msra.mxu0 0
        %5338 = vmatprep.subr.bf16.mxu0 0
        %5339 = vmatpush1.bf16.msra.mxu0 0
        %5340 = vmatprep.subr.bf16.mxu0 0
        %5341 = vmatpush1.bf16.msra.mxu0 0
        %5342 = vmatprep.subr.bf16.mxu0 0
        %5343 = vmatpush1.bf16.msra.mxu0 0
        %5344 = vmatprep.subr.bf16.mxu0 0
        %5345 = vmatpush1.bf16.msra.mxu0 0
        %5346 = vmatprep.subr.bf16.mxu0 0
        %5347 = vmatpush1.bf16.msra.mxu0 0
        %5348 = vmatprep.subr.bf16.mxu0 0
        %5349 = vmatpush1.bf16.msra.mxu0 0
        %5350 = vmatprep.subr.bf16.mxu0 0
        %5351 = vmatpush1.bf16.msra.mxu0 0
        %5352 = vmatprep.subr.bf16.mxu0 0
        %5353 = vmatpush1.bf16.msra.mxu0 0
        %5354 = vmatprep.subr.bf16.mxu0 0
        %5355 = vmatpush1.bf16.msra.mxu0 0
        %5356 = vmatprep.subr.bf16.mxu0 0
        %5357 = vmatpush1.bf16.msra.mxu0 0
        %5358 = vmatprep.mubr.bf16.mxu0 0
        %5359 = vmatmul.mubr.bf16.gmra.mrb[0].mxu0 %v5315
        %v5360 = vpop.f32.mrb[0].mxu0
        %v5361 = vadd.f32 %v5281, %v5360
        %v5362 = vpop.f32.mrb[0].mxu0
        %v5363 = vpop.f32.mrb[0].mxu0
        %v5364 = vadd.f32 %v5281, %v5363
        %v5365 = vpop.f32.mrb[0].mxu0
        %5366 = vmatprep.mubr.bf16.mxu0 0
        %5367 = vmatmul.mubr.bf16.gmra.mrb[0].mxu0 %v5318
        %v5368 = vpop.f32.mrb[0].mxu0
        %v5369 = vadd.f32 %v5281, %v5368
        %v5370 = vpop.f32.mrb[0].mxu0
        %v5371 = vpop.f32.mrb[0].mxu0
        %v5372 = vadd.f32 %v5281, %v5371
        %v5373 = vpop.f32.mrb[0].mxu0
        %5374 = vmatprep.mubr.bf16.mxu0 0
        %5375 = vmatmul.mubr.bf16.gmra.mrb[0].mxu0 %v5321
        %v5376 = vpop.f32.mrb[0].mxu0
        %v5377 = vadd.f32 %v5281, %v5376
        %v5378 = vpop.f32.mrb[0].mxu0
        %v5379 = vpop.f32.mrb[0].mxu0
        %v5380 = vadd.f32 %v5281, %v5379
        %v5381 = vpop.f32.mrb[0].mxu0
        %5382 = vmatprep.mubr.bf16.mxu0 0
        %5383 = vmatmul.mubr.bf16.gmra.mrb[0].mxu0 %v5324
        %v5384 = vpop.f32.mrb[0].mxu0
        %v5385 = vadd.f32 %v5281, %v5384
        %v5386 = vpop.f32.mrb[0].mxu0
        %v5387 = vpop.f32.mrb[0].mxu0
        %v5388 = vadd.f32 %v5281, %v5387
        %v5389 = vpop.f32.mrb[0].mxu0
        %5390 = vdwg.mxu0
        %v5391 = vadd.f32 %v5361, %v5266
        %v5392 = vadd.f32 %v5364, %v5267
        %v5393 = vadd.f32 %v5369, %v5268
        %v5394 = vadd.f32 %v5372, %v5269
        %v5395 = vadd.f32 %v5377, %v5270
        %v5396 = vadd.f32 %v5380, %v5271
        %v5397 = vadd.f32 %v5385, %v5272
        %v5398 = vadd.f32 %v5388, %v5273
        %5399 = vst [vmem:[%s300] sm:$0xff] %v5391
        %5400 = vst [vmem:[%s300 + $0x8] sm:$0xff] %v5392
        %5401 = vst [vmem:[%s300 + $0x10] sm:$0xff] %v5393
        %5402 = vst [vmem:[%s300 + $0x18] sm:$0xff] %v5394
        %5403 = vst [vmem:[%s300 + $0x20] sm:$0xff] %v5395
        %5404 = vst [vmem:[%s300 + $0x28] sm:$0xff] %v5396
        %5405 = vst [vmem:[%s300 + $0x30] sm:$0xff] %v5397
        %5406 = vst [vmem:[%s300 + $0x38] sm:$0xff] %v5398
        %s5407 = sand.u32 %s142, 1
        %s5408 = scalar_lea.sflag [#allocation6], %s5407
        %s5409 = sand.u32 %s142, 1
        %s5410 = smul.addr %s5409, 64
        %s5411 = scalar_lea.vmem [#allocation13], %s5410
        // Predicated region
        $region61: #{tpu_custom_call.1} parent=39 // pred_check
          %p5412 = pneg %p152
        $region62: #{tpu_custom_call.1} parent=39 // pred_check_branch
          %5414 = sbr.rel (%p5412) target = $region64
        $region63: #{tpu_custom_call.1} parent=39 // pred_region
          %s5416 = ssub.s32 1024, 1024
          %5417 = vsyncadd %s5408, %s5416
          %s5418 = smul.addr %s24, 8
          %s5419 = smul.addr %s5418, 128
          %s5420 = scalar_lea.hbm %s5, %s5419
          %s5421 = sshll.u32 %s5411, 4
          %s5422 = int_to_ptr.vmem [resolvable:$true] %s5421
          %5427 = dma.vmem_to_hbm [thread:$0]  %s5422, 1024, %s5420, %s5408, 128, 128, 8
        $region64: #{tpu_custom_call.1} parent=39 // pred_fallthru
          _
      $region40: #{tpu_custom_call.1} parent=5 // pred_fallthru
        _
      %p5428 = scmp.le.s32.totalorder 2, %s19
      // Predicated region
      $region65: #{tpu_custom_call.1} parent=5 // pred_check
        %p5429 = pneg %p5428
      $region66: #{tpu_custom_call.1} parent=5 // pred_check_branch
        %5431 = sbr.rel (%p5429) target = $region68
      $region67: #{tpu_custom_call.1} parent=5 // pred_region
        %s5432 = ssub.s32 %s19, 2
        // Predicated region
        $region69: #{tpu_custom_call.1} parent=67 // pred_check
          %p5433 = pneg %p158
        $region70: #{tpu_custom_call.1} parent=67 // pred_check_branch
          %5435 = sbr.rel (%p5433) target = $region72
        $region71: #{tpu_custom_call.1} parent=67 // pred_region
          %s5436 = sand.u32 %s143, 1
          %s5437 = scalar_lea.sflag [#allocation6], %s5436
          %s5438 = sand.u32 %s143, 1
          %s5439 = smul.addr %s5438, 64
          %s5440 = scalar_lea.vmem [#allocation13], %s5439
          %5441 = dma.done %s5437, 1024
        $region72: #{tpu_custom_call.1} parent=67 // pred_fallthru
          _
      $region68: #{tpu_custom_call.1} parent=5 // pred_fallthru
        _
    $region6: #{tpu_custom_call.1} parent=1 // loop_footer
      %s23 = sadd.s32 1, %s19
    $region7: #{tpu_custom_call.1} parent=1 // loop_footer_branch
      %18 = sbr.rel target = $region3
    $region8: #{tpu_custom_call.1} parent=1 // loop_exit
      _
    %5442 = vsyncpa [#allocation5], 1
    %s5443 = scalar_lea.sflag [#allocation5], 1
    %5444 = vsyncpa %s5443, 1
    %5445 = vsyncpa [#allocation8], 1
    %5446 = vsyncpa [#allocation11], 1
    %5447 = vsyncpa [#allocation6], 1
    %s5448 = scalar_lea.sflag [#allocation6], 1
    %5449 = vsyncpa %s5448, 1

</llo_original>
